<compile_context>
chip_gen: v5e
topology: v5e:2x2
jax: 0.10.0
libtpu: 0.0.40
codegen_flags: <defaults>
</compile_context>

<pallas_src>
import math

import jax
import jax.numpy as jnp
from jax.experimental import pallas as pl
from jax.experimental.pallas import tpu as pltpu


def _round_up(x, m):
    return ((x + m - 1) // m) * m


# ----------------------------------------------------------------------------
# Fused kernel: [Linear -> LayerNorm -> ReLU] x num_layers -> Linear
# ----------------------------------------------------------------------------
def _make_fused_kernel(num_layers, hid_real, eps=1e-5):
    """Layer count / widths are trace-time constants; the layer loop is
    unrolled so every (1,H) bias/gamma/beta broadcast appears exactly once in
    the trace (JAX does not CSE broadcast_in_dim -- keep this unrolled)."""
    inv_h = 1.0 / float(hid_real)      # LayerNorm divisor uses the REAL width

    def kernel(x_ref, *refs):
        o_ref = refs[-1]
        params = refs[:-1]             # w0,b0,g0,be0, w1,..., w_final, b_final

        h = x_ref[...]
        for layer in range(num_layers):
            w_ref, b_ref, g_ref, be_ref = params[4 * layer:4 * layer + 4]
            w = w_ref[...]
            # Linear: bf16 (or f32) operands, f32 MXU accumulation.
            z = jnp.dot(h.astype(w.dtype), w, preferred_element_type=jnp.float32)
            z = z + b_ref[...]                    # (1, H) broadcast over rows
            # LayerNorm moments via sum / sum-of-squares.  Padded W columns and
            # bias lanes are zero => z's padded lanes are exactly 0 and drop
            # out of both sums, so no lane mask is needed; the two reductions
            # are independent (co-issue on the XLUs).
            s1 = jnp.sum(z, axis=-1, keepdims=True)
            s2 = jnp.sum(z * z, axis=-1, keepdims=True)
            mean = s1 * inv_h
            var = jnp.maximum(s2 * inv_h - mean * mean, 0.0)
            inv_std = jax.lax.rsqrt(var + eps)
            # relu_first=False -> ReLU after norm.  Padded lanes return to
            # exactly 0 because gamma/beta are zero-padded.
            h = jnp.maximum((z - mean) * inv_std * g_ref[...] + be_ref[...], 0.0)

        wf_ref, bf_ref = params[-2], params[-1]
        wf = wf_ref[...]
        out = jnp.dot(h.astype(wf.dtype), wf,
                      preferred_element_type=jnp.float32) + bf_ref[...]
        o_ref[...] = out.astype(o_ref.dtype)

    return kernel


# ----------------------------------------------------------------------------
# Wrapper: feature padding (hidden/out only), BlockSpecs, single pallas_call
# ----------------------------------------------------------------------------
def gnn_model_forward(x, layer_params, final_w, final_b, *,
                      block_rows=512, weight_dtype=jnp.bfloat16):
    """Fused forward pass of Model (residual=None, layer_norm, relu_first=False).

    weight_dtype: matmul-operand dtype for the weight matrices (default bf16:
    full-rate MXU on all generations, half the resident VMEM footprint).
    LayerNorm math, biases/gamma/beta, and matmul accumulation stay f32.
    """
    n_rows, in_c = x.shape
    hid = layer_params[0][0].shape[1]
    out_c = final_w.shape[1]
    num_layers = len(layer_params)
    out_dtype = x.dtype

    # Lane-dense padded widths for hidden / output features only.  x and W0's
    # fan-in stay at the real in_c (last dim == full array dim satisfies the
    # (8,128) rule) -> no extra HBM pass or inflated x traffic.
    hid_p = _round_up(hid, 128)
    out_p = _round_up(out_c, 128)

    # Row tiling: multiples of 8 (sublane), large blocks to amortize per-step
    # overhead; keep >= 2 grid blocks when possible so both v7x TensorCores
    # get work under dimension_semantics=("parallel",).
    block_rows = max(8, _round_up(block_rows, 8))
    if n_rows > 8:
        block_rows = min(block_rows, _round_up(pl.cdiv(n_rows, 2), 8))
    grid = (pl.cdiv(n_rows, block_rows),)

    def pad2(a, r, c, dt):
        return jnp.pad(a.astype(dt), ((0, r - a.shape[0]), (0, c - a.shape[1])))

    flat_params = []
    fan_in = in_c                       # first layer keeps the real fan-in
    for (w, b, gamma, beta) in layer_params:
        flat_params += [
            pad2(w, fan_in, hid_p, weight_dtype),
            pad2(b.reshape(1, -1), 1, hid_p, jnp.float32),
            pad2(gamma.reshape(1, -1), 1, hid_p, jnp.float32),
            pad2(beta.reshape(1, -1), 1, hid_p, jnp.float32),
        ]
        fan_in = hid_p
    flat_params += [
        pad2(final_w, hid_p, out_p, weight_dtype),
        pad2(final_b.reshape(1, -1), 1, out_p, jnp.float32),
    ]

    # ---- VMEM budget (generation-aware) --------------------------------
    try:
        vmem_cap = int(pltpu.get_tpu_info().vmem_capacity_bytes)
    except Exception:
        vmem_cap = 64 * 1024 * 1024          # conservative: v7x per-TC
    vmem_ceiling = int(vmem_cap * 0.85)

    param_bytes = sum(int(p.size) * p.dtype.itemsize for p in flat_params)
    io_bytes = 2 * block_rows * (in_c * x.dtype.itemsize
                                 + out_p * jnp.dtype(out_dtype).itemsize)
    act_bytes = 4 * block_rows * hid_p * 4   # unrolled f32 temporaries
    need_single = param_bytes + io_bytes + act_bytes        # 1-buffered params
    need_double = 2 * param_bytes + io_bytes + act_bytes    # 2-buffered params

    if need_single > vmem_ceiling:
        # TODO(synk): streaming-weights fallback (emit_pipeline over layers).
        raise NotImplementedError(
            "Resident-parameter footprint exceeds VMEM on this generation; "
            "per-layer weight streaming is not implemented.")

    vmem_limit = min(max(int(need_double * 1.3), 32 * 1024 * 1024), vmem_ceiling)

    kernel = _make_fused_kernel(num_layers, hid)

    def build(single_buffer_params):
        if single_buffer_params:
            # Constant index_map => the block never changes; a single VMEM
            # buffer per parameter halves the resident-param footprint.
            param_specs = [
                pl.BlockSpec(p.shape, lambda i, nd=p.ndim: (0,) * nd,
                             pipeline_mode=pl.Buffered(1))
                for p in flat_params
            ]
        else:
            param_specs = [
                pl.BlockSpec(p.shape, lambda i, nd=p.ndim: (0,) * nd)
                for p in flat_params
            ]
        return pl.pallas_call(
            kernel,
            out_shape=jax.ShapeDtypeStruct((n_rows, out_p), out_dtype),
            grid_spec=pltpu.PrefetchScalarGridSpec(
                num_scalar_prefetch=0,
                grid=grid,
                in_specs=[pl.BlockSpec((block_rows, in_c), lambda i: (i, 0))]
                + param_specs,
                out_specs=pl.BlockSpec((block_rows, out_p), lambda i: (i, 0)),
            ),
            compiler_params=pltpu.CompilerParams(
                dimension_semantics=("parallel",),
                vmem_limit_bytes=vmem_limit,
            ),
        )

    try:
        out_padded = build(single_buffer_params=True)(x, *flat_params)
    except Exception:
        # pl.Buffered(1) unsupported on this jax version -> default buffering.
        out_padded = build(single_buffer_params=False)(x, *flat_params)

    return out_padded[:, :out_c] if out_p != out_c else out_padded


# ----------------------------------------------------------------------------
# Deterministic parameter init (like nn.Linear.reset_parameters / LayerNorm)
# ----------------------------------------------------------------------------
def init_linear(key, fan_in, fan_out, dtype=jnp.float32):
    kw, kb = jax.random.split(key)
    bound = 1.0 / math.sqrt(fan_in)
    w = jax.random.uniform(kw, (fan_in, fan_out), dtype, -bound, bound)
    b = jax.random.uniform(kb, (fan_out,), dtype, -bound, bound)
    return w, b


def build_params(key, in_channels, hidden_channels, out_channels, num_layers):
    layer_params = []
    fan_in = in_channels
    for _ in range(num_layers):
        key, sub = jax.random.split(key)
        w, b = init_linear(sub, fan_in, hidden_channels)
        gamma = jnp.ones((hidden_channels,), jnp.float32)    # LayerNorm weight
        beta = jnp.zeros((hidden_channels,), jnp.float32)    # LayerNorm bias
        layer_params.append((w, b, gamma, beta))
        fan_in = hidden_channels
    key, sub = jax.random.split(key)
    final_w, final_b = init_linear(sub, hidden_channels, out_channels)
    return layer_params, final_w, final_b


# ----------------------------------------------------------------------------
# Pure-JAX reference for correctness check
# ----------------------------------------------------------------------------
def reference_forward(x, layer_params, final_w, final_b):
    for (w, b, gamma, beta) in layer_params:
        h = x @ w + b
        mean = jnp.mean(h, axis=-1, keepdims=True)
        var = jnp.mean((h - mean) ** 2, axis=-1, keepdims=True)
        h = (h - mean) * jax.lax.rsqrt(var + 1e-5) * gamma + beta
        x = jnp.maximum(h, 0.0)
    return x @ final_w + final_b


if __name__ == "__main__":
    # Deliberately "ragged" shapes: N not a multiple of the row block,
    # feature widths not multiples of 128 (exercises padding-free input,
    # masked last row block, and padded-lane LayerNorm).
    N, IN_C, HID_C, OUT_C, NUM_LAYERS = 300, 48, 96, 10, 3

    key = jax.random.PRNGKey(0)
    kx, kp = jax.random.split(key)
    x = jax.random.normal(kx, (N, IN_C), jnp.float32)
    layer_params, final_w, final_b = build_params(
        kp, IN_C, HID_C, OUT_C, NUM_LAYERS
    )

    ref = reference_forward(x, layer_params, final_w, final_b)

    # Precision check: f32 matmul operands.
    out_f32 = gnn_model_forward(x, layer_params, final_w, final_b,
                                block_rows=512, weight_dtype=jnp.float32)
    out_f32 = jax.block_until_ready(out_f32)
    assert out_f32.shape == (N, OUT_C), out_f32.shape
    err_f32 = float(jnp.max(jnp.abs(out_f32 - ref)))
    assert err_f32 < 5e-3, err_f32

    # Default path: bf16 matmul operands (full-rate MXU), f32 LN / accumulation.
    out_bf16 = gnn_model_forward(x, layer_params, final_w, final_b)
    out_bf16 = jax.block_until_ready(out_bf16)
    assert out_bf16.shape == (N, OUT_C), out_bf16.shape
    err_bf16 = float(jnp.max(jnp.abs(out_bf16 - ref)))
    assert err_bf16 < 0.15, err_bf16

    print("KERNEL_OK")
</pallas_src>

<mosaic_0001>
module attributes {stable_mosaic.version = 11 : i64} {
  func.func @kernel(%arg0: i32, %arg1: memref<152x48xf32, #tpu.memory_space<vmem>>, %arg2: memref<48x128xf32, #tpu.memory_space<vmem>>, %arg3: memref<1x128xf32, #tpu.memory_space<vmem>>, %arg4: memref<1x128xf32, #tpu.memory_space<vmem>>, %arg5: memref<1x128xf32, #tpu.memory_space<vmem>>, %arg6: memref<128x128xf32, #tpu.memory_space<vmem>>, %arg7: memref<1x128xf32, #tpu.memory_space<vmem>>, %arg8: memref<1x128xf32, #tpu.memory_space<vmem>>, %arg9: memref<1x128xf32, #tpu.memory_space<vmem>>, %arg10: memref<128x128xf32, #tpu.memory_space<vmem>>, %arg11: memref<1x128xf32, #tpu.memory_space<vmem>>, %arg12: memref<1x128xf32, #tpu.memory_space<vmem>>, %arg13: memref<1x128xf32, #tpu.memory_space<vmem>>, %arg14: memref<128x128xf32, #tpu.memory_space<vmem>>, %arg15: memref<1x128xf32, #tpu.memory_space<vmem>>, %arg16: memref<152x128xf32, #tpu.memory_space<vmem>>) attributes {dimension_semantics = [#tpu.dimension_semantics<parallel>], iteration_bounds = array<i64: 2>, scalar_prefetch = 0 : i64, scratch_operands = 0 : i64, tpu.core_type = #tpu.core_type<tc>, window_params = [{transform_indices = @transform_0, window_bounds = array<i64: 152, 48>}, {pipeline_mode = #tpu.pipeline_mode<synchronous>, transform_indices = @transform_1, window_bounds = array<i64: 48, 128>}, {pipeline_mode = #tpu.pipeline_mode<synchronous>, transform_indices = @transform_2, window_bounds = array<i64: 1, 128>}, {pipeline_mode = #tpu.pipeline_mode<synchronous>, transform_indices = @transform_3, window_bounds = array<i64: 1, 128>}, {pipeline_mode = #tpu.pipeline_mode<synchronous>, transform_indices = @transform_4, window_bounds = array<i64: 1, 128>}, {pipeline_mode = #tpu.pipeline_mode<synchronous>, transform_indices = @transform_5, window_bounds = array<i64: 128, 128>}, {pipeline_mode = #tpu.pipeline_mode<synchronous>, transform_indices = @transform_6, window_bounds = array<i64: 1, 128>}, {pipeline_mode = #tpu.pipeline_mode<synchronous>, transform_indices = @transform_7, window_bounds = array<i64: 1, 128>}, {pipeline_mode = #tpu.pipeline_mode<synchronous>, transform_indices = @transform_8, window_bounds = array<i64: 1, 128>}, {pipeline_mode = #tpu.pipeline_mode<synchronous>, transform_indices = @transform_9, window_bounds = array<i64: 128, 128>}, {pipeline_mode = #tpu.pipeline_mode<synchronous>, transform_indices = @transform_10, window_bounds = array<i64: 1, 128>}, {pipeline_mode = #tpu.pipeline_mode<synchronous>, transform_indices = @transform_11, window_bounds = array<i64: 1, 128>}, {pipeline_mode = #tpu.pipeline_mode<synchronous>, transform_indices = @transform_12, window_bounds = array<i64: 1, 128>}, {pipeline_mode = #tpu.pipeline_mode<synchronous>, transform_indices = @transform_13, window_bounds = array<i64: 128, 128>}, {pipeline_mode = #tpu.pipeline_mode<synchronous>, transform_indices = @transform_14, window_bounds = array<i64: 1, 128>}, {transform_indices = @transform_15, window_bounds = array<i64: 152, 128>}]} {
    %c0 = arith.constant 0 : index
    %c0_0 = arith.constant 0 : index
    %0 = vector.load %arg1[%c0, %c0_0] : memref<152x48xf32, #tpu.memory_space<vmem>>, vector<152x48xf32>
    %c0_1 = arith.constant 0 : index
    %c0_2 = arith.constant 0 : index
    %1 = vector.load %arg2[%c0_1, %c0_2] : memref<48x128xf32, #tpu.memory_space<vmem>>, vector<48x128xf32>
    %cst = arith.constant dense<0.000000e+00> : vector<152x128xf32>
    %2 = tpu.matmul %0, %1, %cst {dimension_numbers = #tpu.dot_dimension_numbers<[1], [0], [0], [1], [0, 0, 1, 1], [], []>} : vector<152x48xf32>, vector<48x128xf32>, vector<152x128xf32> -> vector<152x128xf32>
    %c0_3 = arith.constant 0 : index
    %c0_4 = arith.constant 0 : index
    %3 = vector.load %arg3[%c0_3, %c0_4] : memref<1x128xf32, #tpu.memory_space<vmem>>, vector<1x128xf32>
    %4 = vector.broadcast %3 : vector<1x128xf32> to vector<152x128xf32>
    %5 = arith.addf %2, %4 : vector<152x128xf32>
    %cst_5 = arith.constant dense<0.000000e+00> : vector<152xf32>
    %6 = vector.multi_reduction <add>, %5, %cst_5 [1] : vector<152x128xf32> to vector<152xf32>
    %7 = vector.shape_cast %6 : vector<152xf32> to vector<152x1xf32>
    %8 = arith.mulf %5, %5 : vector<152x128xf32>
    %cst_6 = arith.constant dense<0.000000e+00> : vector<152xf32>
    %9 = vector.multi_reduction <add>, %8, %cst_6 [1] : vector<152x128xf32> to vector<152xf32>
    %10 = vector.shape_cast %9 : vector<152xf32> to vector<152x1xf32>
    %cst_7 = arith.constant 0.010416667 : f32
    %11 = vector.broadcast %cst_7 : f32 to vector<152x1xf32>
    %12 = arith.mulf %7, %11 : vector<152x1xf32>
    %cst_8 = arith.constant 0.010416667 : f32
    %13 = vector.broadcast %cst_8 : f32 to vector<152x1xf32>
    %14 = arith.mulf %10, %13 : vector<152x1xf32>
    %15 = arith.mulf %12, %12 : vector<152x1xf32>
    %16 = arith.subf %14, %15 : vector<152x1xf32>
    %cst_9 = arith.constant 0.000000e+00 : f32
    %17 = vector.broadcast %cst_9 : f32 to vector<152x1xf32>
    %18 = arith.maximumf %16, %17 : vector<152x1xf32>
    %cst_10 = arith.constant 9.99999974E-6 : f32
    %19 = vector.broadcast %cst_10 : f32 to vector<152x1xf32>
    %20 = arith.addf %18, %19 : vector<152x1xf32>
    %21 = math.rsqrt %20 : vector<152x1xf32>
    %22 = vector.broadcast %12 : vector<152x1xf32> to vector<152x128xf32>
    %23 = arith.subf %5, %22 : vector<152x128xf32>
    %24 = vector.broadcast %21 : vector<152x1xf32> to vector<152x128xf32>
    %25 = arith.mulf %23, %24 : vector<152x128xf32>
    %c0_11 = arith.constant 0 : index
    %c0_12 = arith.constant 0 : index
    %26 = vector.load %arg4[%c0_11, %c0_12] : memref<1x128xf32, #tpu.memory_space<vmem>>, vector<1x128xf32>
    %27 = vector.broadcast %26 : vector<1x128xf32> to vector<152x128xf32>
    %28 = arith.mulf %25, %27 : vector<152x128xf32>
    %c0_13 = arith.constant 0 : index
    %c0_14 = arith.constant 0 : index
    %29 = vector.load %arg5[%c0_13, %c0_14] : memref<1x128xf32, #tpu.memory_space<vmem>>, vector<1x128xf32>
    %30 = vector.broadcast %29 : vector<1x128xf32> to vector<152x128xf32>
    %31 = arith.addf %28, %30 : vector<152x128xf32>
    %cst_15 = arith.constant 0.000000e+00 : f32
    %32 = vector.broadcast %cst_15 : f32 to vector<152x128xf32>
    %33 = arith.maximumf %31, %32 : vector<152x128xf32>
    %c0_16 = arith.constant 0 : index
    %c0_17 = arith.constant 0 : index
    %34 = vector.load %arg6[%c0_16, %c0_17] : memref<128x128xf32, #tpu.memory_space<vmem>>, vector<128x128xf32>
    %cst_18 = arith.constant dense<0.000000e+00> : vector<152x128xf32>
    %35 = tpu.matmul %33, %34, %cst_18 {dimension_numbers = #tpu.dot_dimension_numbers<[1], [0], [0], [1], [0, 0, 1, 1], [], []>} : vector<152x128xf32>, vector<128x128xf32>, vector<152x128xf32> -> vector<152x128xf32>
    %c0_19 = arith.constant 0 : index
    %c0_20 = arith.constant 0 : index
    %36 = vector.load %arg7[%c0_19, %c0_20] : memref<1x128xf32, #tpu.memory_space<vmem>>, vector<1x128xf32>
    %37 = vector.broadcast %36 : vector<1x128xf32> to vector<152x128xf32>
    %38 = arith.addf %35, %37 : vector<152x128xf32>
    %cst_21 = arith.constant dense<0.000000e+00> : vector<152xf32>
    %39 = vector.multi_reduction <add>, %38, %cst_21 [1] : vector<152x128xf32> to vector<152xf32>
    %40 = vector.shape_cast %39 : vector<152xf32> to vector<152x1xf32>
    %41 = arith.mulf %38, %38 : vector<152x128xf32>
    %cst_22 = arith.constant dense<0.000000e+00> : vector<152xf32>
    %42 = vector.multi_reduction <add>, %41, %cst_22 [1] : vector<152x128xf32> to vector<152xf32>
    %43 = vector.shape_cast %42 : vector<152xf32> to vector<152x1xf32>
    %cst_23 = arith.constant 0.010416667 : f32
    %44 = vector.broadcast %cst_23 : f32 to vector<152x1xf32>
    %45 = arith.mulf %40, %44 : vector<152x1xf32>
    %cst_24 = arith.constant 0.010416667 : f32
    %46 = vector.broadcast %cst_24 : f32 to vector<152x1xf32>
    %47 = arith.mulf %43, %46 : vector<152x1xf32>
    %48 = arith.mulf %45, %45 : vector<152x1xf32>
    %49 = arith.subf %47, %48 : vector<152x1xf32>
    %cst_25 = arith.constant 0.000000e+00 : f32
    %50 = vector.broadcast %cst_25 : f32 to vector<152x1xf32>
    %51 = arith.maximumf %49, %50 : vector<152x1xf32>
    %cst_26 = arith.constant 9.99999974E-6 : f32
    %52 = vector.broadcast %cst_26 : f32 to vector<152x1xf32>
    %53 = arith.addf %51, %52 : vector<152x1xf32>
    %54 = math.rsqrt %53 : vector<152x1xf32>
    %55 = vector.broadcast %45 : vector<152x1xf32> to vector<152x128xf32>
    %56 = arith.subf %38, %55 : vector<152x128xf32>
    %57 = vector.broadcast %54 : vector<152x1xf32> to vector<152x128xf32>
    %58 = arith.mulf %56, %57 : vector<152x128xf32>
    %c0_27 = arith.constant 0 : index
    %c0_28 = arith.constant 0 : index
    %59 = vector.load %arg8[%c0_27, %c0_28] : memref<1x128xf32, #tpu.memory_space<vmem>>, vector<1x128xf32>
    %60 = vector.broadcast %59 : vector<1x128xf32> to vector<152x128xf32>
    %61 = arith.mulf %58, %60 : vector<152x128xf32>
    %c0_29 = arith.constant 0 : index
    %c0_30 = arith.constant 0 : index
    %62 = vector.load %arg9[%c0_29, %c0_30] : memref<1x128xf32, #tpu.memory_space<vmem>>, vector<1x128xf32>
    %63 = vector.broadcast %62 : vector<1x128xf32> to vector<152x128xf32>
    %64 = arith.addf %61, %63 : vector<152x128xf32>
    %cst_31 = arith.constant 0.000000e+00 : f32
    %65 = vector.broadcast %cst_31 : f32 to vector<152x128xf32>
    %66 = arith.maximumf %64, %65 : vector<152x128xf32>
    %c0_32 = arith.constant 0 : index
    %c0_33 = arith.constant 0 : index
    %67 = vector.load %arg10[%c0_32, %c0_33] : memref<128x128xf32, #tpu.memory_space<vmem>>, vector<128x128xf32>
    %cst_34 = arith.constant dense<0.000000e+00> : vector<152x128xf32>
    %68 = tpu.matmul %66, %67, %cst_34 {dimension_numbers = #tpu.dot_dimension_numbers<[1], [0], [0], [1], [0, 0, 1, 1], [], []>} : vector<152x128xf32>, vector<128x128xf32>, vector<152x128xf32> -> vector<152x128xf32>
    %c0_35 = arith.constant 0 : index
    %c0_36 = arith.constant 0 : index
    %69 = vector.load %arg11[%c0_35, %c0_36] : memref<1x128xf32, #tpu.memory_space<vmem>>, vector<1x128xf32>
    %70 = vector.broadcast %69 : vector<1x128xf32> to vector<152x128xf32>
    %71 = arith.addf %68, %70 : vector<152x128xf32>
    %cst_37 = arith.constant dense<0.000000e+00> : vector<152xf32>
    %72 = vector.multi_reduction <add>, %71, %cst_37 [1] : vector<152x128xf32> to vector<152xf32>
    %73 = vector.shape_cast %72 : vector<152xf32> to vector<152x1xf32>
    %74 = arith.mulf %71, %71 : vector<152x128xf32>
    %cst_38 = arith.constant dense<0.000000e+00> : vector<152xf32>
    %75 = vector.multi_reduction <add>, %74, %cst_38 [1] : vector<152x128xf32> to vector<152xf32>
    %76 = vector.shape_cast %75 : vector<152xf32> to vector<152x1xf32>
    %cst_39 = arith.constant 0.010416667 : f32
    %77 = vector.broadcast %cst_39 : f32 to vector<152x1xf32>
    %78 = arith.mulf %73, %77 : vector<152x1xf32>
    %cst_40 = arith.constant 0.010416667 : f32
    %79 = vector.broadcast %cst_40 : f32 to vector<152x1xf32>
    %80 = arith.mulf %76, %79 : vector<152x1xf32>
    %81 = arith.mulf %78, %78 : vector<152x1xf32>
    %82 = arith.subf %80, %81 : vector<152x1xf32>
    %cst_41 = arith.constant 0.000000e+00 : f32
    %83 = vector.broadcast %cst_41 : f32 to vector<152x1xf32>
    %84 = arith.maximumf %82, %83 : vector<152x1xf32>
    %cst_42 = arith.constant 9.99999974E-6 : f32
    %85 = vector.broadcast %cst_42 : f32 to vector<152x1xf32>
    %86 = arith.addf %84, %85 : vector<152x1xf32>
    %87 = math.rsqrt %86 : vector<152x1xf32>
    %88 = vector.broadcast %78 : vector<152x1xf32> to vector<152x128xf32>
    %89 = arith.subf %71, %88 : vector<152x128xf32>
    %90 = vector.broadcast %87 : vector<152x1xf32> to vector<152x128xf32>
    %91 = arith.mulf %89, %90 : vector<152x128xf32>
    %c0_43 = arith.constant 0 : index
    %c0_44 = arith.constant 0 : index
    %92 = vector.load %arg12[%c0_43, %c0_44] : memref<1x128xf32, #tpu.memory_space<vmem>>, vector<1x128xf32>
    %93 = vector.broadcast %92 : vector<1x128xf32> to vector<152x128xf32>
    %94 = arith.mulf %91, %93 : vector<152x128xf32>
    %c0_45 = arith.constant 0 : index
    %c0_46 = arith.constant 0 : index
    %95 = vector.load %arg13[%c0_45, %c0_46] : memref<1x128xf32, #tpu.memory_space<vmem>>, vector<1x128xf32>
    %96 = vector.broadcast %95 : vector<1x128xf32> to vector<152x128xf32>
    %97 = arith.addf %94, %96 : vector<152x128xf32>
    %cst_47 = arith.constant 0.000000e+00 : f32
    %98 = vector.broadcast %cst_47 : f32 to vector<152x128xf32>
    %99 = arith.maximumf %97, %98 : vector<152x128xf32>
    %c0_48 = arith.constant 0 : index
    %c0_49 = arith.constant 0 : index
    %100 = vector.load %arg14[%c0_48, %c0_49] : memref<128x128xf32, #tpu.memory_space<vmem>>, vector<128x128xf32>
    %cst_50 = arith.constant dense<0.000000e+00> : vector<152x128xf32>
    %101 = tpu.matmul %99, %100, %cst_50 {dimension_numbers = #tpu.dot_dimension_numbers<[1], [0], [0], [1], [0, 0, 1, 1], [], []>} : vector<152x128xf32>, vector<128x128xf32>, vector<152x128xf32> -> vector<152x128xf32>
    %c0_51 = arith.constant 0 : index
    %c0_52 = arith.constant 0 : index
    %102 = vector.load %arg15[%c0_51, %c0_52] : memref<1x128xf32, #tpu.memory_space<vmem>>, vector<1x128xf32>
    %103 = vector.broadcast %102 : vector<1x128xf32> to vector<152x128xf32>
    %104 = arith.addf %101, %103 : vector<152x128xf32>
    %c0_53 = arith.constant 0 : index
    %c0_54 = arith.constant 0 : index
    %105 = vector.load %arg16[%c0_53, %c0_54] : memref<152x128xf32, #tpu.memory_space<vmem>>, vector<152x128xf32>
    tpu.vector_store %arg16[%c0_53, %c0_54], %104 {strides = array<i32>} : memref<152x128xf32, #tpu.memory_space<vmem>>, vector<152x128xf32>,
    return
  }
  func.func @transform_0(%arg0: i32) -> (i32, i32) {
    %c0_i32 = arith.constant 0 : i32
    %c0_i32_0 = arith.constant 0 : i32
    return %arg0, %c0_i32 : i32, i32
  }
  func.func @transform_1(%arg0: i32) -> (i32, i32) {
    %c0_i32 = arith.constant 0 : i32
    %c0_i32_0 = arith.constant 0 : i32
    %c0_i32_1 = arith.constant 0 : i32
    return %c0_i32, %c0_i32_0 : i32, i32
  }
  func.func @transform_2(%arg0: i32) -> (i32, i32) {
    %c0_i32 = arith.constant 0 : i32
    %c0_i32_0 = arith.constant 0 : i32
    %c0_i32_1 = arith.constant 0 : i32
    return %c0_i32, %c0_i32_0 : i32, i32
  }
  func.func @transform_3(%arg0: i32) -> (i32, i32) {
    %c0_i32 = arith.constant 0 : i32
    %c0_i32_0 = arith.constant 0 : i32
    %c0_i32_1 = arith.constant 0 : i32
    return %c0_i32, %c0_i32_0 : i32, i32
  }
  func.func @transform_4(%arg0: i32) -> (i32, i32) {
    %c0_i32 = arith.constant 0 : i32
    %c0_i32_0 = arith.constant 0 : i32
    %c0_i32_1 = arith.constant 0 : i32
    return %c0_i32, %c0_i32_0 : i32, i32
  }
  func.func @transform_5(%arg0: i32) -> (i32, i32) {
    %c0_i32 = arith.constant 0 : i32
    %c0_i32_0 = arith.constant 0 : i32
    %c0_i32_1 = arith.constant 0 : i32
    return %c0_i32, %c0_i32_0 : i32, i32
  }
  func.func @transform_6(%arg0: i32) -> (i32, i32) {
    %c0_i32 = arith.constant 0 : i32
    %c0_i32_0 = arith.constant 0 : i32
    %c0_i32_1 = arith.constant 0 : i32
    return %c0_i32, %c0_i32_0 : i32, i32
  }
  func.func @transform_7(%arg0: i32) -> (i32, i32) {
    %c0_i32 = arith.constant 0 : i32
    %c0_i32_0 = arith.constant 0 : i32
    %c0_i32_1 = arith.constant 0 : i32
    return %c0_i32, %c0_i32_0 : i32, i32
  }
  func.func @transform_8(%arg0: i32) -> (i32, i32) {
    %c0_i32 = arith.constant 0 : i32
    %c0_i32_0 = arith.constant 0 : i32
    %c0_i32_1 = arith.constant 0 : i32
    return %c0_i32, %c0_i32_0 : i32, i32
  }
  func.func @transform_9(%arg0: i32) -> (i32, i32) {
    %c0_i32 = arith.constant 0 : i32
    %c0_i32_0 = arith.constant 0 : i32
    %c0_i32_1 = arith.constant 0 : i32
    return %c0_i32, %c0_i32_0 : i32, i32
  }
  func.func @transform_10(%arg0: i32) -> (i32, i32) {
    %c0_i32 = arith.constant 0 : i32
    %c0_i32_0 = arith.constant 0 : i32
    %c0_i32_1 = arith.constant 0 : i32
    return %c0_i32, %c0_i32_0 : i32, i32
  }
  func.func @transform_11(%arg0: i32) -> (i32, i32) {
    %c0_i32 = arith.constant 0 : i32
    %c0_i32_0 = arith.constant 0 : i32
    %c0_i32_1 = arith.constant 0 : i32
    return %c0_i32, %c0_i32_0 : i32, i32
  }
  func.func @transform_12(%arg0: i32) -> (i32, i32) {
    %c0_i32 = arith.constant 0 : i32
    %c0_i32_0 = arith.constant 0 : i32
    %c0_i32_1 = arith.constant 0 : i32
    return %c0_i32, %c0_i32_0 : i32, i32
  }
  func.func @transform_13(%arg0: i32) -> (i32, i32) {
    %c0_i32 = arith.constant 0 : i32
    %c0_i32_0 = arith.constant 0 : i32
    %c0_i32_1 = arith.constant 0 : i32
    return %c0_i32, %c0_i32_0 : i32, i32
  }
  func.func @transform_14(%arg0: i32) -> (i32, i32) {
    %c0_i32 = arith.constant 0 : i32
    %c0_i32_0 = arith.constant 0 : i32
    %c0_i32_1 = arith.constant 0 : i32
    return %c0_i32, %c0_i32_0 : i32, i32
  }
  func.func @transform_15(%arg0: i32) -> (i32, i32) {
    %c0_i32 = arith.constant 0 : i32
    %c0_i32_0 = arith.constant 0 : i32
    return %arg0, %c0_i32 : i32, i32
  }
}

module attributes {stable_mosaic.version = 11 : i64} {
  func.func @kernel(%arg0: i32, %arg1: memref<152x48xf32, #tpu.memory_space<vmem>>, %arg2: memref<48x128xf32, #tpu.memory_space<vmem>>, %arg3: memref<1x128xf32, #tpu.memory_space<vmem>>, %arg4: memref<1x128xf32, #tpu.memory_space<vmem>>, %arg5: memref<1x128xf32, #tpu.memory_space<vmem>>, %arg6: memref<128x128xf32, #tpu.memory_space<vmem>>, %arg7: memref<1x128xf32, #tpu.memory_space<vmem>>, %arg8: memref<1x128xf32, #tpu.memory_space<vmem>>, %arg9: memref<1x128xf32, #tpu.memory_space<vmem>>, %arg10: memref<128x128xf32, #tpu.memory_space<vmem>>, %arg11: memref<1x128xf32, #tpu.memory_space<vmem>>, %arg12: memref<1x128xf32, #tpu.memory_space<vmem>>, %arg13: memref<1x128xf32, #tpu.memory_space<vmem>>, %arg14: memref<128x128xf32, #tpu.memory_space<vmem>>, %arg15: memref<1x128xf32, #tpu.memory_space<vmem>>, %arg16: memref<152x128xf32, #tpu.memory_space<vmem>>) attributes {dimension_semantics = [#tpu.dimension_semantics<parallel>], iteration_bounds = array<i64: 2>, scalar_prefetch = 0 : i64, scratch_operands = 0 : i64, tpu.core_type = #tpu.core_type<tc>, window_params = [{transform_indices = @transform_0, window_bounds = array<i64: 152, 48>}, {pipeline_mode = #tpu.pipeline_mode<synchronous>, transform_indices = @transform_1, window_bounds = array<i64: 48, 128>}, {pipeline_mode = #tpu.pipeline_mode<synchronous>, transform_indices = @transform_2, window_bounds = array<i64: 1, 128>}, {pipeline_mode = #tpu.pipeline_mode<synchronous>, transform_indices = @transform_3, window_bounds = array<i64: 1, 128>}, {pipeline_mode = #tpu.pipeline_mode<synchronous>, transform_indices = @transform_4, window_bounds = array<i64: 1, 128>}, {pipeline_mode = #tpu.pipeline_mode<synchronous>, transform_indices = @transform_5, window_bounds = array<i64: 128, 128>}, {pipeline_mode = #tpu.pipeline_mode<synchronous>, transform_indices = @transform_6, window_bounds = array<i64: 1, 128>}, {pipeline_mode = #tpu.pipeline_mode<synchronous>, transform_indices = @transform_7, window_bounds = array<i64: 1, 128>}, {pipeline_mode = #tpu.pipeline_mode<synchronous>, transform_indices = @transform_8, window_bounds = array<i64: 1, 128>}, {pipeline_mode = #tpu.pipeline_mode<synchronous>, transform_indices = @transform_9, window_bounds = array<i64: 128, 128>}, {pipeline_mode = #tpu.pipeline_mode<synchronous>, transform_indices = @transform_10, window_bounds = array<i64: 1, 128>}, {pipeline_mode = #tpu.pipeline_mode<synchronous>, transform_indices = @transform_11, window_bounds = array<i64: 1, 128>}, {pipeline_mode = #tpu.pipeline_mode<synchronous>, transform_indices = @transform_12, window_bounds = array<i64: 1, 128>}, {pipeline_mode = #tpu.pipeline_mode<synchronous>, transform_indices = @transform_13, window_bounds = array<i64: 128, 128>}, {pipeline_mode = #tpu.pipeline_mode<synchronous>, transform_indices = @transform_14, window_bounds = array<i64: 1, 128>}, {transform_indices = @transform_15, window_bounds = array<i64: 152, 128>}]} {
    %c0 = arith.constant 0 : index
    %c0_0 = arith.constant 0 : index
    %0 = vector.load %arg1[%c0, %c0_0] : memref<152x48xf32, #tpu.memory_space<vmem>>, vector<152x48xf32>
    %c0_1 = arith.constant 0 : index
    %c0_2 = arith.constant 0 : index
    %1 = vector.load %arg2[%c0_1, %c0_2] : memref<48x128xf32, #tpu.memory_space<vmem>>, vector<48x128xf32>
    %cst = arith.constant dense<0.000000e+00> : vector<152x128xf32>
    %2 = tpu.matmul %0, %1, %cst {dimension_numbers = #tpu.dot_dimension_numbers<[1], [0], [0], [1], [0, 0, 1, 1], [], []>} : vector<152x48xf32>, vector<48x128xf32>, vector<152x128xf32> -> vector<152x128xf32>
    %c0_3 = arith.constant 0 : index
    %c0_4 = arith.constant 0 : index
    %3 = vector.load %arg3[%c0_3, %c0_4] : memref<1x128xf32, #tpu.memory_space<vmem>>, vector<1x128xf32>
    %4 = vector.broadcast %3 : vector<1x128xf32> to vector<152x128xf32>
    %5 = arith.addf %2, %4 : vector<152x128xf32>
    %cst_5 = arith.constant dense<0.000000e+00> : vector<152xf32>
    %6 = vector.multi_reduction <add>, %5, %cst_5 [1] : vector<152x128xf32> to vector<152xf32>
    %7 = vector.shape_cast %6 : vector<152xf32> to vector<152x1xf32>
    %8 = arith.mulf %5, %5 : vector<152x128xf32>
    %cst_6 = arith.constant dense<0.000000e+00> : vector<152xf32>
    %9 = vector.multi_reduction <add>, %8, %cst_6 [1] : vector<152x128xf32> to vector<152xf32>
    %10 = vector.shape_cast %9 : vector<152xf32> to vector<152x1xf32>
    %cst_7 = arith.constant 0.010416667 : f32
    %11 = vector.broadcast %cst_7 : f32 to vector<152x1xf32>
    %12 = arith.mulf %7, %11 : vector<152x1xf32>
    %cst_8 = arith.constant 0.010416667 : f32
    %13 = vector.broadcast %cst_8 : f32 to vector<152x1xf32>
    %14 = arith.mulf %10, %13 : vector<152x1xf32>
    %15 = arith.mulf %12, %12 : vector<152x1xf32>
    %16 = arith.subf %14, %15 : vector<152x1xf32>
    %cst_9 = arith.constant 0.000000e+00 : f32
    %17 = vector.broadcast %cst_9 : f32 to vector<152x1xf32>
    %18 = arith.maximumf %16, %17 : vector<152x1xf32>
    %cst_10 = arith.constant 9.99999974E-6 : f32
    %19 = vector.broadcast %cst_10 : f32 to vector<152x1xf32>
    %20 = arith.addf %18, %19 : vector<152x1xf32>
    %21 = math.rsqrt %20 : vector<152x1xf32>
    %22 = vector.broadcast %12 : vector<152x1xf32> to vector<152x128xf32>
    %23 = arith.subf %5, %22 : vector<152x128xf32>
    %24 = vector.broadcast %21 : vector<152x1xf32> to vector<152x128xf32>
    %25 = arith.mulf %23, %24 : vector<152x128xf32>
    %c0_11 = arith.constant 0 : index
    %c0_12 = arith.constant 0 : index
    %26 = vector.load %arg4[%c0_11, %c0_12] : memref<1x128xf32, #tpu.memory_space<vmem>>, vector<1x128xf32>
    %27 = vector.broadcast %26 : vector<1x128xf32> to vector<152x128xf32>
    %28 = arith.mulf %25, %27 : vector<152x128xf32>
    %c0_13 = arith.constant 0 : index
    %c0_14 = arith.constant 0 : index
    %29 = vector.load %arg5[%c0_13, %c0_14] : memref<1x128xf32, #tpu.memory_space<vmem>>, vector<1x128xf32>
    %30 = vector.broadcast %29 : vector<1x128xf32> to vector<152x128xf32>
    %31 = arith.addf %28, %30 : vector<152x128xf32>
    %cst_15 = arith.constant 0.000000e+00 : f32
    %32 = vector.broadcast %cst_15 : f32 to vector<152x128xf32>
    %33 = arith.maximumf %31, %32 : vector<152x128xf32>
    %c0_16 = arith.constant 0 : index
    %c0_17 = arith.constant 0 : index
    %34 = vector.load %arg6[%c0_16, %c0_17] : memref<128x128xf32, #tpu.memory_space<vmem>>, vector<128x128xf32>
    %cst_18 = arith.constant dense<0.000000e+00> : vector<152x128xf32>
    %35 = tpu.matmul %33, %34, %cst_18 {dimension_numbers = #tpu.dot_dimension_numbers<[1], [0], [0], [1], [0, 0, 1, 1], [], []>} : vector<152x128xf32>, vector<128x128xf32>, vector<152x128xf32> -> vector<152x128xf32>
    %c0_19 = arith.constant 0 : index
    %c0_20 = arith.constant 0 : index
    %36 = vector.load %arg7[%c0_19, %c0_20] : memref<1x128xf32, #tpu.memory_space<vmem>>, vector<1x128xf32>
    %37 = vector.broadcast %36 : vector<1x128xf32> to vector<152x128xf32>
    %38 = arith.addf %35, %37 : vector<152x128xf32>
    %cst_21 = arith.constant dense<0.000000e+00> : vector<152xf32>
    %39 = vector.multi_reduction <add>, %38, %cst_21 [1] : vector<152x128xf32> to vector<152xf32>
    %40 = vector.shape_cast %39 : vector<152xf32> to vector<152x1xf32>
    %41 = arith.mulf %38, %38 : vector<152x128xf32>
    %cst_22 = arith.constant dense<0.000000e+00> : vector<152xf32>
    %42 = vector.multi_reduction <add>, %41, %cst_22 [1] : vector<152x128xf32> to vector<152xf32>
    %43 = vector.shape_cast %42 : vector<152xf32> to vector<152x1xf32>
    %cst_23 = arith.constant 0.010416667 : f32
    %44 = vector.broadcast %cst_23 : f32 to vector<152x1xf32>
    %45 = arith.mulf %40, %44 : vector<152x1xf32>
    %cst_24 = arith.constant 0.010416667 : f32
    %46 = vector.broadcast %cst_24 : f32 to vector<152x1xf32>
    %47 = arith.mulf %43, %46 : vector<152x1xf32>
    %48 = arith.mulf %45, %45 : vector<152x1xf32>
    %49 = arith.subf %47, %48 : vector<152x1xf32>
    %cst_25 = arith.constant 0.000000e+00 : f32
    %50 = vector.broadcast %cst_25 : f32 to vector<152x1xf32>
    %51 = arith.maximumf %49, %50 : vector<152x1xf32>
    %cst_26 = arith.constant 9.99999974E-6 : f32
    %52 = vector.broadcast %cst_26 : f32 to vector<152x1xf32>
    %53 = arith.addf %51, %52 : vector<152x1xf32>
    %54 = math.rsqrt %53 : vector<152x1xf32>
    %55 = vector.broadcast %45 : vector<152x1xf32> to vector<152x128xf32>
    %56 = arith.subf %38, %55 : vector<152x128xf32>
    %57 = vector.broadcast %54 : vector<152x1xf32> to vector<152x128xf32>
    %58 = arith.mulf %56, %57 : vector<152x128xf32>
    %c0_27 = arith.constant 0 : index
    %c0_28 = arith.constant 0 : index
    %59 = vector.load %arg8[%c0_27, %c0_28] : memref<1x128xf32, #tpu.memory_space<vmem>>, vector<1x128xf32>
    %60 = vector.broadcast %59 : vector<1x128xf32> to vector<152x128xf32>
    %61 = arith.mulf %58, %60 : vector<152x128xf32>
    %c0_29 = arith.constant 0 : index
    %c0_30 = arith.constant 0 : index
    %62 = vector.load %arg9[%c0_29, %c0_30] : memref<1x128xf32, #tpu.memory_space<vmem>>, vector<1x128xf32>
    %63 = vector.broadcast %62 : vector<1x128xf32> to vector<152x128xf32>
    %64 = arith.addf %61, %63 : vector<152x128xf32>
    %cst_31 = arith.constant 0.000000e+00 : f32
    %65 = vector.broadcast %cst_31 : f32 to vector<152x128xf32>
    %66 = arith.maximumf %64, %65 : vector<152x128xf32>
    %c0_32 = arith.constant 0 : index
    %c0_33 = arith.constant 0 : index
    %67 = vector.load %arg10[%c0_32, %c0_33] : memref<128x128xf32, #tpu.memory_space<vmem>>, vector<128x128xf32>
    %cst_34 = arith.constant dense<0.000000e+00> : vector<152x128xf32>
    %68 = tpu.matmul %66, %67, %cst_34 {dimension_numbers = #tpu.dot_dimension_numbers<[1], [0], [0], [1], [0, 0, 1, 1], [], []>} : vector<152x128xf32>, vector<128x128xf32>, vector<152x128xf32> -> vector<152x128xf32>
    %c0_35 = arith.constant 0 : index
    %c0_36 = arith.constant 0 : index
    %69 = vector.load %arg11[%c0_35, %c0_36] : memref<1x128xf32, #tpu.memory_space<vmem>>, vector<1x128xf32>
    %70 = vector.broadcast %69 : vector<1x128xf32> to vector<152x128xf32>
    %71 = arith.addf %68, %70 : vector<152x128xf32>
    %cst_37 = arith.constant dense<0.000000e+00> : vector<152xf32>
    %72 = vector.multi_reduction <add>, %71, %cst_37 [1] : vector<152x128xf32> to vector<152xf32>
    %73 = vector.shape_cast %72 : vector<152xf32> to vector<152x1xf32>
    %74 = arith.mulf %71, %71 : vector<152x128xf32>
    %cst_38 = arith.constant dense<0.000000e+00> : vector<152xf32>
    %75 = vector.multi_reduction <add>, %74, %cst_38 [1] : vector<152x128xf32> to vector<152xf32>
    %76 = vector.shape_cast %75 : vector<152xf32> to vector<152x1xf32>
    %cst_39 = arith.constant 0.010416667 : f32
    %77 = vector.broadcast %cst_39 : f32 to vector<152x1xf32>
    %78 = arith.mulf %73, %77 : vector<152x1xf32>
    %cst_40 = arith.constant 0.010416667 : f32
    %79 = vector.broadcast %cst_40 : f32 to vector<152x1xf32>
    %80 = arith.mulf %76, %79 : vector<152x1xf32>
    %81 = arith.mulf %78, %78 : vector<152x1xf32>
    %82 = arith.subf %80, %81 : vector<152x1xf32>
    %cst_41 = arith.constant 0.000000e+00 : f32
    %83 = vector.broadcast %cst_41 : f32 to vector<152x1xf32>
    %84 = arith.maximumf %82, %83 : vector<152x1xf32>
    %cst_42 = arith.constant 9.99999974E-6 : f32
    %85 = vector.broadcast %cst_42 : f32 to vector<152x1xf32>
    %86 = arith.addf %84, %85 : vector<152x1xf32>
    %87 = math.rsqrt %86 : vector<152x1xf32>
    %88 = vector.broadcast %78 : vector<152x1xf32> to vector<152x128xf32>
    %89 = arith.subf %71, %88 : vector<152x128xf32>
    %90 = vector.broadcast %87 : vector<152x1xf32> to vector<152x128xf32>
    %91 = arith.mulf %89, %90 : vector<152x128xf32>
    %c0_43 = arith.constant 0 : index
    %c0_44 = arith.constant 0 : index
    %92 = vector.load %arg12[%c0_43, %c0_44] : memref<1x128xf32, #tpu.memory_space<vmem>>, vector<1x128xf32>
    %93 = vector.broadcast %92 : vector<1x128xf32> to vector<152x128xf32>
    %94 = arith.mulf %91, %93 : vector<152x128xf32>
    %c0_45 = arith.constant 0 : index
    %c0_46 = arith.constant 0 : index
    %95 = vector.load %arg13[%c0_45, %c0_46] : memref<1x128xf32, #tpu.memory_space<vmem>>, vector<1x128xf32>
    %96 = vector.broadcast %95 : vector<1x128xf32> to vector<152x128xf32>
    %97 = arith.addf %94, %96 : vector<152x128xf32>
    %cst_47 = arith.constant 0.000000e+00 : f32
    %98 = vector.broadcast %cst_47 : f32 to vector<152x128xf32>
    %99 = arith.maximumf %97, %98 : vector<152x128xf32>
    %c0_48 = arith.constant 0 : index
    %c0_49 = arith.constant 0 : index
    %100 = vector.load %arg14[%c0_48, %c0_49] : memref<128x128xf32, #tpu.memory_space<vmem>>, vector<128x128xf32>
    %cst_50 = arith.constant dense<0.000000e+00> : vector<152x128xf32>
    %101 = tpu.matmul %99, %100, %cst_50 {dimension_numbers = #tpu.dot_dimension_numbers<[1], [0], [0], [1], [0, 0, 1, 1], [], []>} : vector<152x128xf32>, vector<128x128xf32>, vector<152x128xf32> -> vector<152x128xf32>
    %c0_51 = arith.constant 0 : index
    %c0_52 = arith.constant 0 : index
    %102 = vector.load %arg15[%c0_51, %c0_52] : memref<1x128xf32, #tpu.memory_space<vmem>>, vector<1x128xf32>
    %103 = vector.broadcast %102 : vector<1x128xf32> to vector<152x128xf32>
    %104 = arith.addf %101, %103 : vector<152x128xf32>
    %c0_53 = arith.constant 0 : index
    %c0_54 = arith.constant 0 : index
    %105 = vector.load %arg16[%c0_53, %c0_54] : memref<152x128xf32, #tpu.memory_space<vmem>>, vector<152x128xf32>
    tpu.vector_store %arg16[%c0_53, %c0_54], %104 {strides = array<i32>} : memref<152x128xf32, #tpu.memory_space<vmem>>, vector<152x128xf32>,
    return
  }
  func.func @transform_0(%arg0: i32) -> (i32, i32) {
    %c0_i32 = arith.constant 0 : i32
    %c0_i32_0 = arith.constant 0 : i32
    return %arg0, %c0_i32 : i32, i32
  }
  func.func @transform_1(%arg0: i32) -> (i32, i32) {
    %c0_i32 = arith.constant 0 : i32
    %c0_i32_0 = arith.constant 0 : i32
    %c0_i32_1 = arith.constant 0 : i32
    return %c0_i32, %c0_i32_0 : i32, i32
  }
  func.func @transform_2(%arg0: i32) -> (i32, i32) {
    %c0_i32 = arith.constant 0 : i32
    %c0_i32_0 = arith.constant 0 : i32
    %c0_i32_1 = arith.constant 0 : i32
    return %c0_i32, %c0_i32_0 : i32, i32
  }
  func.func @transform_3(%arg0: i32) -> (i32, i32) {
    %c0_i32 = arith.constant 0 : i32
    %c0_i32_0 = arith.constant 0 : i32
    %c0_i32_1 = arith.constant 0 : i32
    return %c0_i32, %c0_i32_0 : i32, i32
  }
  func.func @transform_4(%arg0: i32) -> (i32, i32) {
    %c0_i32 = arith.constant 0 : i32
    %c0_i32_0 = arith.constant 0 : i32
    %c0_i32_1 = arith.constant 0 : i32
    return %c0_i32, %c0_i32_0 : i32, i32
  }
  func.func @transform_5(%arg0: i32) -> (i32, i32) {
    %c0_i32 = arith.constant 0 : i32
    %c0_i32_0 = arith.constant 0 : i32
    %c0_i32_1 = arith.constant 0 : i32
    return %c0_i32, %c0_i32_0 : i32, i32
  }
  func.func @transform_6(%arg0: i32) -> (i32, i32) {
    %c0_i32 = arith.constant 0 : i32
    %c0_i32_0 = arith.constant 0 : i32
    %c0_i32_1 = arith.constant 0 : i32
    return %c0_i32, %c0_i32_0 : i32, i32
  }
  func.func @transform_7(%arg0: i32) -> (i32, i32) {
    %c0_i32 = arith.constant 0 : i32
    %c0_i32_0 = arith.constant 0 : i32
    %c0_i32_1 = arith.constant 0 : i32
    return %c0_i32, %c0_i32_0 : i32, i32
  }
  func.func @transform_8(%arg0: i32) -> (i32, i32) {
    %c0_i32 = arith.constant 0 : i32
    %c0_i32_0 = arith.constant 0 : i32
    %c0_i32_1 = arith.constant 0 : i32
    return %c0_i32, %c0_i32_0 : i32, i32
  }
  func.func @transform_9(%arg0: i32) -> (i32, i32) {
    %c0_i32 = arith.constant 0 : i32
    %c0_i32_0 = arith.constant 0 : i32
    %c0_i32_1 = arith.constant 0 : i32
    return %c0_i32, %c0_i32_0 : i32, i32
  }
  func.func @transform_10(%arg0: i32) -> (i32, i32) {
    %c0_i32 = arith.constant 0 : i32
    %c0_i32_0 = arith.constant 0 : i32
    %c0_i32_1 = arith.constant 0 : i32
    return %c0_i32, %c0_i32_0 : i32, i32
  }
  func.func @transform_11(%arg0: i32) -> (i32, i32) {
    %c0_i32 = arith.constant 0 : i32
    %c0_i32_0 = arith.constant 0 : i32
    %c0_i32_1 = arith.constant 0 : i32
    return %c0_i32, %c0_i32_0 : i32, i32
  }
  func.func @transform_12(%arg0: i32) -> (i32, i32) {
    %c0_i32 = arith.constant 0 : i32
    %c0_i32_0 = arith.constant 0 : i32
    %c0_i32_1 = arith.constant 0 : i32
    return %c0_i32, %c0_i32_0 : i32, i32
  }
  func.func @transform_13(%arg0: i32) -> (i32, i32) {
    %c0_i32 = arith.constant 0 : i32
    %c0_i32_0 = arith.constant 0 : i32
    %c0_i32_1 = arith.constant 0 : i32
    return %c0_i32, %c0_i32_0 : i32, i32
  }
  func.func @transform_14(%arg0: i32) -> (i32, i32) {
    %c0_i32 = arith.constant 0 : i32
    %c0_i32_0 = arith.constant 0 : i32
    %c0_i32_1 = arith.constant 0 : i32
    return %c0_i32, %c0_i32_0 : i32, i32
  }
  func.func @transform_15(%arg0: i32) -> (i32, i32) {
    %c0_i32 = arith.constant 0 : i32
    %c0_i32_0 = arith.constant 0 : i32
    return %arg0, %c0_i32 : i32, i32
  }
}

</mosaic_0001>

<llo_original>
// kernel: tpu_custom_call.1
$region0: #{tpu_custom_call.1}
  #allocation0 [shape = 'u32[]', space=smem, size = 0x4, offset = 0x4, fixed_abs, tag = 'smem constant byte address 0x4 - core index']
  #allocation1 [shape = 'u32[72,128]{1,0:T(1,128)}', space=vmem, size = 0x9000, scoped, tag = 'internal scratch']
  %s0 = inlined_call_operand.vmem [shape: f32[300,48], index: 0, kind: input, shape index: {}]
  %s1 = inlined_call_operand.vmem [shape: f32[48,128], index: 1, kind: input, shape index: {}]
  %s2 = inlined_call_operand.vmem [shape: f32[1,128], index: 2, kind: input, shape index: {}]
  %s3 = inlined_call_operand.vmem [shape: f32[1,128], index: 3, kind: input, shape index: {}]
  %s4 = inlined_call_operand.vmem [shape: f32[1,128], index: 4, kind: input, shape index: {}]
  %s5 = inlined_call_operand.vmem [shape: f32[128,128], index: 5, kind: input, shape index: {}]
  %s6 = inlined_call_operand.vmem [shape: f32[1,128], index: 6, kind: input, shape index: {}]
  %s7 = inlined_call_operand.vmem [shape: f32[1,128], index: 7, kind: input, shape index: {}]
  %s8 = inlined_call_operand.vmem [shape: f32[1,128], index: 8, kind: input, shape index: {}]
  %s9 = inlined_call_operand.vmem [shape: f32[128,128], index: 9, kind: input, shape index: {}]
  %s10 = inlined_call_operand.vmem [shape: f32[1,128], index: 10, kind: input, shape index: {}]
  %s11 = inlined_call_operand.vmem [shape: f32[1,128], index: 11, kind: input, shape index: {}]
  %s12 = inlined_call_operand.vmem [shape: f32[1,128], index: 12, kind: input, shape index: {}]
  %s13 = inlined_call_operand.vmem [shape: f32[128,128], index: 13, kind: input, shape index: {}]
  %s14 = inlined_call_operand.vmem [shape: f32[1,128], index: 14, kind: input, shape index: {}]
  %s15 = inlined_call_operand.hbm [shape: f32[300,128], index: 15, kind: output, shape index: {}]
  %s16 = sld [smem:[#allocation0]]
  $region93: #{tpu_custom_call.1} parent=0
    _
  %s18 = ssub.s32 1, %s16
  %s19 = scalar_select 0, %s18, %s16
  $region1: #{tpu_custom_call.1} parent=0
    #allocation2 [shape = 'u8[155648]{0}', space=vmem, size = 0x26000, scoped, tag = 'output window, operand 0']
    #allocation3 [shape = 's32[2]{0}', space=sflag, size = 0x8, scoped, tag = 'scoped memory for tpu_custom_call.1']
    %20 = vsyncpa [#allocation3], 0
    %s21 = scalar_lea.sflag [#allocation3], 1
    %22 = vsyncpa %s21, 0
    loop: start=0, step=1, limit=4
    $region2: #{tpu_custom_call.1} parent=1 // loop_pre_header
      _
    $region3: #{tpu_custom_call.1} parent=1 // loop_header
      %s24 = sphi 0, %s28
      %p25 = scmp.ge.s32.totalorder %s24, 4
      %s34 = sphi 0, %s36
      %s37 = sphi 0, %s34
      %s38 = sphi 0, %s37
      %s54 = sphi 0, %s38
      %s58 = sphi 0, %s58
      %s60 = sphi 0, %s58
      %s61 = sphi 0, %s60
      %s75 = sphi 0, %s61
      %s79 = sphi 0, %s79
      %s81 = sphi 0, %s79
      %s82 = sphi 0, %s81
      %s96 = sphi 0, %s82
      %s100 = sphi 0, %s100
      %s102 = sphi 0, %s100
      %s103 = sphi 0, %s102
      %s117 = sphi 0, %s103
      %s121 = sphi 0, %s121
      %s123 = sphi 0, %s121
      %s124 = sphi 0, %s123
      %s138 = sphi 0, %s124
      %s142 = sphi 0, %s142
      %s144 = sphi 0, %s142
      %s145 = sphi 0, %s144
      %s159 = sphi 0, %s145
      %s163 = sphi 0, %s163
      %s165 = sphi 0, %s163
      %s166 = sphi 0, %s165
      %s180 = sphi 0, %s166
      %s184 = sphi 0, %s184
      %s186 = sphi 0, %s184
      %s187 = sphi 0, %s186
      %s201 = sphi 0, %s187
      %s205 = sphi 0, %s205
      %s207 = sphi 0, %s205
      %s208 = sphi 0, %s207
      %s222 = sphi 0, %s208
      %s226 = sphi 0, %s226
      %s228 = sphi 0, %s226
      %s229 = sphi 0, %s228
      %s243 = sphi 0, %s229
      %s247 = sphi 0, %s247
      %s249 = sphi 0, %s247
      %s250 = sphi 0, %s249
      %s264 = sphi 0, %s250
      %s268 = sphi 0, %s268
      %s270 = sphi 0, %s268
      %s271 = sphi 0, %s270
      %s285 = sphi 0, %s271
      %s289 = sphi 0, %s289
      %s291 = sphi 0, %s289
      %s292 = sphi 0, %s291
      %s306 = sphi 0, %s292
      %s310 = sphi 0, %s310
      %s312 = sphi 0, %s310
      %s313 = sphi 0, %s312
      %s327 = sphi 0, %s313
      %s331 = sphi 0, %s331
      %s333 = sphi 0, %s331
      %s334 = sphi 0, %s333
      %s348 = sphi 0, %s334
      %s354 = sphi 0, %s356
      %s357 = sphi 0, %s354
      %s358 = sphi 0, %s357
      %s374 = sphi 0, %s358
    $region4: #{tpu_custom_call.1} parent=1 // loop_header_branch
      %27 = sbr.rel (%p25) target = $region8
    $region5: #{tpu_custom_call.1} parent=1 // loop_body
      %s29 = ssub.s32 %s24, 1
      %s30 = ssub.s32 %s24, 2
      %s31 = sadd.s32 %s24, 1
      %s32 = ssub.s32 %s24, %s31
      %p33 = scmp.eq.s32.totalorder %s32, 0
      %s35 = sadd.s32 %s34, 1
      %s36 = scalar_select %p33, %s34, %s35
      %p39 = pneg %p33
      %p40 = scmp.eq.s32.totalorder %s24, 1
      %p41 = por %p39, %p40
      %p42 = scmp.ne.s32.totalorder %s34, %s37
      %p43 = scmp.eq.s32.totalorder %s24, 0
      %p44 = por %p42, %p43
      %p45 = scmp.ne.s32.totalorder %s34, %s37
      %p46 = scmp.eq.s32.totalorder %s29, 1
      %p47 = por %p45, %p46
      %p48 = scmp.ne.s32.totalorder %s37, %s38
      %p49 = scmp.eq.s32.totalorder %s29, 0
      %p50 = por %p48, %p49
      %p51 = scmp.ne.s32.totalorder %s37, %s38
      %p52 = scmp.eq.s32.totalorder %s30, 1
      %p53 = por %p51, %p52
      %p55 = scmp.ne.s32.totalorder %s38, %s54
      %p56 = scmp.eq.s32.totalorder %s30, 0
      %p57 = por %p55, %p56
      %s59 = sadd.s32 %s58, 1
      %p62 = scmp.eq.s32.totalorder %s24, 1
      %p63 = scmp.ne.s32.totalorder %s58, %s60
      %p64 = scmp.eq.s32.totalorder %s24, 0
      %p65 = por %p63, %p64
      %p66 = scmp.ne.s32.totalorder %s58, %s60
      %p67 = scmp.eq.s32.totalorder %s29, 1
      %p68 = por %p66, %p67
      %p69 = scmp.ne.s32.totalorder %s60, %s61
      %p70 = scmp.eq.s32.totalorder %s29, 0
      %p71 = por %p69, %p70
      %p72 = scmp.ne.s32.totalorder %s60, %s61
      %p73 = scmp.eq.s32.totalorder %s30, 1
      %p74 = por %p72, %p73
      %p76 = scmp.ne.s32.totalorder %s61, %s75
      %p77 = scmp.eq.s32.totalorder %s30, 0
      %p78 = por %p76, %p77
      %s80 = sadd.s32 %s79, 1
      %p83 = scmp.eq.s32.totalorder %s24, 1
      %p84 = scmp.ne.s32.totalorder %s79, %s81
      %p85 = scmp.eq.s32.totalorder %s24, 0
      %p86 = por %p84, %p85
      %p87 = scmp.ne.s32.totalorder %s79, %s81
      %p88 = scmp.eq.s32.totalorder %s29, 1
      %p89 = por %p87, %p88
      %p90 = scmp.ne.s32.totalorder %s81, %s82
      %p91 = scmp.eq.s32.totalorder %s29, 0
      %p92 = por %p90, %p91
      %p93 = scmp.ne.s32.totalorder %s81, %s82
      %p94 = scmp.eq.s32.totalorder %s30, 1
      %p95 = por %p93, %p94
      %p97 = scmp.ne.s32.totalorder %s82, %s96
      %p98 = scmp.eq.s32.totalorder %s30, 0
      %p99 = por %p97, %p98
      %s101 = sadd.s32 %s100, 1
      %p104 = scmp.eq.s32.totalorder %s24, 1
      %p105 = scmp.ne.s32.totalorder %s100, %s102
      %p106 = scmp.eq.s32.totalorder %s24, 0
      %p107 = por %p105, %p106
      %p108 = scmp.ne.s32.totalorder %s100, %s102
      %p109 = scmp.eq.s32.totalorder %s29, 1
      %p110 = por %p108, %p109
      %p111 = scmp.ne.s32.totalorder %s102, %s103
      %p112 = scmp.eq.s32.totalorder %s29, 0
      %p113 = por %p111, %p112
      %p114 = scmp.ne.s32.totalorder %s102, %s103
      %p115 = scmp.eq.s32.totalorder %s30, 1
      %p116 = por %p114, %p115
      %p118 = scmp.ne.s32.totalorder %s103, %s117
      %p119 = scmp.eq.s32.totalorder %s30, 0
      %p120 = por %p118, %p119
      %s122 = sadd.s32 %s121, 1
      %p125 = scmp.eq.s32.totalorder %s24, 1
      %p126 = scmp.ne.s32.totalorder %s121, %s123
      %p127 = scmp.eq.s32.totalorder %s24, 0
      %p128 = por %p126, %p127
      %p129 = scmp.ne.s32.totalorder %s121, %s123
      %p130 = scmp.eq.s32.totalorder %s29, 1
      %p131 = por %p129, %p130
      %p132 = scmp.ne.s32.totalorder %s123, %s124
      %p133 = scmp.eq.s32.totalorder %s29, 0
      %p134 = por %p132, %p133
      %p135 = scmp.ne.s32.totalorder %s123, %s124
      %p136 = scmp.eq.s32.totalorder %s30, 1
      %p137 = por %p135, %p136
      %p139 = scmp.ne.s32.totalorder %s124, %s138
      %p140 = scmp.eq.s32.totalorder %s30, 0
      %p141 = por %p139, %p140
      %s143 = sadd.s32 %s142, 1
      %p146 = scmp.eq.s32.totalorder %s24, 1
      %p147 = scmp.ne.s32.totalorder %s142, %s144
      %p148 = scmp.eq.s32.totalorder %s24, 0
      %p149 = por %p147, %p148
      %p150 = scmp.ne.s32.totalorder %s142, %s144
      %p151 = scmp.eq.s32.totalorder %s29, 1
      %p152 = por %p150, %p151
      %p153 = scmp.ne.s32.totalorder %s144, %s145
      %p154 = scmp.eq.s32.totalorder %s29, 0
      %p155 = por %p153, %p154
      %p156 = scmp.ne.s32.totalorder %s144, %s145
      %p157 = scmp.eq.s32.totalorder %s30, 1
      %p158 = por %p156, %p157
      %p160 = scmp.ne.s32.totalorder %s145, %s159
      %p161 = scmp.eq.s32.totalorder %s30, 0
      %p162 = por %p160, %p161
      %s164 = sadd.s32 %s163, 1
      %p167 = scmp.eq.s32.totalorder %s24, 1
      %p168 = scmp.ne.s32.totalorder %s163, %s165
      %p169 = scmp.eq.s32.totalorder %s24, 0
      %p170 = por %p168, %p169
      %p171 = scmp.ne.s32.totalorder %s163, %s165
      %p172 = scmp.eq.s32.totalorder %s29, 1
      %p173 = por %p171, %p172
      %p174 = scmp.ne.s32.totalorder %s165, %s166
      %p175 = scmp.eq.s32.totalorder %s29, 0
      %p176 = por %p174, %p175
      %p177 = scmp.ne.s32.totalorder %s165, %s166
      %p178 = scmp.eq.s32.totalorder %s30, 1
      %p179 = por %p177, %p178
      %p181 = scmp.ne.s32.totalorder %s166, %s180
      %p182 = scmp.eq.s32.totalorder %s30, 0
      %p183 = por %p181, %p182
      %s185 = sadd.s32 %s184, 1
      %p188 = scmp.eq.s32.totalorder %s24, 1
      %p189 = scmp.ne.s32.totalorder %s184, %s186
      %p190 = scmp.eq.s32.totalorder %s24, 0
      %p191 = por %p189, %p190
      %p192 = scmp.ne.s32.totalorder %s184, %s186
      %p193 = scmp.eq.s32.totalorder %s29, 1
      %p194 = por %p192, %p193
      %p195 = scmp.ne.s32.totalorder %s186, %s187
      %p196 = scmp.eq.s32.totalorder %s29, 0
      %p197 = por %p195, %p196
      %p198 = scmp.ne.s32.totalorder %s186, %s187
      %p199 = scmp.eq.s32.totalorder %s30, 1
      %p200 = por %p198, %p199
      %p202 = scmp.ne.s32.totalorder %s187, %s201
      %p203 = scmp.eq.s32.totalorder %s30, 0
      %p204 = por %p202, %p203
      %s206 = sadd.s32 %s205, 1
      %p209 = scmp.eq.s32.totalorder %s24, 1
      %p210 = scmp.ne.s32.totalorder %s205, %s207
      %p211 = scmp.eq.s32.totalorder %s24, 0
      %p212 = por %p210, %p211
      %p213 = scmp.ne.s32.totalorder %s205, %s207
      %p214 = scmp.eq.s32.totalorder %s29, 1
      %p215 = por %p213, %p214
      %p216 = scmp.ne.s32.totalorder %s207, %s208
      %p217 = scmp.eq.s32.totalorder %s29, 0
      %p218 = por %p216, %p217
      %p219 = scmp.ne.s32.totalorder %s207, %s208
      %p220 = scmp.eq.s32.totalorder %s30, 1
      %p221 = por %p219, %p220
      %p223 = scmp.ne.s32.totalorder %s208, %s222
      %p224 = scmp.eq.s32.totalorder %s30, 0
      %p225 = por %p223, %p224
      %s227 = sadd.s32 %s226, 1
      %p230 = scmp.eq.s32.totalorder %s24, 1
      %p231 = scmp.ne.s32.totalorder %s226, %s228
      %p232 = scmp.eq.s32.totalorder %s24, 0
      %p233 = por %p231, %p232
      %p234 = scmp.ne.s32.totalorder %s226, %s228
      %p235 = scmp.eq.s32.totalorder %s29, 1
      %p236 = por %p234, %p235
      %p237 = scmp.ne.s32.totalorder %s228, %s229
      %p238 = scmp.eq.s32.totalorder %s29, 0
      %p239 = por %p237, %p238
      %p240 = scmp.ne.s32.totalorder %s228, %s229
      %p241 = scmp.eq.s32.totalorder %s30, 1
      %p242 = por %p240, %p241
      %p244 = scmp.ne.s32.totalorder %s229, %s243
      %p245 = scmp.eq.s32.totalorder %s30, 0
      %p246 = por %p244, %p245
      %s248 = sadd.s32 %s247, 1
      %p251 = scmp.eq.s32.totalorder %s24, 1
      %p252 = scmp.ne.s32.totalorder %s247, %s249
      %p253 = scmp.eq.s32.totalorder %s24, 0
      %p254 = por %p252, %p253
      %p255 = scmp.ne.s32.totalorder %s247, %s249
      %p256 = scmp.eq.s32.totalorder %s29, 1
      %p257 = por %p255, %p256
      %p258 = scmp.ne.s32.totalorder %s249, %s250
      %p259 = scmp.eq.s32.totalorder %s29, 0
      %p260 = por %p258, %p259
      %p261 = scmp.ne.s32.totalorder %s249, %s250
      %p262 = scmp.eq.s32.totalorder %s30, 1
      %p263 = por %p261, %p262
      %p265 = scmp.ne.s32.totalorder %s250, %s264
      %p266 = scmp.eq.s32.totalorder %s30, 0
      %p267 = por %p265, %p266
      %s269 = sadd.s32 %s268, 1
      %p272 = scmp.eq.s32.totalorder %s24, 1
      %p273 = scmp.ne.s32.totalorder %s268, %s270
      %p274 = scmp.eq.s32.totalorder %s24, 0
      %p275 = por %p273, %p274
      %p276 = scmp.ne.s32.totalorder %s268, %s270
      %p277 = scmp.eq.s32.totalorder %s29, 1
      %p278 = por %p276, %p277
      %p279 = scmp.ne.s32.totalorder %s270, %s271
      %p280 = scmp.eq.s32.totalorder %s29, 0
      %p281 = por %p279, %p280
      %p282 = scmp.ne.s32.totalorder %s270, %s271
      %p283 = scmp.eq.s32.totalorder %s30, 1
      %p284 = por %p282, %p283
      %p286 = scmp.ne.s32.totalorder %s271, %s285
      %p287 = scmp.eq.s32.totalorder %s30, 0
      %p288 = por %p286, %p287
      %s290 = sadd.s32 %s289, 1
      %p293 = scmp.eq.s32.totalorder %s24, 1
      %p294 = scmp.ne.s32.totalorder %s289, %s291
      %p295 = scmp.eq.s32.totalorder %s24, 0
      %p296 = por %p294, %p295
      %p297 = scmp.ne.s32.totalorder %s289, %s291
      %p298 = scmp.eq.s32.totalorder %s29, 1
      %p299 = por %p297, %p298
      %p300 = scmp.ne.s32.totalorder %s291, %s292
      %p301 = scmp.eq.s32.totalorder %s29, 0
      %p302 = por %p300, %p301
      %p303 = scmp.ne.s32.totalorder %s291, %s292
      %p304 = scmp.eq.s32.totalorder %s30, 1
      %p305 = por %p303, %p304
      %p307 = scmp.ne.s32.totalorder %s292, %s306
      %p308 = scmp.eq.s32.totalorder %s30, 0
      %p309 = por %p307, %p308
      %s311 = sadd.s32 %s310, 1
      %p314 = scmp.eq.s32.totalorder %s24, 1
      %p315 = scmp.ne.s32.totalorder %s310, %s312
      %p316 = scmp.eq.s32.totalorder %s24, 0
      %p317 = por %p315, %p316
      %p318 = scmp.ne.s32.totalorder %s310, %s312
      %p319 = scmp.eq.s32.totalorder %s29, 1
      %p320 = por %p318, %p319
      %p321 = scmp.ne.s32.totalorder %s312, %s313
      %p322 = scmp.eq.s32.totalorder %s29, 0
      %p323 = por %p321, %p322
      %p324 = scmp.ne.s32.totalorder %s312, %s313
      %p325 = scmp.eq.s32.totalorder %s30, 1
      %p326 = por %p324, %p325
      %p328 = scmp.ne.s32.totalorder %s313, %s327
      %p329 = scmp.eq.s32.totalorder %s30, 0
      %p330 = por %p328, %p329
      %s332 = sadd.s32 %s331, 1
      %p335 = scmp.eq.s32.totalorder %s24, 1
      %p336 = scmp.ne.s32.totalorder %s331, %s333
      %p337 = scmp.eq.s32.totalorder %s24, 0
      %p338 = por %p336, %p337
      %p339 = scmp.ne.s32.totalorder %s331, %s333
      %p340 = scmp.eq.s32.totalorder %s29, 1
      %p341 = por %p339, %p340
      %p342 = scmp.ne.s32.totalorder %s333, %s334
      %p343 = scmp.eq.s32.totalorder %s29, 0
      %p344 = por %p342, %p343
      %p345 = scmp.ne.s32.totalorder %s333, %s334
      %p346 = scmp.eq.s32.totalorder %s30, 1
      %p347 = por %p345, %p346
      %p349 = scmp.ne.s32.totalorder %s334, %s348
      %p350 = scmp.eq.s32.totalorder %s30, 0
      %p351 = por %p349, %p350
      %s352 = ssub.s32 %s24, %s31
      %p353 = scmp.eq.s32.totalorder %s352, 0
      %s355 = sadd.s32 %s354, 1
      %s356 = scalar_select %p353, %s354, %s355
      %p359 = pneg %p353
      %p360 = scmp.eq.s32.totalorder %s24, 1
      %p361 = por %p359, %p360
      %p362 = scmp.ne.s32.totalorder %s354, %s357
      %p363 = scmp.eq.s32.totalorder %s24, 0
      %p364 = por %p362, %p363
      %p365 = scmp.ne.s32.totalorder %s354, %s357
      %p366 = scmp.eq.s32.totalorder %s29, 1
      %p367 = por %p365, %p366
      %p368 = scmp.ne.s32.totalorder %s357, %s358
      %p369 = scmp.eq.s32.totalorder %s29, 0
      %p370 = por %p368, %p369
      %p371 = scmp.ne.s32.totalorder %s357, %s358
      %p372 = scmp.eq.s32.totalorder %s30, 1
      %p373 = por %p371, %p372
      %p375 = scmp.ne.s32.totalorder %s358, %s374
      %p376 = scmp.eq.s32.totalorder %s30, 0
      %p377 = por %p375, %p376
      %p378 = scmp.le.s32.totalorder 1, %s24
      %p379 = scmp.lt.s32.totalorder %s24, 3
      %p380 = pnand %p378, %p379
      %p381 = pneg %p380
      // Predicated region
      $region9: #{tpu_custom_call.1} parent=5 // pred_check
        _
      $region10: #{tpu_custom_call.1} parent=5 // pred_check_branch
        %383 = sbr.rel (%p380) target = $region12
      $region11: #{tpu_custom_call.1} parent=5 // pred_region
        %s384 = ssub.s32 %s24, 1
        // Predicated region
        $region13: #{tpu_custom_call.1} parent=11 // pred_check
          %p385 = pneg %p71
        $region14: #{tpu_custom_call.1} parent=11 // pred_check_branch
          %387 = sbr.rel (%p385) target = $region16
        $region15: #{tpu_custom_call.1} parent=11 // pred_region
          _
        $region16: #{tpu_custom_call.1} parent=11 // pred_fallthru
          _
        // Predicated region
        $region17: #{tpu_custom_call.1} parent=11 // pred_check
          %p388 = pneg %p92
        $region18: #{tpu_custom_call.1} parent=11 // pred_check_branch
          %390 = sbr.rel (%p388) target = $region20
        $region19: #{tpu_custom_call.1} parent=11 // pred_region
          _
        $region20: #{tpu_custom_call.1} parent=11 // pred_fallthru
          _
        // Predicated region
        $region21: #{tpu_custom_call.1} parent=11 // pred_check
          %p391 = pneg %p113
        $region22: #{tpu_custom_call.1} parent=11 // pred_check_branch
          %393 = sbr.rel (%p391) target = $region24
        $region23: #{tpu_custom_call.1} parent=11 // pred_region
          _
        $region24: #{tpu_custom_call.1} parent=11 // pred_fallthru
          _
        // Predicated region
        $region25: #{tpu_custom_call.1} parent=11 // pred_check
          %p394 = pneg %p134
        $region26: #{tpu_custom_call.1} parent=11 // pred_check_branch
          %396 = sbr.rel (%p394) target = $region28
        $region27: #{tpu_custom_call.1} parent=11 // pred_region
          _
        $region28: #{tpu_custom_call.1} parent=11 // pred_fallthru
          _
        // Predicated region
        $region29: #{tpu_custom_call.1} parent=11 // pred_check
          %p397 = pneg %p155
        $region30: #{tpu_custom_call.1} parent=11 // pred_check_branch
          %399 = sbr.rel (%p397) target = $region32
        $region31: #{tpu_custom_call.1} parent=11 // pred_region
          _
        $region32: #{tpu_custom_call.1} parent=11 // pred_fallthru
          _
        // Predicated region
        $region33: #{tpu_custom_call.1} parent=11 // pred_check
          %p400 = pneg %p176
        $region34: #{tpu_custom_call.1} parent=11 // pred_check_branch
          %402 = sbr.rel (%p400) target = $region36
        $region35: #{tpu_custom_call.1} parent=11 // pred_region
          _
        $region36: #{tpu_custom_call.1} parent=11 // pred_fallthru
          _
        // Predicated region
        $region37: #{tpu_custom_call.1} parent=11 // pred_check
          %p403 = pneg %p197
        $region38: #{tpu_custom_call.1} parent=11 // pred_check_branch
          %405 = sbr.rel (%p403) target = $region40
        $region39: #{tpu_custom_call.1} parent=11 // pred_region
          _
        $region40: #{tpu_custom_call.1} parent=11 // pred_fallthru
          _
        // Predicated region
        $region41: #{tpu_custom_call.1} parent=11 // pred_check
          %p406 = pneg %p218
        $region42: #{tpu_custom_call.1} parent=11 // pred_check_branch
          %408 = sbr.rel (%p406) target = $region44
        $region43: #{tpu_custom_call.1} parent=11 // pred_region
          _
        $region44: #{tpu_custom_call.1} parent=11 // pred_fallthru
          _
        // Predicated region
        $region45: #{tpu_custom_call.1} parent=11 // pred_check
          %p409 = pneg %p239
        $region46: #{tpu_custom_call.1} parent=11 // pred_check_branch
          %411 = sbr.rel (%p409) target = $region48
        $region47: #{tpu_custom_call.1} parent=11 // pred_region
          _
        $region48: #{tpu_custom_call.1} parent=11 // pred_fallthru
          _
        // Predicated region
        $region49: #{tpu_custom_call.1} parent=11 // pred_check
          %p412 = pneg %p260
        $region50: #{tpu_custom_call.1} parent=11 // pred_check_branch
          %414 = sbr.rel (%p412) target = $region52
        $region51: #{tpu_custom_call.1} parent=11 // pred_region
          _
        $region52: #{tpu_custom_call.1} parent=11 // pred_fallthru
          _
        // Predicated region
        $region53: #{tpu_custom_call.1} parent=11 // pred_check
          %p415 = pneg %p281
        $region54: #{tpu_custom_call.1} parent=11 // pred_check_branch
          %417 = sbr.rel (%p415) target = $region56
        $region55: #{tpu_custom_call.1} parent=11 // pred_region
          _
        $region56: #{tpu_custom_call.1} parent=11 // pred_fallthru
          _
        // Predicated region
        $region57: #{tpu_custom_call.1} parent=11 // pred_check
          %p418 = pneg %p302
        $region58: #{tpu_custom_call.1} parent=11 // pred_check_branch
          %420 = sbr.rel (%p418) target = $region60
        $region59: #{tpu_custom_call.1} parent=11 // pred_region
          _
        $region60: #{tpu_custom_call.1} parent=11 // pred_fallthru
          _
        // Predicated region
        $region61: #{tpu_custom_call.1} parent=11 // pred_check
          %p421 = pneg %p323
        $region62: #{tpu_custom_call.1} parent=11 // pred_check_branch
          %423 = sbr.rel (%p421) target = $region64
        $region63: #{tpu_custom_call.1} parent=11 // pred_region
          _
        $region64: #{tpu_custom_call.1} parent=11 // pred_fallthru
          _
        // Predicated region
        $region65: #{tpu_custom_call.1} parent=11 // pred_check
          %p424 = pneg %p344
        $region66: #{tpu_custom_call.1} parent=11 // pred_check_branch
          %426 = sbr.rel (%p424) target = $region68
        $region67: #{tpu_custom_call.1} parent=11 // pred_region
          _
        $region68: #{tpu_custom_call.1} parent=11 // pred_fallthru
          _
      $region12: #{tpu_custom_call.1} parent=5 // pred_fallthru
        _
      %p427 = scmp.lt.s32.totalorder %s24, 2
      // Predicated region
      $region69: #{tpu_custom_call.1} parent=5 // pred_check
        %p428 = pneg %p427
      $region70: #{tpu_custom_call.1} parent=5 // pred_check_branch
        %430 = sbr.rel (%p428) target = $region72
      $region71: #{tpu_custom_call.1} parent=5 // pred_region
        // Predicated region
        $region73: #{tpu_custom_call.1} parent=71 // pred_check
          %p431 = pneg %p44
        $region74: #{tpu_custom_call.1} parent=71 // pred_check_branch
          %433 = sbr.rel (%p431) target = $region76
        $region75: #{tpu_custom_call.1} parent=71 // pred_region
          %s434 = smul.u32 19, %s24
          %p435 = scmp.lt.s32.totalorder %s434, 37
          %s436 = scalar_select %p435, %s434, 37
          %s437 = smul.addr %s436, 8
          %s438 = scalar_lea.vmem %s0, %s437
          %s439 = smul.u32 19, %s24
        $region76: #{tpu_custom_call.1} parent=71 // pred_fallthru
          _
      $region72: #{tpu_custom_call.1} parent=5 // pred_fallthru
        _
      %p440 = scmp.le.s32.totalorder 1, %s24
      %p441 = scmp.lt.s32.totalorder %s24, 3
      %p442 = pnand %p440, %p441
      %p443 = pneg %p442
      // Predicated region
      $region77: #{tpu_custom_call.1} parent=5 // pred_check
        _
      $region78: #{tpu_custom_call.1} parent=5 // pred_check_branch
        %445 = sbr.rel (%p442) target = $region80
      $region79: #{tpu_custom_call.1} parent=5 // pred_region
        %s446 = ssub.s32 %s24, 1
        %s447 = smul.u32 19, %s29
        %p448 = scmp.lt.s32.totalorder %s447, 37
        %s449 = scalar_select %p448, %s447, 37
        %s450 = smul.addr %s449, 8
        %s451 = scalar_lea.vmem %s0, %s450
        %p452 = pneg %p50
        %p453 = pneg %p47
        %p454 = pneg %p71
        %p455 = pneg %p68
        %p456 = pneg %p92
        %p457 = pneg %p89
        %p458 = pneg %p113
        %p459 = pneg %p110
        %p460 = pneg %p134
        %p461 = pneg %p131
        %p462 = pneg %p155
        %p463 = pneg %p152
        %p464 = pneg %p176
        %p465 = pneg %p173
        %p466 = pneg %p197
        %p467 = pneg %p194
        %p468 = pneg %p218
        %p469 = pneg %p215
        %p470 = pneg %p239
        %p471 = pneg %p236
        %p472 = pneg %p260
        %p473 = pneg %p257
        %p474 = pneg %p281
        %p475 = pneg %p278
        %p476 = pneg %p302
        %p477 = pneg %p299
        %p478 = pneg %p323
        %p479 = pneg %p320
        %p480 = pneg %p344
        %p481 = pneg %p341
        %p482 = pneg %p370
        %p483 = pneg %p367
        %s484 = sand.u32 %s357, 1
        %s485 = scalar_lea.sflag [#allocation3], %s484
        %s486 = sand.u32 %s357, 1
        %s487 = smul.addr %s486, 152
        %s488 = scalar_lea.vmem [#allocation2], %s487
        %s489 = smul.u32 19, %s29
        %p490 = scmp.lt.s32.totalorder %s489, 37
        %s491 = scalar_select %p490, %s489, 37
        %s492 = smul.addr %s491, 8
        %s493 = scalar_lea.vmem %s0, %s492
        %s494 = smul.u32 19, %s29
        %s495 = smul.u32 19, %s29
        %v496 = vld [vmem:[%s493] sm:$0xff]
        %v497 = vld [vmem:[%s493 + $0x8] sm:$0xff]
        %v498 = vld [vmem:[%s493 + $0x10] sm:$0xff]
        %v499 = vld [vmem:[%s493 + $0x18] sm:$0xff]
        %v500 = vld [vmem:[%s493 + $0x20] sm:$0xff]
        %v501 = vld [vmem:[%s493 + $0x28] sm:$0xff]
        %v502 = vld [vmem:[%s493 + $0x30] sm:$0xff]
        %v503 = vld [vmem:[%s493 + $0x38] sm:$0xff]
        %v504 = vld [vmem:[%s493 + $0x40] sm:$0xff]
        %v505 = vld [vmem:[%s493 + $0x48] sm:$0xff]
        %v506 = vld [vmem:[%s493 + $0x50] sm:$0xff]
        %v507 = vld [vmem:[%s493 + $0x58] sm:$0xff]
        %v508 = vld [vmem:[%s493 + $0x60] sm:$0xff]
        %v509 = vld [vmem:[%s493 + $0x68] sm:$0xff]
        %v510 = vld [vmem:[%s493 + $0x70] sm:$0xff]
        %v511 = vld [vmem:[%s493 + $0x78] sm:$0xff]
        %v512 = vld [vmem:[%s493 + $0x80] sm:$0xff]
        %v513 = vld [vmem:[%s493 + $0x88] sm:$0xff]
        %v514 = vld [vmem:[%s493 + $0x90] sm:$0xff]
        %v515 = vld [vmem:[%s1] sm:$0xff]
        %v516 = vld [vmem:[%s1 + $0x8] sm:$0xff]
        %v517 = vld [vmem:[%s1 + $0x10] sm:$0xff]
        %v518 = vld [vmem:[%s1 + $0x18] sm:$0xff]
        %v519 = vld [vmem:[%s1 + $0x20] sm:$0xff]
        %v520 = vld [vmem:[%s1 + $0x28] sm:$0xff]
        %v521 = vld [vmem:[%s2] sm:$0x1]
        %v523 = vperm.slane %v521, 0
        %vm525 = vcmask 392192
        %v527 = vsel %vm525, %v496, 0
        %v530 = vsel %vm525, %v497, 0
        %v533 = vsel %vm525, %v498, 0
        %v536 = vsel %vm525, %v499, 0
        %v539 = vsel %vm525, %v500, 0
        %v542 = vsel %vm525, %v501, 0
        %v545 = vsel %vm525, %v502, 0
        %v548 = vsel %vm525, %v503, 0
        %v551 = vsel %vm525, %v504, 0
        %v554 = vsel %vm525, %v505, 0
        %v557 = vsel %vm525, %v506, 0
        %v560 = vsel %vm525, %v507, 0
        %v563 = vsel %vm525, %v508, 0
        %v566 = vsel %vm525, %v509, 0
        %v569 = vsel %vm525, %v510, 0
        %v572 = vsel %vm525, %v511, 0
        %v575 = vsel %vm525, %v512, 0
        %v578 = vsel %vm525, %v513, 0
        %v581 = vsel %vm525, %v514, 0
        %583 = vmatpush.msra.mxu0 0.0
        %584 = vmatpush.msra.mxu0 0.0
        %585 = vmatpush.msra.mxu0 0.0
        %586 = vmatpush.msra.mxu0 0.0
        %587 = vmatpush.msra.mxu0 0.0
        %588 = vmatpush.msra.mxu0 0.0
        %589 = vmatpush.msra.mxu0 0.0
        %590 = vmatpush.msra.mxu0 0.0
        %591 = vmatpush.msra.mxu0 0.0
        %592 = vmatpush.msra.mxu0 0.0
        %593 = vmatpush.msra.mxu0 %v520
        %594 = vmatpush.msra.mxu0 %v519
        %595 = vmatpush.msra.mxu0 %v518
        %596 = vmatpush.msra.mxu0 %v517
        %597 = vmatpush.msra.mxu0 %v516
        %598 = vmatpush.msra.mxu0 %v515
        %599 = vmatmul.f32.gmra.mxu0 %v527
        %v600 = vpop.f32.mrf.mxu0
        %v601 = vadd.f32 %v523, %v600
        %602 = vmatmul.f32.gmra.mxu0 %v530
        %v603 = vpop.f32.mrf.mxu0
        %v604 = vadd.f32 %v523, %v603
        %605 = vmatmul.f32.gmra.mxu0 %v533
        %v606 = vpop.f32.mrf.mxu0
        %v607 = vadd.f32 %v523, %v606
        %608 = vmatmul.f32.gmra.mxu0 %v536
        %v609 = vpop.f32.mrf.mxu0
        %v610 = vadd.f32 %v523, %v609
        %611 = vmatmul.f32.gmra.mxu0 %v539
        %v612 = vpop.f32.mrf.mxu0
        %v613 = vadd.f32 %v523, %v612
        %614 = vmatmul.f32.gmra.mxu0 %v542
        %v615 = vpop.f32.mrf.mxu0
        %v616 = vadd.f32 %v523, %v615
        %617 = vmatmul.f32.gmra.mxu0 %v545
        %v618 = vpop.f32.mrf.mxu0
        %v619 = vadd.f32 %v523, %v618
        %620 = vmatmul.f32.gmra.mxu0 %v548
        %v621 = vpop.f32.mrf.mxu0
        %v622 = vadd.f32 %v523, %v621
        %623 = vmatmul.f32.gmra.mxu0 %v551
        %v624 = vpop.f32.mrf.mxu0
        %v625 = vadd.f32 %v523, %v624
        %626 = vmatmul.f32.gmra.mxu0 %v554
        %v627 = vpop.f32.mrf.mxu0
        %v628 = vadd.f32 %v523, %v627
        %629 = vmatmul.f32.gmra.mxu0 %v557
        %v630 = vpop.f32.mrf.mxu0
        %v631 = vadd.f32 %v523, %v630
        %632 = vmatmul.f32.gmra.mxu0 %v560
        %v633 = vpop.f32.mrf.mxu0
        %v634 = vadd.f32 %v523, %v633
        %635 = vmatmul.f32.gmra.mxu0 %v563
        %v636 = vpop.f32.mrf.mxu0
        %v637 = vadd.f32 %v523, %v636
        %638 = vmatmul.f32.gmra.mxu0 %v566
        %v639 = vpop.f32.mrf.mxu0
        %v640 = vadd.f32 %v523, %v639
        %641 = vmatmul.f32.gmra.mxu0 %v569
        %v642 = vpop.f32.mrf.mxu0
        %v643 = vadd.f32 %v523, %v642
        %644 = vmatmul.f32.gmra.mxu0 %v572
        %v645 = vpop.f32.mrf.mxu0
        %v646 = vadd.f32 %v523, %v645
        %647 = vmatmul.f32.gmra.mxu0 %v575
        %v648 = vpop.f32.mrf.mxu0
        %v649 = vadd.f32 %v523, %v648
        %650 = vmatmul.f32.gmra.mxu0 %v578
        %v651 = vpop.f32.mrf.mxu0
        %v652 = vadd.f32 %v523, %v651
        %653 = vmatmul.f32.gmra.mxu0 %v581
        %v654 = vpop.f32.mrf.mxu0
        %v655 = vadd.f32 %v523, %v654
        %656 = vdwg.mxu0
        %657 = vadd.xlane.f32.xlu0 %v601
        %v658 = vpop.xlane.xlu0 %657
        %659 = vadd.xlane.f32.xlu0 %v604
        %v660 = vpop.xlane.xlu0 %659
        %661 = vadd.xlane.f32.xlu0 %v607
        %v662 = vpop.xlane.xlu0 %661
        %663 = vadd.xlane.f32.xlu0 %v610
        %v664 = vpop.xlane.xlu0 %663
        %665 = vadd.xlane.f32.xlu0 %v613
        %v666 = vpop.xlane.xlu0 %665
        %667 = vadd.xlane.f32.xlu0 %v616
        %v668 = vpop.xlane.xlu0 %667
        %669 = vadd.xlane.f32.xlu0 %v619
        %v670 = vpop.xlane.xlu0 %669
        %671 = vadd.xlane.f32.xlu0 %v622
        %v672 = vpop.xlane.xlu0 %671
        %673 = vadd.xlane.f32.xlu0 %v625
        %v674 = vpop.xlane.xlu0 %673
        %675 = vadd.xlane.f32.xlu0 %v628
        %v676 = vpop.xlane.xlu0 %675
        %677 = vadd.xlane.f32.xlu0 %v631
        %v678 = vpop.xlane.xlu0 %677
        %679 = vadd.xlane.f32.xlu0 %v634
        %v680 = vpop.xlane.xlu0 %679
        %681 = vadd.xlane.f32.xlu0 %v637
        %v682 = vpop.xlane.xlu0 %681
        %683 = vadd.xlane.f32.xlu0 %v640
        %v684 = vpop.xlane.xlu0 %683
        %685 = vadd.xlane.f32.xlu0 %v643
        %v686 = vpop.xlane.xlu0 %685
        %687 = vadd.xlane.f32.xlu0 %v646
        %v688 = vpop.xlane.xlu0 %687
        %689 = vadd.xlane.f32.xlu0 %v649
        %v690 = vpop.xlane.xlu0 %689
        %691 = vadd.xlane.f32.xlu0 %v652
        %v692 = vpop.xlane.xlu0 %691
        %693 = vadd.xlane.f32.xlu0 %v655
        %v694 = vpop.xlane.xlu0 %693
        %v695 = vmul.f32 %v601, %v601
        %v696 = vmul.f32 %v604, %v604
        %v697 = vmul.f32 %v607, %v607
        %v698 = vmul.f32 %v610, %v610
        %v699 = vmul.f32 %v613, %v613
        %v700 = vmul.f32 %v616, %v616
        %v701 = vmul.f32 %v619, %v619
        %v702 = vmul.f32 %v622, %v622
        %v703 = vmul.f32 %v625, %v625
        %v704 = vmul.f32 %v628, %v628
        %v705 = vmul.f32 %v631, %v631
        %v706 = vmul.f32 %v634, %v634
        %v707 = vmul.f32 %v637, %v637
        %v708 = vmul.f32 %v640, %v640
        %v709 = vmul.f32 %v643, %v643
        %v710 = vmul.f32 %v646, %v646
        %v711 = vmul.f32 %v649, %v649
        %v712 = vmul.f32 %v652, %v652
        %v713 = vmul.f32 %v655, %v655
        %714 = vadd.xlane.f32.xlu0 %v695
        %v715 = vpop.xlane.xlu0 %714
        %716 = vadd.xlane.f32.xlu0 %v696
        %v717 = vpop.xlane.xlu0 %716
        %718 = vadd.xlane.f32.xlu0 %v697
        %v719 = vpop.xlane.xlu0 %718
        %720 = vadd.xlane.f32.xlu0 %v698
        %v721 = vpop.xlane.xlu0 %720
        %722 = vadd.xlane.f32.xlu0 %v699
        %v723 = vpop.xlane.xlu0 %722
        %724 = vadd.xlane.f32.xlu0 %v700
        %v725 = vpop.xlane.xlu0 %724
        %726 = vadd.xlane.f32.xlu0 %v701
        %v727 = vpop.xlane.xlu0 %726
        %728 = vadd.xlane.f32.xlu0 %v702
        %v729 = vpop.xlane.xlu0 %728
        %730 = vadd.xlane.f32.xlu0 %v703
        %v731 = vpop.xlane.xlu0 %730
        %732 = vadd.xlane.f32.xlu0 %v704
        %v733 = vpop.xlane.xlu0 %732
        %734 = vadd.xlane.f32.xlu0 %v705
        %v735 = vpop.xlane.xlu0 %734
        %736 = vadd.xlane.f32.xlu0 %v706
        %v737 = vpop.xlane.xlu0 %736
        %738 = vadd.xlane.f32.xlu0 %v707
        %v739 = vpop.xlane.xlu0 %738
        %740 = vadd.xlane.f32.xlu0 %v708
        %v741 = vpop.xlane.xlu0 %740
        %742 = vadd.xlane.f32.xlu0 %v709
        %v743 = vpop.xlane.xlu0 %742
        %744 = vadd.xlane.f32.xlu0 %v710
        %v745 = vpop.xlane.xlu0 %744
        %746 = vadd.xlane.f32.xlu0 %v711
        %v747 = vpop.xlane.xlu0 %746
        %748 = vadd.xlane.f32.xlu0 %v712
        %v749 = vpop.xlane.xlu0 %748
        %750 = vadd.xlane.f32.xlu0 %v713
        %v751 = vpop.xlane.xlu0 %750
        %v752 = vmul.f32 %v658, 0.010416667
        %v753 = vmul.f32 %v660, 0.010416667
        %v754 = vmul.f32 %v662, 0.010416667
        %v755 = vmul.f32 %v664, 0.010416667
        %v756 = vmul.f32 %v666, 0.010416667
        %v757 = vmul.f32 %v668, 0.010416667
        %v758 = vmul.f32 %v670, 0.010416667
        %v759 = vmul.f32 %v672, 0.010416667
        %v760 = vmul.f32 %v674, 0.010416667
        %v761 = vmul.f32 %v676, 0.010416667
        %v762 = vmul.f32 %v678, 0.010416667
        %v763 = vmul.f32 %v680, 0.010416667
        %v764 = vmul.f32 %v682, 0.010416667
        %v765 = vmul.f32 %v684, 0.010416667
        %v766 = vmul.f32 %v686, 0.010416667
        %v767 = vmul.f32 %v688, 0.010416667
        %v768 = vmul.f32 %v690, 0.010416667
        %v769 = vmul.f32 %v692, 0.010416667
        %v770 = vmul.f32 %v694, 0.010416667
        %v771 = vmul.f32 %v715, 0.010416667
        %v772 = vmul.f32 %v717, 0.010416667
        %v773 = vmul.f32 %v719, 0.010416667
        %v774 = vmul.f32 %v721, 0.010416667
        %v775 = vmul.f32 %v723, 0.010416667
        %v776 = vmul.f32 %v725, 0.010416667
        %v777 = vmul.f32 %v727, 0.010416667
        %v778 = vmul.f32 %v729, 0.010416667
        %v779 = vmul.f32 %v731, 0.010416667
        %v780 = vmul.f32 %v733, 0.010416667
        %v781 = vmul.f32 %v735, 0.010416667
        %v782 = vmul.f32 %v737, 0.010416667
        %v783 = vmul.f32 %v739, 0.010416667
        %v784 = vmul.f32 %v741, 0.010416667
        %v785 = vmul.f32 %v743, 0.010416667
        %v786 = vmul.f32 %v745, 0.010416667
        %v787 = vmul.f32 %v747, 0.010416667
        %v788 = vmul.f32 %v749, 0.010416667
        %v789 = vmul.f32 %v751, 0.010416667
        %v790 = vmul.f32 %v752, %v752
        %v791 = vmul.f32 %v753, %v753
        %v792 = vmul.f32 %v754, %v754
        %v793 = vmul.f32 %v755, %v755
        %v794 = vmul.f32 %v756, %v756
        %v795 = vmul.f32 %v757, %v757
        %v796 = vmul.f32 %v758, %v758
        %v797 = vmul.f32 %v759, %v759
        %v798 = vmul.f32 %v760, %v760
        %v799 = vmul.f32 %v761, %v761
        %v800 = vmul.f32 %v762, %v762
        %v801 = vmul.f32 %v763, %v763
        %v802 = vmul.f32 %v764, %v764
        %v803 = vmul.f32 %v765, %v765
        %v804 = vmul.f32 %v766, %v766
        %v805 = vmul.f32 %v767, %v767
        %v806 = vmul.f32 %v768, %v768
        %v807 = vmul.f32 %v769, %v769
        %v808 = vmul.f32 %v770, %v770
        %v809 = vsub.f32 %v771, %v790
        %v810 = vsub.f32 %v772, %v791
        %v811 = vsub.f32 %v773, %v792
        %v812 = vsub.f32 %v774, %v793
        %v813 = vsub.f32 %v775, %v794
        %v814 = vsub.f32 %v776, %v795
        %v815 = vsub.f32 %v777, %v796
        %v816 = vsub.f32 %v778, %v797
        %v817 = vsub.f32 %v779, %v798
        %v818 = vsub.f32 %v780, %v799
        %v819 = vsub.f32 %v781, %v800
        %v820 = vsub.f32 %v782, %v801
        %v821 = vsub.f32 %v783, %v802
        %v822 = vsub.f32 %v784, %v803
        %v823 = vsub.f32 %v785, %v804
        %v824 = vsub.f32 %v786, %v805
        %v825 = vsub.f32 %v787, %v806
        %v826 = vsub.f32 %v788, %v807
        %v827 = vsub.f32 %v789, %v808
        %v828 = vmax.f32 %v809, 0.0
        %v829 = vmax.f32 %v810, 0.0
        %v830 = vmax.f32 %v811, 0.0
        %v831 = vmax.f32 %v812, 0.0
        %v832 = vmax.f32 %v813, 0.0
        %v833 = vmax.f32 %v814, 0.0
        %v834 = vmax.f32 %v815, 0.0
        %v835 = vmax.f32 %v816, 0.0
        %v836 = vmax.f32 %v817, 0.0
        %v837 = vmax.f32 %v818, 0.0
        %v838 = vmax.f32 %v819, 0.0
        %v839 = vmax.f32 %v820, 0.0
        %v840 = vmax.f32 %v821, 0.0
        %v841 = vmax.f32 %v822, 0.0
        %v842 = vmax.f32 %v823, 0.0
        %v843 = vmax.f32 %v824, 0.0
        %v844 = vmax.f32 %v825, 0.0
        %v845 = vmax.f32 %v826, 0.0
        %v846 = vmax.f32 %v827, 0.0
        %v847 = vadd.f32 %v828, 1e-05
        %v848 = vadd.f32 %v829, 1e-05
        %v849 = vadd.f32 %v830, 1e-05
        %v850 = vadd.f32 %v831, 1e-05
        %v851 = vadd.f32 %v832, 1e-05
        %v852 = vadd.f32 %v833, 1e-05
        %v853 = vadd.f32 %v834, 1e-05
        %v854 = vadd.f32 %v835, 1e-05
        %v855 = vadd.f32 %v836, 1e-05
        %v856 = vadd.f32 %v837, 1e-05
        %v857 = vadd.f32 %v838, 1e-05
        %v858 = vadd.f32 %v839, 1e-05
        %v859 = vadd.f32 %v840, 1e-05
        %v860 = vadd.f32 %v841, 1e-05
        %v861 = vadd.f32 %v842, 1e-05
        %v862 = vadd.f32 %v843, 1e-05
        %v863 = vadd.f32 %v844, 1e-05
        %v864 = vadd.f32 %v845, 1e-05
        %v865 = vadd.f32 %v846, 1e-05
        %v866 = vrsqrt.pop %v847
        %v867 = vmul.f32 %v866, %v847
        %v868 = vmul.f32 %v867, %v866
        %v869 = vmul.f32 0.5, %v868
        %v870 = vsub.f32 1.5, %v869
        %v871 = vmul.f32 %v866, %v870
        %vm872 = vweird.f32 %v847
        %vm873 = vweird.f32 %v866
        %vm874 = vmor %vm872, %vm873
        %v875 = vsel %vm874, %v866, %v871
        %v876 = vrsqrt.pop %v848
        %v877 = vmul.f32 %v876, %v848
        %v878 = vmul.f32 %v877, %v876
        %v879 = vmul.f32 0.5, %v878
        %v880 = vsub.f32 1.5, %v879
        %v881 = vmul.f32 %v876, %v880
        %vm882 = vweird.f32 %v848
        %vm883 = vweird.f32 %v876
        %vm884 = vmor %vm882, %vm883
        %v885 = vsel %vm884, %v876, %v881
        %v886 = vrsqrt.pop %v849
        %v887 = vmul.f32 %v886, %v849
        %v888 = vmul.f32 %v887, %v886
        %v889 = vmul.f32 0.5, %v888
        %v890 = vsub.f32 1.5, %v889
        %v891 = vmul.f32 %v886, %v890
        %vm892 = vweird.f32 %v849
        %vm893 = vweird.f32 %v886
        %vm894 = vmor %vm892, %vm893
        %v895 = vsel %vm894, %v886, %v891
        %v896 = vrsqrt.pop %v850
        %v897 = vmul.f32 %v896, %v850
        %v898 = vmul.f32 %v897, %v896
        %v899 = vmul.f32 0.5, %v898
        %v900 = vsub.f32 1.5, %v899
        %v901 = vmul.f32 %v896, %v900
        %vm902 = vweird.f32 %v850
        %vm903 = vweird.f32 %v896
        %vm904 = vmor %vm902, %vm903
        %v905 = vsel %vm904, %v896, %v901
        %v906 = vrsqrt.pop %v851
        %v907 = vmul.f32 %v906, %v851
        %v908 = vmul.f32 %v907, %v906
        %v909 = vmul.f32 0.5, %v908
        %v910 = vsub.f32 1.5, %v909
        %v911 = vmul.f32 %v906, %v910
        %vm912 = vweird.f32 %v851
        %vm913 = vweird.f32 %v906
        %vm914 = vmor %vm912, %vm913
        %v915 = vsel %vm914, %v906, %v911
        %v916 = vrsqrt.pop %v852
        %v917 = vmul.f32 %v916, %v852
        %v918 = vmul.f32 %v917, %v916
        %v919 = vmul.f32 0.5, %v918
        %v920 = vsub.f32 1.5, %v919
        %v921 = vmul.f32 %v916, %v920
        %vm922 = vweird.f32 %v852
        %vm923 = vweird.f32 %v916
        %vm924 = vmor %vm922, %vm923
        %v925 = vsel %vm924, %v916, %v921
        %v926 = vrsqrt.pop %v853
        %v927 = vmul.f32 %v926, %v853
        %v928 = vmul.f32 %v927, %v926
        %v929 = vmul.f32 0.5, %v928
        %v930 = vsub.f32 1.5, %v929
        %v931 = vmul.f32 %v926, %v930
        %vm932 = vweird.f32 %v853
        %vm933 = vweird.f32 %v926
        %vm934 = vmor %vm932, %vm933
        %v935 = vsel %vm934, %v926, %v931
        %v936 = vrsqrt.pop %v854
        %v937 = vmul.f32 %v936, %v854
        %v938 = vmul.f32 %v937, %v936
        %v939 = vmul.f32 0.5, %v938
        %v940 = vsub.f32 1.5, %v939
        %v941 = vmul.f32 %v936, %v940
        %vm942 = vweird.f32 %v854
        %vm943 = vweird.f32 %v936
        %vm944 = vmor %vm942, %vm943
        %v945 = vsel %vm944, %v936, %v941
        %v946 = vrsqrt.pop %v855
        %v947 = vmul.f32 %v946, %v855
        %v948 = vmul.f32 %v947, %v946
        %v949 = vmul.f32 0.5, %v948
        %v950 = vsub.f32 1.5, %v949
        %v951 = vmul.f32 %v946, %v950
        %vm952 = vweird.f32 %v855
        %vm953 = vweird.f32 %v946
        %vm954 = vmor %vm952, %vm953
        %v955 = vsel %vm954, %v946, %v951
        %v956 = vrsqrt.pop %v856
        %v957 = vmul.f32 %v956, %v856
        %v958 = vmul.f32 %v957, %v956
        %v959 = vmul.f32 0.5, %v958
        %v960 = vsub.f32 1.5, %v959
        %v961 = vmul.f32 %v956, %v960
        %vm962 = vweird.f32 %v856
        %vm963 = vweird.f32 %v956
        %vm964 = vmor %vm962, %vm963
        %v965 = vsel %vm964, %v956, %v961
        %v966 = vrsqrt.pop %v857
        %v967 = vmul.f32 %v966, %v857
        %v968 = vmul.f32 %v967, %v966
        %v969 = vmul.f32 0.5, %v968
        %v970 = vsub.f32 1.5, %v969
        %v971 = vmul.f32 %v966, %v970
        %vm972 = vweird.f32 %v857
        %vm973 = vweird.f32 %v966
        %vm974 = vmor %vm972, %vm973
        %v975 = vsel %vm974, %v966, %v971
        %v976 = vrsqrt.pop %v858
        %v977 = vmul.f32 %v976, %v858
        %v978 = vmul.f32 %v977, %v976
        %v979 = vmul.f32 0.5, %v978
        %v980 = vsub.f32 1.5, %v979
        %v981 = vmul.f32 %v976, %v980
        %vm982 = vweird.f32 %v858
        %vm983 = vweird.f32 %v976
        %vm984 = vmor %vm982, %vm983
        %v985 = vsel %vm984, %v976, %v981
        %v986 = vrsqrt.pop %v859
        %v987 = vmul.f32 %v986, %v859
        %v988 = vmul.f32 %v987, %v986
        %v989 = vmul.f32 0.5, %v988
        %v990 = vsub.f32 1.5, %v989
        %v991 = vmul.f32 %v986, %v990
        %vm992 = vweird.f32 %v859
        %vm993 = vweird.f32 %v986
        %vm994 = vmor %vm992, %vm993
        %v995 = vsel %vm994, %v986, %v991
        %v996 = vrsqrt.pop %v860
        %v997 = vmul.f32 %v996, %v860
        %v998 = vmul.f32 %v997, %v996
        %v999 = vmul.f32 0.5, %v998
        %v1000 = vsub.f32 1.5, %v999
        %v1001 = vmul.f32 %v996, %v1000
        %vm1002 = vweird.f32 %v860
        %vm1003 = vweird.f32 %v996
        %vm1004 = vmor %vm1002, %vm1003
        %v1005 = vsel %vm1004, %v996, %v1001
        %v1006 = vrsqrt.pop %v861
        %v1007 = vmul.f32 %v1006, %v861
        %v1008 = vmul.f32 %v1007, %v1006
        %v1009 = vmul.f32 0.5, %v1008
        %v1010 = vsub.f32 1.5, %v1009
        %v1011 = vmul.f32 %v1006, %v1010
        %vm1012 = vweird.f32 %v861
        %vm1013 = vweird.f32 %v1006
        %vm1014 = vmor %vm1012, %vm1013
        %v1015 = vsel %vm1014, %v1006, %v1011
        %v1016 = vrsqrt.pop %v862
        %v1017 = vmul.f32 %v1016, %v862
        %v1018 = vmul.f32 %v1017, %v1016
        %v1019 = vmul.f32 0.5, %v1018
        %v1020 = vsub.f32 1.5, %v1019
        %v1021 = vmul.f32 %v1016, %v1020
        %vm1022 = vweird.f32 %v862
        %vm1023 = vweird.f32 %v1016
        %vm1024 = vmor %vm1022, %vm1023
        %v1025 = vsel %vm1024, %v1016, %v1021
        %v1026 = vrsqrt.pop %v863
        %v1027 = vmul.f32 %v1026, %v863
        %v1028 = vmul.f32 %v1027, %v1026
        %v1029 = vmul.f32 0.5, %v1028
        %v1030 = vsub.f32 1.5, %v1029
        %v1031 = vmul.f32 %v1026, %v1030
        %vm1032 = vweird.f32 %v863
        %vm1033 = vweird.f32 %v1026
        %vm1034 = vmor %vm1032, %vm1033
        %v1035 = vsel %vm1034, %v1026, %v1031
        %v1036 = vrsqrt.pop %v864
        %v1037 = vmul.f32 %v1036, %v864
        %v1038 = vmul.f32 %v1037, %v1036
        %v1039 = vmul.f32 0.5, %v1038
        %v1040 = vsub.f32 1.5, %v1039
        %v1041 = vmul.f32 %v1036, %v1040
        %vm1042 = vweird.f32 %v864
        %vm1043 = vweird.f32 %v1036
        %vm1044 = vmor %vm1042, %vm1043
        %v1045 = vsel %vm1044, %v1036, %v1041
        %v1046 = vrsqrt.pop %v865
        %v1047 = vmul.f32 %v1046, %v865
        %v1048 = vmul.f32 %v1047, %v1046
        %v1049 = vmul.f32 0.5, %v1048
        %v1050 = vsub.f32 1.5, %v1049
        %v1051 = vmul.f32 %v1046, %v1050
        %vm1052 = vweird.f32 %v865
        %vm1053 = vweird.f32 %v1046
        %vm1054 = vmor %vm1052, %vm1053
        %v1055 = vsel %vm1054, %v1046, %v1051
        %v1056 = vsub.f32 %v601, %v752
        %v1057 = vsub.f32 %v604, %v753
        %v1058 = vsub.f32 %v607, %v754
        %v1059 = vsub.f32 %v610, %v755
        %v1060 = vsub.f32 %v613, %v756
        %v1061 = vsub.f32 %v616, %v757
        %v1062 = vsub.f32 %v619, %v758
        %v1063 = vsub.f32 %v622, %v759
        %v1064 = vsub.f32 %v625, %v760
        %v1065 = vsub.f32 %v628, %v761
        %v1066 = vsub.f32 %v631, %v762
        %v1067 = vsub.f32 %v634, %v763
        %v1068 = vsub.f32 %v637, %v764
        %v1069 = vsub.f32 %v640, %v765
        %v1070 = vsub.f32 %v643, %v766
        %v1071 = vsub.f32 %v646, %v767
        %v1072 = vsub.f32 %v649, %v768
        %v1073 = vsub.f32 %v652, %v769
        %v1074 = vsub.f32 %v655, %v770
        %v1075 = vmul.f32 %v1056, %v875
        %v1076 = vmul.f32 %v1057, %v885
        %v1077 = vmul.f32 %v1058, %v895
        %v1078 = vmul.f32 %v1059, %v905
        %v1079 = vmul.f32 %v1060, %v915
        %v1080 = vmul.f32 %v1061, %v925
        %v1081 = vmul.f32 %v1062, %v935
        %v1082 = vmul.f32 %v1063, %v945
        %v1083 = vmul.f32 %v1064, %v955
        %v1084 = vmul.f32 %v1065, %v965
        %v1085 = vmul.f32 %v1066, %v975
        %v1086 = vmul.f32 %v1067, %v985
        %v1087 = vmul.f32 %v1068, %v995
        %v1088 = vmul.f32 %v1069, %v1005
        %v1089 = vmul.f32 %v1070, %v1015
        %v1090 = vmul.f32 %v1071, %v1025
        %v1091 = vmul.f32 %v1072, %v1035
        %v1092 = vmul.f32 %v1073, %v1045
        %v1093 = vmul.f32 %v1074, %v1055
        %v1094 = vld [vmem:[%s3] sm:$0x1]
        %v1096 = vperm.slane %v1094, 0
        %v1098 = vmul.f32 %v1075, %v1096
        %v1099 = vmul.f32 %v1076, %v1096
        %v1100 = vmul.f32 %v1077, %v1096
        %v1101 = vmul.f32 %v1078, %v1096
        %v1102 = vmul.f32 %v1079, %v1096
        %v1103 = vmul.f32 %v1080, %v1096
        %v1104 = vmul.f32 %v1081, %v1096
        %v1105 = vmul.f32 %v1082, %v1096
        %v1106 = vmul.f32 %v1083, %v1096
        %v1107 = vmul.f32 %v1084, %v1096
        %v1108 = vmul.f32 %v1085, %v1096
        %v1109 = vmul.f32 %v1086, %v1096
        %v1110 = vmul.f32 %v1087, %v1096
        %v1111 = vmul.f32 %v1088, %v1096
        %v1112 = vmul.f32 %v1089, %v1096
        %v1113 = vmul.f32 %v1090, %v1096
        %v1114 = vmul.f32 %v1091, %v1096
        %v1115 = vmul.f32 %v1092, %v1096
        %v1116 = vmul.f32 %v1093, %v1096
        %v1117 = vld [vmem:[%s4] sm:$0x1]
        %v1119 = vperm.slane %v1117, 0
        %v1121 = vadd.f32 %v1098, %v1119
        %v1122 = vadd.f32 %v1099, %v1119
        %v1123 = vadd.f32 %v1100, %v1119
        %v1124 = vadd.f32 %v1101, %v1119
        %v1125 = vadd.f32 %v1102, %v1119
        %v1126 = vadd.f32 %v1103, %v1119
        %v1127 = vadd.f32 %v1104, %v1119
        %v1128 = vadd.f32 %v1105, %v1119
        %v1129 = vadd.f32 %v1106, %v1119
        %v1130 = vadd.f32 %v1107, %v1119
        %v1131 = vadd.f32 %v1108, %v1119
        %v1132 = vadd.f32 %v1109, %v1119
        %v1133 = vadd.f32 %v1110, %v1119
        %v1134 = vadd.f32 %v1111, %v1119
        %v1135 = vadd.f32 %v1112, %v1119
        %v1136 = vadd.f32 %v1113, %v1119
        %v1137 = vadd.f32 %v1114, %v1119
        %v1138 = vadd.f32 %v1115, %v1119
        %v1139 = vadd.f32 %v1116, %v1119
        %v1140 = vmax.f32 %v1121, 0.0
        %v1141 = vmax.f32 %v1122, 0.0
        %v1142 = vmax.f32 %v1123, 0.0
        %v1143 = vmax.f32 %v1124, 0.0
        %v1144 = vmax.f32 %v1125, 0.0
        %v1145 = vmax.f32 %v1126, 0.0
        %v1146 = vmax.f32 %v1127, 0.0
        %v1147 = vmax.f32 %v1128, 0.0
        %v1148 = vmax.f32 %v1129, 0.0
        %v1149 = vmax.f32 %v1130, 0.0
        %v1150 = vmax.f32 %v1131, 0.0
        %v1151 = vmax.f32 %v1132, 0.0
        %v1152 = vmax.f32 %v1133, 0.0
        %v1153 = vmax.f32 %v1134, 0.0
        %v1154 = vmax.f32 %v1135, 0.0
        %v1155 = vmax.f32 %v1136, 0.0
        %v1156 = vmax.f32 %v1137, 0.0
        %v1157 = vmax.f32 %v1138, 0.0
        %v1158 = vmax.f32 %v1139, 0.0
        %v1159 = vld [vmem:[%s5] sm:$0xff]
        %v1160 = vld [vmem:[%s5 + $0x8] sm:$0xff]
        %v1161 = vld [vmem:[%s5 + $0x10] sm:$0xff]
        %v1162 = vld [vmem:[%s5 + $0x18] sm:$0xff]
        %v1163 = vld [vmem:[%s5 + $0x20] sm:$0xff]
        %v1164 = vld [vmem:[%s5 + $0x28] sm:$0xff]
        %v1165 = vld [vmem:[%s5 + $0x30] sm:$0xff]
        %v1166 = vld [vmem:[%s5 + $0x38] sm:$0xff]
        %v1167 = vld [vmem:[%s5 + $0x40] sm:$0xff]
        %v1168 = vld [vmem:[%s5 + $0x48] sm:$0xff]
        %v1169 = vld [vmem:[%s5 + $0x50] sm:$0xff]
        %v1170 = vld [vmem:[%s5 + $0x58] sm:$0xff]
        %v1171 = vld [vmem:[%s5 + $0x60] sm:$0xff]
        %v1172 = vld [vmem:[%s5 + $0x68] sm:$0xff]
        %v1173 = vld [vmem:[%s5 + $0x70] sm:$0xff]
        %v1174 = vld [vmem:[%s5 + $0x78] sm:$0xff]
        %v1175 = vld [vmem:[%s6] sm:$0x1]
        %v1177 = vperm.slane %v1175, 0
        %1179 = vmatpush.msra.mxu0 %v1174
        %1180 = vmatpush.msra.mxu0 %v1173
        %1181 = vmatpush.msra.mxu0 %v1172
        %1182 = vmatpush.msra.mxu0 %v1171
        %1183 = vmatpush.msra.mxu0 %v1170
        %1184 = vmatpush.msra.mxu0 %v1169
        %1185 = vmatpush.msra.mxu0 %v1168
        %1186 = vmatpush.msra.mxu0 %v1167
        %1187 = vmatpush.msra.mxu0 %v1166
        %1188 = vmatpush.msra.mxu0 %v1165
        %1189 = vmatpush.msra.mxu0 %v1164
        %1190 = vmatpush.msra.mxu0 %v1163
        %1191 = vmatpush.msra.mxu0 %v1162
        %1192 = vmatpush.msra.mxu0 %v1161
        %1193 = vmatpush.msra.mxu0 %v1160
        %1194 = vmatpush.msra.mxu0 %v1159
        %1195 = vmatmul.f32.gmra.mxu0 %v1140
        %v1196 = vpop.f32.mrf.mxu0
        %v1197 = vadd.f32 %v1177, %v1196
        %1198 = vmatmul.f32.gmra.mxu0 %v1141
        %v1199 = vpop.f32.mrf.mxu0
        %v1200 = vadd.f32 %v1177, %v1199
        %1201 = vmatmul.f32.gmra.mxu0 %v1142
        %v1202 = vpop.f32.mrf.mxu0
        %v1203 = vadd.f32 %v1177, %v1202
        %1204 = vmatmul.f32.gmra.mxu0 %v1143
        %v1205 = vpop.f32.mrf.mxu0
        %v1206 = vadd.f32 %v1177, %v1205
        %1207 = vmatmul.f32.gmra.mxu0 %v1144
        %v1208 = vpop.f32.mrf.mxu0
        %v1209 = vadd.f32 %v1177, %v1208
        %1210 = vmatmul.f32.gmra.mxu0 %v1145
        %v1211 = vpop.f32.mrf.mxu0
        %v1212 = vadd.f32 %v1177, %v1211
        %1213 = vmatmul.f32.gmra.mxu0 %v1146
        %v1214 = vpop.f32.mrf.mxu0
        %v1215 = vadd.f32 %v1177, %v1214
        %1216 = vmatmul.f32.gmra.mxu0 %v1147
        %v1217 = vpop.f32.mrf.mxu0
        %v1218 = vadd.f32 %v1177, %v1217
        %1219 = vmatmul.f32.gmra.mxu0 %v1148
        %v1220 = vpop.f32.mrf.mxu0
        %v1221 = vadd.f32 %v1177, %v1220
        %1222 = vmatmul.f32.gmra.mxu0 %v1149
        %v1223 = vpop.f32.mrf.mxu0
        %v1224 = vadd.f32 %v1177, %v1223
        %1225 = vmatmul.f32.gmra.mxu0 %v1150
        %v1226 = vpop.f32.mrf.mxu0
        %v1227 = vadd.f32 %v1177, %v1226
        %1228 = vmatmul.f32.gmra.mxu0 %v1151
        %v1229 = vpop.f32.mrf.mxu0
        %v1230 = vadd.f32 %v1177, %v1229
        %1231 = vmatmul.f32.gmra.mxu0 %v1152
        %v1232 = vpop.f32.mrf.mxu0
        %v1233 = vadd.f32 %v1177, %v1232
        %1234 = vmatmul.f32.gmra.mxu0 %v1153
        %v1235 = vpop.f32.mrf.mxu0
        %v1236 = vadd.f32 %v1177, %v1235
        %1237 = vmatmul.f32.gmra.mxu0 %v1154
        %v1238 = vpop.f32.mrf.mxu0
        %v1239 = vadd.f32 %v1177, %v1238
        %1240 = vmatmul.f32.gmra.mxu0 %v1155
        %v1241 = vpop.f32.mrf.mxu0
        %v1242 = vadd.f32 %v1177, %v1241
        %1243 = vmatmul.f32.gmra.mxu0 %v1156
        %v1244 = vpop.f32.mrf.mxu0
        %v1245 = vadd.f32 %v1177, %v1244
        %1246 = vmatmul.f32.gmra.mxu0 %v1157
        %v1247 = vpop.f32.mrf.mxu0
        %v1248 = vadd.f32 %v1177, %v1247
        %1249 = vmatmul.f32.gmra.mxu0 %v1158
        %v1250 = vpop.f32.mrf.mxu0
        %v1251 = vadd.f32 %v1177, %v1250
        %1252 = vdwg.mxu0
        %1253 = vadd.xlane.f32.xlu0 %v1197
        %v1254 = vpop.xlane.xlu0 %1253
        %1255 = vadd.xlane.f32.xlu0 %v1200
        %v1256 = vpop.xlane.xlu0 %1255
        %1257 = vadd.xlane.f32.xlu0 %v1203
        %v1258 = vpop.xlane.xlu0 %1257
        %1259 = vadd.xlane.f32.xlu0 %v1206
        %v1260 = vpop.xlane.xlu0 %1259
        %1261 = vadd.xlane.f32.xlu0 %v1209
        %v1262 = vpop.xlane.xlu0 %1261
        %1263 = vadd.xlane.f32.xlu0 %v1212
        %v1264 = vpop.xlane.xlu0 %1263
        %1265 = vadd.xlane.f32.xlu0 %v1215
        %v1266 = vpop.xlane.xlu0 %1265
        %1267 = vadd.xlane.f32.xlu0 %v1218
        %v1268 = vpop.xlane.xlu0 %1267
        %1269 = vadd.xlane.f32.xlu0 %v1221
        %v1270 = vpop.xlane.xlu0 %1269
        %1271 = vadd.xlane.f32.xlu0 %v1224
        %v1272 = vpop.xlane.xlu0 %1271
        %1273 = vadd.xlane.f32.xlu0 %v1227
        %v1274 = vpop.xlane.xlu0 %1273
        %1275 = vadd.xlane.f32.xlu0 %v1230
        %v1276 = vpop.xlane.xlu0 %1275
        %1277 = vadd.xlane.f32.xlu0 %v1233
        %v1278 = vpop.xlane.xlu0 %1277
        %1279 = vadd.xlane.f32.xlu0 %v1236
        %v1280 = vpop.xlane.xlu0 %1279
        %1281 = vadd.xlane.f32.xlu0 %v1239
        %v1282 = vpop.xlane.xlu0 %1281
        %1283 = vadd.xlane.f32.xlu0 %v1242
        %v1284 = vpop.xlane.xlu0 %1283
        %1285 = vadd.xlane.f32.xlu0 %v1245
        %v1286 = vpop.xlane.xlu0 %1285
        %1287 = vadd.xlane.f32.xlu0 %v1248
        %v1288 = vpop.xlane.xlu0 %1287
        %1289 = vadd.xlane.f32.xlu0 %v1251
        %v1290 = vpop.xlane.xlu0 %1289
        %v1291 = vmul.f32 %v1197, %v1197
        %v1292 = vmul.f32 %v1200, %v1200
        %v1293 = vmul.f32 %v1203, %v1203
        %v1294 = vmul.f32 %v1206, %v1206
        %v1295 = vmul.f32 %v1209, %v1209
        %v1296 = vmul.f32 %v1212, %v1212
        %v1297 = vmul.f32 %v1215, %v1215
        %v1298 = vmul.f32 %v1218, %v1218
        %v1299 = vmul.f32 %v1221, %v1221
        %v1300 = vmul.f32 %v1224, %v1224
        %v1301 = vmul.f32 %v1227, %v1227
        %v1302 = vmul.f32 %v1230, %v1230
        %v1303 = vmul.f32 %v1233, %v1233
        %v1304 = vmul.f32 %v1236, %v1236
        %v1305 = vmul.f32 %v1239, %v1239
        %v1306 = vmul.f32 %v1242, %v1242
        %v1307 = vmul.f32 %v1245, %v1245
        %v1308 = vmul.f32 %v1248, %v1248
        %v1309 = vmul.f32 %v1251, %v1251
        %1310 = vadd.xlane.f32.xlu0 %v1291
        %v1311 = vpop.xlane.xlu0 %1310
        %1312 = vadd.xlane.f32.xlu0 %v1292
        %v1313 = vpop.xlane.xlu0 %1312
        %1314 = vadd.xlane.f32.xlu0 %v1293
        %v1315 = vpop.xlane.xlu0 %1314
        %1316 = vadd.xlane.f32.xlu0 %v1294
        %v1317 = vpop.xlane.xlu0 %1316
        %1318 = vadd.xlane.f32.xlu0 %v1295
        %v1319 = vpop.xlane.xlu0 %1318
        %1320 = vadd.xlane.f32.xlu0 %v1296
        %v1321 = vpop.xlane.xlu0 %1320
        %1322 = vadd.xlane.f32.xlu0 %v1297
        %v1323 = vpop.xlane.xlu0 %1322
        %1324 = vadd.xlane.f32.xlu0 %v1298
        %v1325 = vpop.xlane.xlu0 %1324
        %1326 = vadd.xlane.f32.xlu0 %v1299
        %v1327 = vpop.xlane.xlu0 %1326
        %1328 = vadd.xlane.f32.xlu0 %v1300
        %v1329 = vpop.xlane.xlu0 %1328
        %1330 = vadd.xlane.f32.xlu0 %v1301
        %v1331 = vpop.xlane.xlu0 %1330
        %1332 = vadd.xlane.f32.xlu0 %v1302
        %v1333 = vpop.xlane.xlu0 %1332
        %1334 = vadd.xlane.f32.xlu0 %v1303
        %v1335 = vpop.xlane.xlu0 %1334
        %1336 = vadd.xlane.f32.xlu0 %v1304
        %v1337 = vpop.xlane.xlu0 %1336
        %1338 = vadd.xlane.f32.xlu0 %v1305
        %v1339 = vpop.xlane.xlu0 %1338
        %1340 = vadd.xlane.f32.xlu0 %v1306
        %v1341 = vpop.xlane.xlu0 %1340
        %1342 = vadd.xlane.f32.xlu0 %v1307
        %v1343 = vpop.xlane.xlu0 %1342
        %1344 = vadd.xlane.f32.xlu0 %v1308
        %v1345 = vpop.xlane.xlu0 %1344
        %1346 = vadd.xlane.f32.xlu0 %v1309
        %v1347 = vpop.xlane.xlu0 %1346
        %v1348 = vmul.f32 %v1254, 0.010416667
        %v1349 = vmul.f32 %v1256, 0.010416667
        %v1350 = vmul.f32 %v1258, 0.010416667
        %v1351 = vmul.f32 %v1260, 0.010416667
        %v1352 = vmul.f32 %v1262, 0.010416667
        %v1353 = vmul.f32 %v1264, 0.010416667
        %v1354 = vmul.f32 %v1266, 0.010416667
        %v1355 = vmul.f32 %v1268, 0.010416667
        %v1356 = vmul.f32 %v1270, 0.010416667
        %v1357 = vmul.f32 %v1272, 0.010416667
        %v1358 = vmul.f32 %v1274, 0.010416667
        %v1359 = vmul.f32 %v1276, 0.010416667
        %v1360 = vmul.f32 %v1278, 0.010416667
        %v1361 = vmul.f32 %v1280, 0.010416667
        %v1362 = vmul.f32 %v1282, 0.010416667
        %v1363 = vmul.f32 %v1284, 0.010416667
        %v1364 = vmul.f32 %v1286, 0.010416667
        %v1365 = vmul.f32 %v1288, 0.010416667
        %v1366 = vmul.f32 %v1290, 0.010416667
        %v1367 = vmul.f32 %v1311, 0.010416667
        %v1368 = vmul.f32 %v1313, 0.010416667
        %v1369 = vmul.f32 %v1315, 0.010416667
        %v1370 = vmul.f32 %v1317, 0.010416667
        %v1371 = vmul.f32 %v1319, 0.010416667
        %v1372 = vmul.f32 %v1321, 0.010416667
        %v1373 = vmul.f32 %v1323, 0.010416667
        %v1374 = vmul.f32 %v1325, 0.010416667
        %v1375 = vmul.f32 %v1327, 0.010416667
        %v1376 = vmul.f32 %v1329, 0.010416667
        %v1377 = vmul.f32 %v1331, 0.010416667
        %v1378 = vmul.f32 %v1333, 0.010416667
        %v1379 = vmul.f32 %v1335, 0.010416667
        %v1380 = vmul.f32 %v1337, 0.010416667
        %v1381 = vmul.f32 %v1339, 0.010416667
        %v1382 = vmul.f32 %v1341, 0.010416667
        %v1383 = vmul.f32 %v1343, 0.010416667
        %v1384 = vmul.f32 %v1345, 0.010416667
        %v1385 = vmul.f32 %v1347, 0.010416667
        %v1386 = vmul.f32 %v1348, %v1348
        %v1387 = vmul.f32 %v1349, %v1349
        %v1388 = vmul.f32 %v1350, %v1350
        %v1389 = vmul.f32 %v1351, %v1351
        %v1390 = vmul.f32 %v1352, %v1352
        %v1391 = vmul.f32 %v1353, %v1353
        %v1392 = vmul.f32 %v1354, %v1354
        %v1393 = vmul.f32 %v1355, %v1355
        %v1394 = vmul.f32 %v1356, %v1356
        %v1395 = vmul.f32 %v1357, %v1357
        %v1396 = vmul.f32 %v1358, %v1358
        %v1397 = vmul.f32 %v1359, %v1359
        %v1398 = vmul.f32 %v1360, %v1360
        %v1399 = vmul.f32 %v1361, %v1361
        %v1400 = vmul.f32 %v1362, %v1362
        %v1401 = vmul.f32 %v1363, %v1363
        %v1402 = vmul.f32 %v1364, %v1364
        %v1403 = vmul.f32 %v1365, %v1365
        %v1404 = vmul.f32 %v1366, %v1366
        %v1405 = vsub.f32 %v1367, %v1386
        %v1406 = vsub.f32 %v1368, %v1387
        %v1407 = vsub.f32 %v1369, %v1388
        %v1408 = vsub.f32 %v1370, %v1389
        %v1409 = vsub.f32 %v1371, %v1390
        %v1410 = vsub.f32 %v1372, %v1391
        %v1411 = vsub.f32 %v1373, %v1392
        %v1412 = vsub.f32 %v1374, %v1393
        %v1413 = vsub.f32 %v1375, %v1394
        %v1414 = vsub.f32 %v1376, %v1395
        %v1415 = vsub.f32 %v1377, %v1396
        %v1416 = vsub.f32 %v1378, %v1397
        %v1417 = vsub.f32 %v1379, %v1398
        %v1418 = vsub.f32 %v1380, %v1399
        %v1419 = vsub.f32 %v1381, %v1400
        %v1420 = vsub.f32 %v1382, %v1401
        %v1421 = vsub.f32 %v1383, %v1402
        %v1422 = vsub.f32 %v1384, %v1403
        %v1423 = vsub.f32 %v1385, %v1404
        %v1424 = vmax.f32 %v1405, 0.0
        %v1425 = vmax.f32 %v1406, 0.0
        %v1426 = vmax.f32 %v1407, 0.0
        %v1427 = vmax.f32 %v1408, 0.0
        %v1428 = vmax.f32 %v1409, 0.0
        %v1429 = vmax.f32 %v1410, 0.0
        %v1430 = vmax.f32 %v1411, 0.0
        %v1431 = vmax.f32 %v1412, 0.0
        %v1432 = vmax.f32 %v1413, 0.0
        %v1433 = vmax.f32 %v1414, 0.0
        %v1434 = vmax.f32 %v1415, 0.0
        %v1435 = vmax.f32 %v1416, 0.0
        %v1436 = vmax.f32 %v1417, 0.0
        %v1437 = vmax.f32 %v1418, 0.0
        %v1438 = vmax.f32 %v1419, 0.0
        %v1439 = vmax.f32 %v1420, 0.0
        %v1440 = vmax.f32 %v1421, 0.0
        %v1441 = vmax.f32 %v1422, 0.0
        %v1442 = vmax.f32 %v1423, 0.0
        %v1443 = vadd.f32 %v1424, 1e-05
        %v1444 = vadd.f32 %v1425, 1e-05
        %v1445 = vadd.f32 %v1426, 1e-05
        %v1446 = vadd.f32 %v1427, 1e-05
        %v1447 = vadd.f32 %v1428, 1e-05
        %v1448 = vadd.f32 %v1429, 1e-05
        %v1449 = vadd.f32 %v1430, 1e-05
        %v1450 = vadd.f32 %v1431, 1e-05
        %v1451 = vadd.f32 %v1432, 1e-05
        %v1452 = vadd.f32 %v1433, 1e-05
        %v1453 = vadd.f32 %v1434, 1e-05
        %v1454 = vadd.f32 %v1435, 1e-05
        %v1455 = vadd.f32 %v1436, 1e-05
        %v1456 = vadd.f32 %v1437, 1e-05
        %v1457 = vadd.f32 %v1438, 1e-05
        %v1458 = vadd.f32 %v1439, 1e-05
        %v1459 = vadd.f32 %v1440, 1e-05
        %v1460 = vadd.f32 %v1441, 1e-05
        %v1461 = vadd.f32 %v1442, 1e-05
        %v1462 = vrsqrt.pop %v1443
        %v1463 = vmul.f32 %v1462, %v1443
        %v1464 = vmul.f32 %v1463, %v1462
        %v1465 = vmul.f32 0.5, %v1464
        %v1466 = vsub.f32 1.5, %v1465
        %v1467 = vmul.f32 %v1462, %v1466
        %vm1468 = vweird.f32 %v1443
        %vm1469 = vweird.f32 %v1462
        %vm1470 = vmor %vm1468, %vm1469
        %v1471 = vsel %vm1470, %v1462, %v1467
        %v1472 = vrsqrt.pop %v1444
        %v1473 = vmul.f32 %v1472, %v1444
        %v1474 = vmul.f32 %v1473, %v1472
        %v1475 = vmul.f32 0.5, %v1474
        %v1476 = vsub.f32 1.5, %v1475
        %v1477 = vmul.f32 %v1472, %v1476
        %vm1478 = vweird.f32 %v1444
        %vm1479 = vweird.f32 %v1472
        %vm1480 = vmor %vm1478, %vm1479
        %v1481 = vsel %vm1480, %v1472, %v1477
        %v1482 = vrsqrt.pop %v1445
        %v1483 = vmul.f32 %v1482, %v1445
        %v1484 = vmul.f32 %v1483, %v1482
        %v1485 = vmul.f32 0.5, %v1484
        %v1486 = vsub.f32 1.5, %v1485
        %v1487 = vmul.f32 %v1482, %v1486
        %vm1488 = vweird.f32 %v1445
        %vm1489 = vweird.f32 %v1482
        %vm1490 = vmor %vm1488, %vm1489
        %v1491 = vsel %vm1490, %v1482, %v1487
        %v1492 = vrsqrt.pop %v1446
        %v1493 = vmul.f32 %v1492, %v1446
        %v1494 = vmul.f32 %v1493, %v1492
        %v1495 = vmul.f32 0.5, %v1494
        %v1496 = vsub.f32 1.5, %v1495
        %v1497 = vmul.f32 %v1492, %v1496
        %vm1498 = vweird.f32 %v1446
        %vm1499 = vweird.f32 %v1492
        %vm1500 = vmor %vm1498, %vm1499
        %v1501 = vsel %vm1500, %v1492, %v1497
        %v1502 = vrsqrt.pop %v1447
        %v1503 = vmul.f32 %v1502, %v1447
        %v1504 = vmul.f32 %v1503, %v1502
        %v1505 = vmul.f32 0.5, %v1504
        %v1506 = vsub.f32 1.5, %v1505
        %v1507 = vmul.f32 %v1502, %v1506
        %vm1508 = vweird.f32 %v1447
        %vm1509 = vweird.f32 %v1502
        %vm1510 = vmor %vm1508, %vm1509
        %v1511 = vsel %vm1510, %v1502, %v1507
        %v1512 = vrsqrt.pop %v1448
        %v1513 = vmul.f32 %v1512, %v1448
        %v1514 = vmul.f32 %v1513, %v1512
        %v1515 = vmul.f32 0.5, %v1514
        %v1516 = vsub.f32 1.5, %v1515
        %v1517 = vmul.f32 %v1512, %v1516
        %vm1518 = vweird.f32 %v1448
        %vm1519 = vweird.f32 %v1512
        %vm1520 = vmor %vm1518, %vm1519
        %v1521 = vsel %vm1520, %v1512, %v1517
        %v1522 = vrsqrt.pop %v1449
        %v1523 = vmul.f32 %v1522, %v1449
        %v1524 = vmul.f32 %v1523, %v1522
        %v1525 = vmul.f32 0.5, %v1524
        %v1526 = vsub.f32 1.5, %v1525
        %v1527 = vmul.f32 %v1522, %v1526
        %vm1528 = vweird.f32 %v1449
        %vm1529 = vweird.f32 %v1522
        %vm1530 = vmor %vm1528, %vm1529
        %v1531 = vsel %vm1530, %v1522, %v1527
        %v1532 = vrsqrt.pop %v1450
        %v1533 = vmul.f32 %v1532, %v1450
        %v1534 = vmul.f32 %v1533, %v1532
        %v1535 = vmul.f32 0.5, %v1534
        %v1536 = vsub.f32 1.5, %v1535
        %v1537 = vmul.f32 %v1532, %v1536
        %vm1538 = vweird.f32 %v1450
        %vm1539 = vweird.f32 %v1532
        %vm1540 = vmor %vm1538, %vm1539
        %v1541 = vsel %vm1540, %v1532, %v1537
        %v1542 = vrsqrt.pop %v1451
        %v1543 = vmul.f32 %v1542, %v1451
        %v1544 = vmul.f32 %v1543, %v1542
        %v1545 = vmul.f32 0.5, %v1544
        %v1546 = vsub.f32 1.5, %v1545
        %v1547 = vmul.f32 %v1542, %v1546
        %vm1548 = vweird.f32 %v1451
        %vm1549 = vweird.f32 %v1542
        %vm1550 = vmor %vm1548, %vm1549
        %v1551 = vsel %vm1550, %v1542, %v1547
        %v1552 = vrsqrt.pop %v1452
        %v1553 = vmul.f32 %v1552, %v1452
        %v1554 = vmul.f32 %v1553, %v1552
        %v1555 = vmul.f32 0.5, %v1554
        %v1556 = vsub.f32 1.5, %v1555
        %v1557 = vmul.f32 %v1552, %v1556
        %vm1558 = vweird.f32 %v1452
        %vm1559 = vweird.f32 %v1552
        %vm1560 = vmor %vm1558, %vm1559
        %v1561 = vsel %vm1560, %v1552, %v1557
        %v1562 = vrsqrt.pop %v1453
        %v1563 = vmul.f32 %v1562, %v1453
        %v1564 = vmul.f32 %v1563, %v1562
        %v1565 = vmul.f32 0.5, %v1564
        %v1566 = vsub.f32 1.5, %v1565
        %v1567 = vmul.f32 %v1562, %v1566
        %vm1568 = vweird.f32 %v1453
        %vm1569 = vweird.f32 %v1562
        %vm1570 = vmor %vm1568, %vm1569
        %v1571 = vsel %vm1570, %v1562, %v1567
        %v1572 = vrsqrt.pop %v1454
        %v1573 = vmul.f32 %v1572, %v1454
        %v1574 = vmul.f32 %v1573, %v1572
        %v1575 = vmul.f32 0.5, %v1574
        %v1576 = vsub.f32 1.5, %v1575
        %v1577 = vmul.f32 %v1572, %v1576
        %vm1578 = vweird.f32 %v1454
        %vm1579 = vweird.f32 %v1572
        %vm1580 = vmor %vm1578, %vm1579
        %v1581 = vsel %vm1580, %v1572, %v1577
        %v1582 = vrsqrt.pop %v1455
        %v1583 = vmul.f32 %v1582, %v1455
        %v1584 = vmul.f32 %v1583, %v1582
        %v1585 = vmul.f32 0.5, %v1584
        %v1586 = vsub.f32 1.5, %v1585
        %v1587 = vmul.f32 %v1582, %v1586
        %vm1588 = vweird.f32 %v1455
        %vm1589 = vweird.f32 %v1582
        %vm1590 = vmor %vm1588, %vm1589
        %v1591 = vsel %vm1590, %v1582, %v1587
        %v1592 = vrsqrt.pop %v1456
        %v1593 = vmul.f32 %v1592, %v1456
        %v1594 = vmul.f32 %v1593, %v1592
        %v1595 = vmul.f32 0.5, %v1594
        %v1596 = vsub.f32 1.5, %v1595
        %v1597 = vmul.f32 %v1592, %v1596
        %vm1598 = vweird.f32 %v1456
        %vm1599 = vweird.f32 %v1592
        %vm1600 = vmor %vm1598, %vm1599
        %v1601 = vsel %vm1600, %v1592, %v1597
        %v1602 = vrsqrt.pop %v1457
        %v1603 = vmul.f32 %v1602, %v1457
        %v1604 = vmul.f32 %v1603, %v1602
        %v1605 = vmul.f32 0.5, %v1604
        %v1606 = vsub.f32 1.5, %v1605
        %v1607 = vmul.f32 %v1602, %v1606
        %vm1608 = vweird.f32 %v1457
        %vm1609 = vweird.f32 %v1602
        %vm1610 = vmor %vm1608, %vm1609
        %v1611 = vsel %vm1610, %v1602, %v1607
        %v1612 = vrsqrt.pop %v1458
        %v1613 = vmul.f32 %v1612, %v1458
        %v1614 = vmul.f32 %v1613, %v1612
        %v1615 = vmul.f32 0.5, %v1614
        %v1616 = vsub.f32 1.5, %v1615
        %v1617 = vmul.f32 %v1612, %v1616
        %vm1618 = vweird.f32 %v1458
        %vm1619 = vweird.f32 %v1612
        %vm1620 = vmor %vm1618, %vm1619
        %v1621 = vsel %vm1620, %v1612, %v1617
        %v1622 = vrsqrt.pop %v1459
        %v1623 = vmul.f32 %v1622, %v1459
        %v1624 = vmul.f32 %v1623, %v1622
        %v1625 = vmul.f32 0.5, %v1624
        %v1626 = vsub.f32 1.5, %v1625
        %v1627 = vmul.f32 %v1622, %v1626
        %vm1628 = vweird.f32 %v1459
        %vm1629 = vweird.f32 %v1622
        %vm1630 = vmor %vm1628, %vm1629
        %v1631 = vsel %vm1630, %v1622, %v1627
        %v1632 = vrsqrt.pop %v1460
        %v1633 = vmul.f32 %v1632, %v1460
        %v1634 = vmul.f32 %v1633, %v1632
        %v1635 = vmul.f32 0.5, %v1634
        %v1636 = vsub.f32 1.5, %v1635
        %v1637 = vmul.f32 %v1632, %v1636
        %vm1638 = vweird.f32 %v1460
        %vm1639 = vweird.f32 %v1632
        %vm1640 = vmor %vm1638, %vm1639
        %v1641 = vsel %vm1640, %v1632, %v1637
        %v1642 = vrsqrt.pop %v1461
        %v1643 = vmul.f32 %v1642, %v1461
        %v1644 = vmul.f32 %v1643, %v1642
        %v1645 = vmul.f32 0.5, %v1644
        %v1646 = vsub.f32 1.5, %v1645
        %v1647 = vmul.f32 %v1642, %v1646
        %vm1648 = vweird.f32 %v1461
        %vm1649 = vweird.f32 %v1642
        %vm1650 = vmor %vm1648, %vm1649
        %v1651 = vsel %vm1650, %v1642, %v1647
        %v1652 = vsub.f32 %v1197, %v1348
        %v1653 = vsub.f32 %v1200, %v1349
        %v1654 = vsub.f32 %v1203, %v1350
        %v1655 = vsub.f32 %v1206, %v1351
        %v1656 = vsub.f32 %v1209, %v1352
        %v1657 = vsub.f32 %v1212, %v1353
        %v1658 = vsub.f32 %v1215, %v1354
        %v1659 = vsub.f32 %v1218, %v1355
        %v1660 = vsub.f32 %v1221, %v1356
        %v1661 = vsub.f32 %v1224, %v1357
        %v1662 = vsub.f32 %v1227, %v1358
        %v1663 = vsub.f32 %v1230, %v1359
        %v1664 = vsub.f32 %v1233, %v1360
        %v1665 = vsub.f32 %v1236, %v1361
        %v1666 = vsub.f32 %v1239, %v1362
        %v1667 = vsub.f32 %v1242, %v1363
        %v1668 = vsub.f32 %v1245, %v1364
        %v1669 = vsub.f32 %v1248, %v1365
        %v1670 = vsub.f32 %v1251, %v1366
        %v1671 = vmul.f32 %v1652, %v1471
        %v1672 = vmul.f32 %v1653, %v1481
        %v1673 = vmul.f32 %v1654, %v1491
        %v1674 = vmul.f32 %v1655, %v1501
        %v1675 = vmul.f32 %v1656, %v1511
        %v1676 = vmul.f32 %v1657, %v1521
        %v1677 = vmul.f32 %v1658, %v1531
        %v1678 = vmul.f32 %v1659, %v1541
        %v1679 = vmul.f32 %v1660, %v1551
        %v1680 = vmul.f32 %v1661, %v1561
        %v1681 = vmul.f32 %v1662, %v1571
        %v1682 = vmul.f32 %v1663, %v1581
        %v1683 = vmul.f32 %v1664, %v1591
        %v1684 = vmul.f32 %v1665, %v1601
        %v1685 = vmul.f32 %v1666, %v1611
        %v1686 = vmul.f32 %v1667, %v1621
        %v1687 = vmul.f32 %v1668, %v1631
        %v1688 = vmul.f32 %v1669, %v1641
        %v1689 = vmul.f32 %v1670, %v1651
        %v1690 = vld [vmem:[%s7] sm:$0x1]
        %v1692 = vperm.slane %v1690, 0
        %v1694 = vmul.f32 %v1671, %v1692
        %v1695 = vmul.f32 %v1672, %v1692
        %v1696 = vmul.f32 %v1673, %v1692
        %v1697 = vmul.f32 %v1674, %v1692
        %v1698 = vmul.f32 %v1675, %v1692
        %v1699 = vmul.f32 %v1676, %v1692
        %v1700 = vmul.f32 %v1677, %v1692
        %v1701 = vmul.f32 %v1678, %v1692
        %v1702 = vmul.f32 %v1679, %v1692
        %v1703 = vmul.f32 %v1680, %v1692
        %v1704 = vmul.f32 %v1681, %v1692
        %v1705 = vmul.f32 %v1682, %v1692
        %v1706 = vmul.f32 %v1683, %v1692
        %v1707 = vmul.f32 %v1684, %v1692
        %v1708 = vmul.f32 %v1685, %v1692
        %v1709 = vmul.f32 %v1686, %v1692
        %v1710 = vmul.f32 %v1687, %v1692
        %v1711 = vmul.f32 %v1688, %v1692
        %v1712 = vmul.f32 %v1689, %v1692
        %v1713 = vld [vmem:[%s8] sm:$0x1]
        %v1715 = vperm.slane %v1713, 0
        %v1717 = vadd.f32 %v1694, %v1715
        %v1718 = vadd.f32 %v1695, %v1715
        %v1719 = vadd.f32 %v1696, %v1715
        %v1720 = vadd.f32 %v1697, %v1715
        %v1721 = vadd.f32 %v1698, %v1715
        %v1722 = vadd.f32 %v1699, %v1715
        %v1723 = vadd.f32 %v1700, %v1715
        %v1724 = vadd.f32 %v1701, %v1715
        %v1725 = vadd.f32 %v1702, %v1715
        %v1726 = vadd.f32 %v1703, %v1715
        %v1727 = vadd.f32 %v1704, %v1715
        %v1728 = vadd.f32 %v1705, %v1715
        %v1729 = vadd.f32 %v1706, %v1715
        %v1730 = vadd.f32 %v1707, %v1715
        %v1731 = vadd.f32 %v1708, %v1715
        %v1732 = vadd.f32 %v1709, %v1715
        %v1733 = vadd.f32 %v1710, %v1715
        %v1734 = vadd.f32 %v1711, %v1715
        %v1735 = vadd.f32 %v1712, %v1715
        %v1736 = vmax.f32 %v1717, 0.0
        %v1737 = vmax.f32 %v1718, 0.0
        %v1738 = vmax.f32 %v1719, 0.0
        %v1739 = vmax.f32 %v1720, 0.0
        %v1740 = vmax.f32 %v1721, 0.0
        %v1741 = vmax.f32 %v1722, 0.0
        %v1742 = vmax.f32 %v1723, 0.0
        %v1743 = vmax.f32 %v1724, 0.0
        %v1744 = vmax.f32 %v1725, 0.0
        %v1745 = vmax.f32 %v1726, 0.0
        %v1746 = vmax.f32 %v1727, 0.0
        %v1747 = vmax.f32 %v1728, 0.0
        %v1748 = vmax.f32 %v1729, 0.0
        %v1749 = vmax.f32 %v1730, 0.0
        %v1750 = vmax.f32 %v1731, 0.0
        %v1751 = vmax.f32 %v1732, 0.0
        %v1752 = vmax.f32 %v1733, 0.0
        %v1753 = vmax.f32 %v1734, 0.0
        %v1754 = vmax.f32 %v1735, 0.0
        %v1755 = vld [vmem:[%s9] sm:$0xff]
        %v1756 = vld [vmem:[%s9 + $0x8] sm:$0xff]
        %v1757 = vld [vmem:[%s9 + $0x10] sm:$0xff]
        %v1758 = vld [vmem:[%s9 + $0x18] sm:$0xff]
        %v1759 = vld [vmem:[%s9 + $0x20] sm:$0xff]
        %v1760 = vld [vmem:[%s9 + $0x28] sm:$0xff]
        %v1761 = vld [vmem:[%s9 + $0x30] sm:$0xff]
        %v1762 = vld [vmem:[%s9 + $0x38] sm:$0xff]
        %v1763 = vld [vmem:[%s9 + $0x40] sm:$0xff]
        %v1764 = vld [vmem:[%s9 + $0x48] sm:$0xff]
        %v1765 = vld [vmem:[%s9 + $0x50] sm:$0xff]
        %v1766 = vld [vmem:[%s9 + $0x58] sm:$0xff]
        %v1767 = vld [vmem:[%s9 + $0x60] sm:$0xff]
        %v1768 = vld [vmem:[%s9 + $0x68] sm:$0xff]
        %v1769 = vld [vmem:[%s9 + $0x70] sm:$0xff]
        %v1770 = vld [vmem:[%s9 + $0x78] sm:$0xff]
        %v1771 = vld [vmem:[%s10] sm:$0x1]
        %v1773 = vperm.slane %v1771, 0
        %1775 = vmatpush.msra.mxu0 %v1770
        %1776 = vmatpush.msra.mxu0 %v1769
        %1777 = vmatpush.msra.mxu0 %v1768
        %1778 = vmatpush.msra.mxu0 %v1767
        %1779 = vmatpush.msra.mxu0 %v1766
        %1780 = vmatpush.msra.mxu0 %v1765
        %1781 = vmatpush.msra.mxu0 %v1764
        %1782 = vmatpush.msra.mxu0 %v1763
        %1783 = vmatpush.msra.mxu0 %v1762
        %1784 = vmatpush.msra.mxu0 %v1761
        %1785 = vmatpush.msra.mxu0 %v1760
        %1786 = vmatpush.msra.mxu0 %v1759
        %1787 = vmatpush.msra.mxu0 %v1758
        %1788 = vmatpush.msra.mxu0 %v1757
        %1789 = vmatpush.msra.mxu0 %v1756
        %1790 = vmatpush.msra.mxu0 %v1755
        %1791 = vmatmul.f32.gmra.mxu0 %v1736
        %v1792 = vpop.f32.mrf.mxu0
        %v1793 = vadd.f32 %v1773, %v1792
        %1794 = vmatmul.f32.gmra.mxu0 %v1737
        %v1795 = vpop.f32.mrf.mxu0
        %v1796 = vadd.f32 %v1773, %v1795
        %1797 = vmatmul.f32.gmra.mxu0 %v1738
        %v1798 = vpop.f32.mrf.mxu0
        %v1799 = vadd.f32 %v1773, %v1798
        %1800 = vmatmul.f32.gmra.mxu0 %v1739
        %v1801 = vpop.f32.mrf.mxu0
        %v1802 = vadd.f32 %v1773, %v1801
        %1803 = vmatmul.f32.gmra.mxu0 %v1740
        %v1804 = vpop.f32.mrf.mxu0
        %v1805 = vadd.f32 %v1773, %v1804
        %1806 = vmatmul.f32.gmra.mxu0 %v1741
        %v1807 = vpop.f32.mrf.mxu0
        %v1808 = vadd.f32 %v1773, %v1807
        %1809 = vmatmul.f32.gmra.mxu0 %v1742
        %v1810 = vpop.f32.mrf.mxu0
        %v1811 = vadd.f32 %v1773, %v1810
        %1812 = vmatmul.f32.gmra.mxu0 %v1743
        %v1813 = vpop.f32.mrf.mxu0
        %v1814 = vadd.f32 %v1773, %v1813
        %1815 = vmatmul.f32.gmra.mxu0 %v1744
        %v1816 = vpop.f32.mrf.mxu0
        %v1817 = vadd.f32 %v1773, %v1816
        %1818 = vmatmul.f32.gmra.mxu0 %v1745
        %v1819 = vpop.f32.mrf.mxu0
        %v1820 = vadd.f32 %v1773, %v1819
        %1821 = vmatmul.f32.gmra.mxu0 %v1746
        %v1822 = vpop.f32.mrf.mxu0
        %v1823 = vadd.f32 %v1773, %v1822
        %1824 = vmatmul.f32.gmra.mxu0 %v1747
        %v1825 = vpop.f32.mrf.mxu0
        %v1826 = vadd.f32 %v1773, %v1825
        %1827 = vmatmul.f32.gmra.mxu0 %v1748
        %v1828 = vpop.f32.mrf.mxu0
        %v1829 = vadd.f32 %v1773, %v1828
        %1830 = vmatmul.f32.gmra.mxu0 %v1749
        %v1831 = vpop.f32.mrf.mxu0
        %v1832 = vadd.f32 %v1773, %v1831
        %1833 = vmatmul.f32.gmra.mxu0 %v1750
        %v1834 = vpop.f32.mrf.mxu0
        %v1835 = vadd.f32 %v1773, %v1834
        %1836 = vmatmul.f32.gmra.mxu0 %v1751
        %v1837 = vpop.f32.mrf.mxu0
        %v1838 = vadd.f32 %v1773, %v1837
        %1839 = vmatmul.f32.gmra.mxu0 %v1752
        %v1840 = vpop.f32.mrf.mxu0
        %v1841 = vadd.f32 %v1773, %v1840
        %1842 = vmatmul.f32.gmra.mxu0 %v1753
        %v1843 = vpop.f32.mrf.mxu0
        %v1844 = vadd.f32 %v1773, %v1843
        %1845 = vmatmul.f32.gmra.mxu0 %v1754
        %v1846 = vpop.f32.mrf.mxu0
        %v1847 = vadd.f32 %v1773, %v1846
        %1848 = vdwg.mxu0
        %1849 = vadd.xlane.f32.xlu0 %v1793
        %v1850 = vpop.xlane.xlu0 %1849
        %1851 = vadd.xlane.f32.xlu0 %v1796
        %v1852 = vpop.xlane.xlu0 %1851
        %1853 = vadd.xlane.f32.xlu0 %v1799
        %v1854 = vpop.xlane.xlu0 %1853
        %1855 = vadd.xlane.f32.xlu0 %v1802
        %v1856 = vpop.xlane.xlu0 %1855
        %1857 = vadd.xlane.f32.xlu0 %v1805
        %v1858 = vpop.xlane.xlu0 %1857
        %1859 = vadd.xlane.f32.xlu0 %v1808
        %v1860 = vpop.xlane.xlu0 %1859
        %1861 = vadd.xlane.f32.xlu0 %v1811
        %v1862 = vpop.xlane.xlu0 %1861
        %1863 = vadd.xlane.f32.xlu0 %v1814
        %v1864 = vpop.xlane.xlu0 %1863
        %1865 = vadd.xlane.f32.xlu0 %v1817
        %v1866 = vpop.xlane.xlu0 %1865
        %1867 = vadd.xlane.f32.xlu0 %v1820
        %v1868 = vpop.xlane.xlu0 %1867
        %1869 = vadd.xlane.f32.xlu0 %v1823
        %v1870 = vpop.xlane.xlu0 %1869
        %1871 = vadd.xlane.f32.xlu0 %v1826
        %v1872 = vpop.xlane.xlu0 %1871
        %1873 = vadd.xlane.f32.xlu0 %v1829
        %v1874 = vpop.xlane.xlu0 %1873
        %1875 = vadd.xlane.f32.xlu0 %v1832
        %v1876 = vpop.xlane.xlu0 %1875
        %1877 = vadd.xlane.f32.xlu0 %v1835
        %v1878 = vpop.xlane.xlu0 %1877
        %1879 = vadd.xlane.f32.xlu0 %v1838
        %v1880 = vpop.xlane.xlu0 %1879
        %1881 = vadd.xlane.f32.xlu0 %v1841
        %v1882 = vpop.xlane.xlu0 %1881
        %1883 = vadd.xlane.f32.xlu0 %v1844
        %v1884 = vpop.xlane.xlu0 %1883
        %1885 = vadd.xlane.f32.xlu0 %v1847
        %v1886 = vpop.xlane.xlu0 %1885
        %v1887 = vmul.f32 %v1793, %v1793
        %v1888 = vmul.f32 %v1796, %v1796
        %v1889 = vmul.f32 %v1799, %v1799
        %v1890 = vmul.f32 %v1802, %v1802
        %v1891 = vmul.f32 %v1805, %v1805
        %v1892 = vmul.f32 %v1808, %v1808
        %v1893 = vmul.f32 %v1811, %v1811
        %v1894 = vmul.f32 %v1814, %v1814
        %v1895 = vmul.f32 %v1817, %v1817
        %v1896 = vmul.f32 %v1820, %v1820
        %v1897 = vmul.f32 %v1823, %v1823
        %v1898 = vmul.f32 %v1826, %v1826
        %v1899 = vmul.f32 %v1829, %v1829
        %v1900 = vmul.f32 %v1832, %v1832
        %v1901 = vmul.f32 %v1835, %v1835
        %v1902 = vmul.f32 %v1838, %v1838
        %v1903 = vmul.f32 %v1841, %v1841
        %v1904 = vmul.f32 %v1844, %v1844
        %v1905 = vmul.f32 %v1847, %v1847
        %1906 = vadd.xlane.f32.xlu0 %v1887
        %v1907 = vpop.xlane.xlu0 %1906
        %1908 = vadd.xlane.f32.xlu0 %v1888
        %v1909 = vpop.xlane.xlu0 %1908
        %1910 = vadd.xlane.f32.xlu0 %v1889
        %v1911 = vpop.xlane.xlu0 %1910
        %1912 = vadd.xlane.f32.xlu0 %v1890
        %v1913 = vpop.xlane.xlu0 %1912
        %1914 = vadd.xlane.f32.xlu0 %v1891
        %v1915 = vpop.xlane.xlu0 %1914
        %1916 = vadd.xlane.f32.xlu0 %v1892
        %v1917 = vpop.xlane.xlu0 %1916
        %1918 = vadd.xlane.f32.xlu0 %v1893
        %v1919 = vpop.xlane.xlu0 %1918
        %1920 = vadd.xlane.f32.xlu0 %v1894
        %v1921 = vpop.xlane.xlu0 %1920
        %1922 = vadd.xlane.f32.xlu0 %v1895
        %v1923 = vpop.xlane.xlu0 %1922
        %1924 = vadd.xlane.f32.xlu0 %v1896
        %v1925 = vpop.xlane.xlu0 %1924
        %1926 = vadd.xlane.f32.xlu0 %v1897
        %v1927 = vpop.xlane.xlu0 %1926
        %1928 = vadd.xlane.f32.xlu0 %v1898
        %v1929 = vpop.xlane.xlu0 %1928
        %1930 = vadd.xlane.f32.xlu0 %v1899
        %v1931 = vpop.xlane.xlu0 %1930
        %1932 = vadd.xlane.f32.xlu0 %v1900
        %v1933 = vpop.xlane.xlu0 %1932
        %1934 = vadd.xlane.f32.xlu0 %v1901
        %v1935 = vpop.xlane.xlu0 %1934
        %1936 = vadd.xlane.f32.xlu0 %v1902
        %v1937 = vpop.xlane.xlu0 %1936
        %1938 = vadd.xlane.f32.xlu0 %v1903
        %v1939 = vpop.xlane.xlu0 %1938
        %1940 = vadd.xlane.f32.xlu0 %v1904
        %v1941 = vpop.xlane.xlu0 %1940
        %1942 = vadd.xlane.f32.xlu0 %v1905
        %v1943 = vpop.xlane.xlu0 %1942
        %v1944 = vmul.f32 %v1850, 0.010416667
        %v1945 = vmul.f32 %v1852, 0.010416667
        %v1946 = vmul.f32 %v1854, 0.010416667
        %v1947 = vmul.f32 %v1856, 0.010416667
        %v1948 = vmul.f32 %v1858, 0.010416667
        %v1949 = vmul.f32 %v1860, 0.010416667
        %v1950 = vmul.f32 %v1862, 0.010416667
        %v1951 = vmul.f32 %v1864, 0.010416667
        %v1952 = vmul.f32 %v1866, 0.010416667
        %v1953 = vmul.f32 %v1868, 0.010416667
        %v1954 = vmul.f32 %v1870, 0.010416667
        %v1955 = vmul.f32 %v1872, 0.010416667
        %v1956 = vmul.f32 %v1874, 0.010416667
        %v1957 = vmul.f32 %v1876, 0.010416667
        %v1958 = vmul.f32 %v1878, 0.010416667
        %v1959 = vmul.f32 %v1880, 0.010416667
        %v1960 = vmul.f32 %v1882, 0.010416667
        %v1961 = vmul.f32 %v1884, 0.010416667
        %v1962 = vmul.f32 %v1886, 0.010416667
        %v1963 = vmul.f32 %v1907, 0.010416667
        %v1964 = vmul.f32 %v1909, 0.010416667
        %v1965 = vmul.f32 %v1911, 0.010416667
        %v1966 = vmul.f32 %v1913, 0.010416667
        %v1967 = vmul.f32 %v1915, 0.010416667
        %v1968 = vmul.f32 %v1917, 0.010416667
        %v1969 = vmul.f32 %v1919, 0.010416667
        %v1970 = vmul.f32 %v1921, 0.010416667
        %v1971 = vmul.f32 %v1923, 0.010416667
        %v1972 = vmul.f32 %v1925, 0.010416667
        %v1973 = vmul.f32 %v1927, 0.010416667
        %v1974 = vmul.f32 %v1929, 0.010416667
        %v1975 = vmul.f32 %v1931, 0.010416667
        %v1976 = vmul.f32 %v1933, 0.010416667
        %v1977 = vmul.f32 %v1935, 0.010416667
        %v1978 = vmul.f32 %v1937, 0.010416667
        %v1979 = vmul.f32 %v1939, 0.010416667
        %v1980 = vmul.f32 %v1941, 0.010416667
        %v1981 = vmul.f32 %v1943, 0.010416667
        %v1982 = vmul.f32 %v1944, %v1944
        %v1983 = vmul.f32 %v1945, %v1945
        %v1984 = vmul.f32 %v1946, %v1946
        %v1985 = vmul.f32 %v1947, %v1947
        %v1986 = vmul.f32 %v1948, %v1948
        %v1987 = vmul.f32 %v1949, %v1949
        %v1988 = vmul.f32 %v1950, %v1950
        %v1989 = vmul.f32 %v1951, %v1951
        %v1990 = vmul.f32 %v1952, %v1952
        %v1991 = vmul.f32 %v1953, %v1953
        %v1992 = vmul.f32 %v1954, %v1954
        %v1993 = vmul.f32 %v1955, %v1955
        %v1994 = vmul.f32 %v1956, %v1956
        %v1995 = vmul.f32 %v1957, %v1957
        %v1996 = vmul.f32 %v1958, %v1958
        %v1997 = vmul.f32 %v1959, %v1959
        %v1998 = vmul.f32 %v1960, %v1960
        %v1999 = vmul.f32 %v1961, %v1961
        %v2000 = vmul.f32 %v1962, %v1962
        %v2001 = vsub.f32 %v1963, %v1982
        %v2002 = vsub.f32 %v1964, %v1983
        %v2003 = vsub.f32 %v1965, %v1984
        %v2004 = vsub.f32 %v1966, %v1985
        %v2005 = vsub.f32 %v1967, %v1986
        %v2006 = vsub.f32 %v1968, %v1987
        %v2007 = vsub.f32 %v1969, %v1988
        %v2008 = vsub.f32 %v1970, %v1989
        %v2009 = vsub.f32 %v1971, %v1990
        %v2010 = vsub.f32 %v1972, %v1991
        %v2011 = vsub.f32 %v1973, %v1992
        %v2012 = vsub.f32 %v1974, %v1993
        %v2013 = vsub.f32 %v1975, %v1994
        %v2014 = vsub.f32 %v1976, %v1995
        %v2015 = vsub.f32 %v1977, %v1996
        %v2016 = vsub.f32 %v1978, %v1997
        %v2017 = vsub.f32 %v1979, %v1998
        %v2018 = vsub.f32 %v1980, %v1999
        %v2019 = vsub.f32 %v1981, %v2000
        %v2020 = vmax.f32 %v2001, 0.0
        %v2021 = vmax.f32 %v2002, 0.0
        %v2022 = vmax.f32 %v2003, 0.0
        %v2023 = vmax.f32 %v2004, 0.0
        %v2024 = vmax.f32 %v2005, 0.0
        %v2025 = vmax.f32 %v2006, 0.0
        %v2026 = vmax.f32 %v2007, 0.0
        %v2027 = vmax.f32 %v2008, 0.0
        %v2028 = vmax.f32 %v2009, 0.0
        %v2029 = vmax.f32 %v2010, 0.0
        %v2030 = vmax.f32 %v2011, 0.0
        %v2031 = vmax.f32 %v2012, 0.0
        %v2032 = vmax.f32 %v2013, 0.0
        %v2033 = vmax.f32 %v2014, 0.0
        %v2034 = vmax.f32 %v2015, 0.0
        %v2035 = vmax.f32 %v2016, 0.0
        %v2036 = vmax.f32 %v2017, 0.0
        %v2037 = vmax.f32 %v2018, 0.0
        %v2038 = vmax.f32 %v2019, 0.0
        %v2039 = vadd.f32 %v2020, 1e-05
        %v2040 = vadd.f32 %v2021, 1e-05
        %v2041 = vadd.f32 %v2022, 1e-05
        %v2042 = vadd.f32 %v2023, 1e-05
        %v2043 = vadd.f32 %v2024, 1e-05
        %v2044 = vadd.f32 %v2025, 1e-05
        %v2045 = vadd.f32 %v2026, 1e-05
        %v2046 = vadd.f32 %v2027, 1e-05
        %v2047 = vadd.f32 %v2028, 1e-05
        %v2048 = vadd.f32 %v2029, 1e-05
        %v2049 = vadd.f32 %v2030, 1e-05
        %v2050 = vadd.f32 %v2031, 1e-05
        %v2051 = vadd.f32 %v2032, 1e-05
        %v2052 = vadd.f32 %v2033, 1e-05
        %v2053 = vadd.f32 %v2034, 1e-05
        %v2054 = vadd.f32 %v2035, 1e-05
        %v2055 = vadd.f32 %v2036, 1e-05
        %v2056 = vadd.f32 %v2037, 1e-05
        %v2057 = vadd.f32 %v2038, 1e-05
        %v2058 = vrsqrt.pop %v2039
        %v2059 = vmul.f32 %v2058, %v2039
        %v2060 = vmul.f32 %v2059, %v2058
        %v2061 = vmul.f32 0.5, %v2060
        %v2062 = vsub.f32 1.5, %v2061
        %v2063 = vmul.f32 %v2058, %v2062
        %vm2064 = vweird.f32 %v2039
        %vm2065 = vweird.f32 %v2058
        %vm2066 = vmor %vm2064, %vm2065
        %v2067 = vsel %vm2066, %v2058, %v2063
        %v2068 = vrsqrt.pop %v2040
        %v2069 = vmul.f32 %v2068, %v2040
        %v2070 = vmul.f32 %v2069, %v2068
        %v2071 = vmul.f32 0.5, %v2070
        %v2072 = vsub.f32 1.5, %v2071
        %v2073 = vmul.f32 %v2068, %v2072
        %vm2074 = vweird.f32 %v2040
        %vm2075 = vweird.f32 %v2068
        %vm2076 = vmor %vm2074, %vm2075
        %v2077 = vsel %vm2076, %v2068, %v2073
        %v2078 = vrsqrt.pop %v2041
        %v2079 = vmul.f32 %v2078, %v2041
        %v2080 = vmul.f32 %v2079, %v2078
        %v2081 = vmul.f32 0.5, %v2080
        %v2082 = vsub.f32 1.5, %v2081
        %v2083 = vmul.f32 %v2078, %v2082
        %vm2084 = vweird.f32 %v2041
        %vm2085 = vweird.f32 %v2078
        %vm2086 = vmor %vm2084, %vm2085
        %v2087 = vsel %vm2086, %v2078, %v2083
        %v2088 = vrsqrt.pop %v2042
        %v2089 = vmul.f32 %v2088, %v2042
        %v2090 = vmul.f32 %v2089, %v2088
        %v2091 = vmul.f32 0.5, %v2090
        %v2092 = vsub.f32 1.5, %v2091
        %v2093 = vmul.f32 %v2088, %v2092
        %vm2094 = vweird.f32 %v2042
        %vm2095 = vweird.f32 %v2088
        %vm2096 = vmor %vm2094, %vm2095
        %v2097 = vsel %vm2096, %v2088, %v2093
        %v2098 = vrsqrt.pop %v2043
        %v2099 = vmul.f32 %v2098, %v2043
        %v2100 = vmul.f32 %v2099, %v2098
        %v2101 = vmul.f32 0.5, %v2100
        %v2102 = vsub.f32 1.5, %v2101
        %v2103 = vmul.f32 %v2098, %v2102
        %vm2104 = vweird.f32 %v2043
        %vm2105 = vweird.f32 %v2098
        %vm2106 = vmor %vm2104, %vm2105
        %v2107 = vsel %vm2106, %v2098, %v2103
        %v2108 = vrsqrt.pop %v2044
        %v2109 = vmul.f32 %v2108, %v2044
        %v2110 = vmul.f32 %v2109, %v2108
        %v2111 = vmul.f32 0.5, %v2110
        %v2112 = vsub.f32 1.5, %v2111
        %v2113 = vmul.f32 %v2108, %v2112
        %vm2114 = vweird.f32 %v2044
        %vm2115 = vweird.f32 %v2108
        %vm2116 = vmor %vm2114, %vm2115
        %v2117 = vsel %vm2116, %v2108, %v2113
        %v2118 = vrsqrt.pop %v2045
        %v2119 = vmul.f32 %v2118, %v2045
        %v2120 = vmul.f32 %v2119, %v2118
        %v2121 = vmul.f32 0.5, %v2120
        %v2122 = vsub.f32 1.5, %v2121
        %v2123 = vmul.f32 %v2118, %v2122
        %vm2124 = vweird.f32 %v2045
        %vm2125 = vweird.f32 %v2118
        %vm2126 = vmor %vm2124, %vm2125
        %v2127 = vsel %vm2126, %v2118, %v2123
        %v2128 = vrsqrt.pop %v2046
        %v2129 = vmul.f32 %v2128, %v2046
        %v2130 = vmul.f32 %v2129, %v2128
        %v2131 = vmul.f32 0.5, %v2130
        %v2132 = vsub.f32 1.5, %v2131
        %v2133 = vmul.f32 %v2128, %v2132
        %vm2134 = vweird.f32 %v2046
        %vm2135 = vweird.f32 %v2128
        %vm2136 = vmor %vm2134, %vm2135
        %v2137 = vsel %vm2136, %v2128, %v2133
        %v2138 = vrsqrt.pop %v2047
        %v2139 = vmul.f32 %v2138, %v2047
        %v2140 = vmul.f32 %v2139, %v2138
        %v2141 = vmul.f32 0.5, %v2140
        %v2142 = vsub.f32 1.5, %v2141
        %v2143 = vmul.f32 %v2138, %v2142
        %vm2144 = vweird.f32 %v2047
        %vm2145 = vweird.f32 %v2138
        %vm2146 = vmor %vm2144, %vm2145
        %v2147 = vsel %vm2146, %v2138, %v2143
        %v2148 = vrsqrt.pop %v2048
        %v2149 = vmul.f32 %v2148, %v2048
        %v2150 = vmul.f32 %v2149, %v2148
        %v2151 = vmul.f32 0.5, %v2150
        %v2152 = vsub.f32 1.5, %v2151
        %v2153 = vmul.f32 %v2148, %v2152
        %vm2154 = vweird.f32 %v2048
        %vm2155 = vweird.f32 %v2148
        %vm2156 = vmor %vm2154, %vm2155
        %v2157 = vsel %vm2156, %v2148, %v2153
        %v2158 = vrsqrt.pop %v2049
        %v2159 = vmul.f32 %v2158, %v2049
        %v2160 = vmul.f32 %v2159, %v2158
        %v2161 = vmul.f32 0.5, %v2160
        %v2162 = vsub.f32 1.5, %v2161
        %v2163 = vmul.f32 %v2158, %v2162
        %vm2164 = vweird.f32 %v2049
        %vm2165 = vweird.f32 %v2158
        %vm2166 = vmor %vm2164, %vm2165
        %v2167 = vsel %vm2166, %v2158, %v2163
        %v2168 = vrsqrt.pop %v2050
        %v2169 = vmul.f32 %v2168, %v2050
        %v2170 = vmul.f32 %v2169, %v2168
        %v2171 = vmul.f32 0.5, %v2170
        %v2172 = vsub.f32 1.5, %v2171
        %v2173 = vmul.f32 %v2168, %v2172
        %vm2174 = vweird.f32 %v2050
        %vm2175 = vweird.f32 %v2168
        %vm2176 = vmor %vm2174, %vm2175
        %v2177 = vsel %vm2176, %v2168, %v2173
        %v2178 = vrsqrt.pop %v2051
        %v2179 = vmul.f32 %v2178, %v2051
        %v2180 = vmul.f32 %v2179, %v2178
        %v2181 = vmul.f32 0.5, %v2180
        %v2182 = vsub.f32 1.5, %v2181
        %v2183 = vmul.f32 %v2178, %v2182
        %vm2184 = vweird.f32 %v2051
        %vm2185 = vweird.f32 %v2178
        %vm2186 = vmor %vm2184, %vm2185
        %v2187 = vsel %vm2186, %v2178, %v2183
        %v2188 = vrsqrt.pop %v2052
        %v2189 = vmul.f32 %v2188, %v2052
        %v2190 = vmul.f32 %v2189, %v2188
        %v2191 = vmul.f32 0.5, %v2190
        %v2192 = vsub.f32 1.5, %v2191
        %v2193 = vmul.f32 %v2188, %v2192
        %vm2194 = vweird.f32 %v2052
        %vm2195 = vweird.f32 %v2188
        %vm2196 = vmor %vm2194, %vm2195
        %v2197 = vsel %vm2196, %v2188, %v2193
        %v2198 = vrsqrt.pop %v2053
        %v2199 = vmul.f32 %v2198, %v2053
        %v2200 = vmul.f32 %v2199, %v2198
        %v2201 = vmul.f32 0.5, %v2200
        %v2202 = vsub.f32 1.5, %v2201
        %v2203 = vmul.f32 %v2198, %v2202
        %vm2204 = vweird.f32 %v2053
        %vm2205 = vweird.f32 %v2198
        %vm2206 = vmor %vm2204, %vm2205
        %v2207 = vsel %vm2206, %v2198, %v2203
        %v2208 = vrsqrt.pop %v2054
        %v2209 = vmul.f32 %v2208, %v2054
        %v2210 = vmul.f32 %v2209, %v2208
        %v2211 = vmul.f32 0.5, %v2210
        %v2212 = vsub.f32 1.5, %v2211
        %v2213 = vmul.f32 %v2208, %v2212
        %vm2214 = vweird.f32 %v2054
        %vm2215 = vweird.f32 %v2208
        %vm2216 = vmor %vm2214, %vm2215
        %v2217 = vsel %vm2216, %v2208, %v2213
        %v2218 = vrsqrt.pop %v2055
        %v2219 = vmul.f32 %v2218, %v2055
        %v2220 = vmul.f32 %v2219, %v2218
        %v2221 = vmul.f32 0.5, %v2220
        %v2222 = vsub.f32 1.5, %v2221
        %v2223 = vmul.f32 %v2218, %v2222
        %vm2224 = vweird.f32 %v2055
        %vm2225 = vweird.f32 %v2218
        %vm2226 = vmor %vm2224, %vm2225
        %v2227 = vsel %vm2226, %v2218, %v2223
        %v2228 = vrsqrt.pop %v2056
        %v2229 = vmul.f32 %v2228, %v2056
        %v2230 = vmul.f32 %v2229, %v2228
        %v2231 = vmul.f32 0.5, %v2230
        %v2232 = vsub.f32 1.5, %v2231
        %v2233 = vmul.f32 %v2228, %v2232
        %vm2234 = vweird.f32 %v2056
        %vm2235 = vweird.f32 %v2228
        %vm2236 = vmor %vm2234, %vm2235
        %v2237 = vsel %vm2236, %v2228, %v2233
        %v2238 = vrsqrt.pop %v2057
        %v2239 = vmul.f32 %v2238, %v2057
        %v2240 = vmul.f32 %v2239, %v2238
        %v2241 = vmul.f32 0.5, %v2240
        %v2242 = vsub.f32 1.5, %v2241
        %v2243 = vmul.f32 %v2238, %v2242
        %vm2244 = vweird.f32 %v2057
        %vm2245 = vweird.f32 %v2238
        %vm2246 = vmor %vm2244, %vm2245
        %v2247 = vsel %vm2246, %v2238, %v2243
        %v2248 = vsub.f32 %v1793, %v1944
        %v2249 = vsub.f32 %v1796, %v1945
        %v2250 = vsub.f32 %v1799, %v1946
        %v2251 = vsub.f32 %v1802, %v1947
        %v2252 = vsub.f32 %v1805, %v1948
        %v2253 = vsub.f32 %v1808, %v1949
        %v2254 = vsub.f32 %v1811, %v1950
        %v2255 = vsub.f32 %v1814, %v1951
        %v2256 = vsub.f32 %v1817, %v1952
        %v2257 = vsub.f32 %v1820, %v1953
        %v2258 = vsub.f32 %v1823, %v1954
        %v2259 = vsub.f32 %v1826, %v1955
        %v2260 = vsub.f32 %v1829, %v1956
        %v2261 = vsub.f32 %v1832, %v1957
        %v2262 = vsub.f32 %v1835, %v1958
        %v2263 = vsub.f32 %v1838, %v1959
        %v2264 = vsub.f32 %v1841, %v1960
        %v2265 = vsub.f32 %v1844, %v1961
        %v2266 = vsub.f32 %v1847, %v1962
        %v2267 = vmul.f32 %v2248, %v2067
        %v2268 = vmul.f32 %v2249, %v2077
        %v2269 = vmul.f32 %v2250, %v2087
        %v2270 = vmul.f32 %v2251, %v2097
        %v2271 = vmul.f32 %v2252, %v2107
        %v2272 = vmul.f32 %v2253, %v2117
        %v2273 = vmul.f32 %v2254, %v2127
        %v2274 = vmul.f32 %v2255, %v2137
        %v2275 = vmul.f32 %v2256, %v2147
        %v2276 = vmul.f32 %v2257, %v2157
        %v2277 = vmul.f32 %v2258, %v2167
        %v2278 = vmul.f32 %v2259, %v2177
        %v2279 = vmul.f32 %v2260, %v2187
        %v2280 = vmul.f32 %v2261, %v2197
        %v2281 = vmul.f32 %v2262, %v2207
        %v2282 = vmul.f32 %v2263, %v2217
        %v2283 = vmul.f32 %v2264, %v2227
        %v2284 = vmul.f32 %v2265, %v2237
        %v2285 = vmul.f32 %v2266, %v2247
        %v2286 = vld [vmem:[%s11] sm:$0x1]
        %v2288 = vperm.slane %v2286, 0
        %v2290 = vmul.f32 %v2267, %v2288
        %v2291 = vmul.f32 %v2268, %v2288
        %v2292 = vmul.f32 %v2269, %v2288
        %v2293 = vmul.f32 %v2270, %v2288
        %v2294 = vmul.f32 %v2271, %v2288
        %v2295 = vmul.f32 %v2272, %v2288
        %v2296 = vmul.f32 %v2273, %v2288
        %v2297 = vmul.f32 %v2274, %v2288
        %v2298 = vmul.f32 %v2275, %v2288
        %v2299 = vmul.f32 %v2276, %v2288
        %v2300 = vmul.f32 %v2277, %v2288
        %v2301 = vmul.f32 %v2278, %v2288
        %v2302 = vmul.f32 %v2279, %v2288
        %v2303 = vmul.f32 %v2280, %v2288
        %v2304 = vmul.f32 %v2281, %v2288
        %v2305 = vmul.f32 %v2282, %v2288
        %v2306 = vmul.f32 %v2283, %v2288
        %v2307 = vmul.f32 %v2284, %v2288
        %v2308 = vmul.f32 %v2285, %v2288
        %v2309 = vld [vmem:[%s12] sm:$0x1]
        %v2311 = vperm.slane %v2309, 0
        %v2313 = vadd.f32 %v2290, %v2311
        %v2314 = vadd.f32 %v2291, %v2311
        %v2315 = vadd.f32 %v2292, %v2311
        %v2316 = vadd.f32 %v2293, %v2311
        %v2317 = vadd.f32 %v2294, %v2311
        %v2318 = vadd.f32 %v2295, %v2311
        %v2319 = vadd.f32 %v2296, %v2311
        %v2320 = vadd.f32 %v2297, %v2311
        %v2321 = vadd.f32 %v2298, %v2311
        %v2322 = vadd.f32 %v2299, %v2311
        %v2323 = vadd.f32 %v2300, %v2311
        %v2324 = vadd.f32 %v2301, %v2311
        %v2325 = vadd.f32 %v2302, %v2311
        %v2326 = vadd.f32 %v2303, %v2311
        %v2327 = vadd.f32 %v2304, %v2311
        %v2328 = vadd.f32 %v2305, %v2311
        %v2329 = vadd.f32 %v2306, %v2311
        %v2330 = vadd.f32 %v2307, %v2311
        %v2331 = vadd.f32 %v2308, %v2311
        %v2332 = vmax.f32 %v2313, 0.0
        %v2333 = vmax.f32 %v2314, 0.0
        %v2334 = vmax.f32 %v2315, 0.0
        %v2335 = vmax.f32 %v2316, 0.0
        %v2336 = vmax.f32 %v2317, 0.0
        %v2337 = vmax.f32 %v2318, 0.0
        %v2338 = vmax.f32 %v2319, 0.0
        %v2339 = vmax.f32 %v2320, 0.0
        %v2340 = vmax.f32 %v2321, 0.0
        %v2341 = vmax.f32 %v2322, 0.0
        %v2342 = vmax.f32 %v2323, 0.0
        %v2343 = vmax.f32 %v2324, 0.0
        %v2344 = vmax.f32 %v2325, 0.0
        %v2345 = vmax.f32 %v2326, 0.0
        %v2346 = vmax.f32 %v2327, 0.0
        %v2347 = vmax.f32 %v2328, 0.0
        %v2348 = vmax.f32 %v2329, 0.0
        %v2349 = vmax.f32 %v2330, 0.0
        %v2350 = vmax.f32 %v2331, 0.0
        %v2351 = vld [vmem:[%s13] sm:$0xff]
        %v2352 = vld [vmem:[%s13 + $0x8] sm:$0xff]
        %v2353 = vld [vmem:[%s13 + $0x10] sm:$0xff]
        %v2354 = vld [vmem:[%s13 + $0x18] sm:$0xff]
        %v2355 = vld [vmem:[%s13 + $0x20] sm:$0xff]
        %v2356 = vld [vmem:[%s13 + $0x28] sm:$0xff]
        %v2357 = vld [vmem:[%s13 + $0x30] sm:$0xff]
        %v2358 = vld [vmem:[%s13 + $0x38] sm:$0xff]
        %v2359 = vld [vmem:[%s13 + $0x40] sm:$0xff]
        %v2360 = vld [vmem:[%s13 + $0x48] sm:$0xff]
        %v2361 = vld [vmem:[%s13 + $0x50] sm:$0xff]
        %v2362 = vld [vmem:[%s13 + $0x58] sm:$0xff]
        %v2363 = vld [vmem:[%s13 + $0x60] sm:$0xff]
        %v2364 = vld [vmem:[%s13 + $0x68] sm:$0xff]
        %v2365 = vld [vmem:[%s13 + $0x70] sm:$0xff]
        %v2366 = vld [vmem:[%s13 + $0x78] sm:$0xff]
        %v2367 = vld [vmem:[%s14] sm:$0x1]
        %v2369 = vperm.slane %v2367, 0
        %2371 = vmatpush.msra.mxu0 %v2366
        %2372 = vmatpush.msra.mxu0 %v2365
        %2373 = vmatpush.msra.mxu0 %v2364
        %2374 = vmatpush.msra.mxu0 %v2363
        %2375 = vmatpush.msra.mxu0 %v2362
        %2376 = vmatpush.msra.mxu0 %v2361
        %2377 = vmatpush.msra.mxu0 %v2360
        %2378 = vmatpush.msra.mxu0 %v2359
        %2379 = vmatpush.msra.mxu0 %v2358
        %2380 = vmatpush.msra.mxu0 %v2357
        %2381 = vmatpush.msra.mxu0 %v2356
        %2382 = vmatpush.msra.mxu0 %v2355
        %2383 = vmatpush.msra.mxu0 %v2354
        %2384 = vmatpush.msra.mxu0 %v2353
        %2385 = vmatpush.msra.mxu0 %v2352
        %2386 = vmatpush.msra.mxu0 %v2351
        %2387 = vmatmul.f32.gmra.mxu0 %v2332
        %v2388 = vpop.f32.mrf.mxu0
        %v2389 = vadd.f32 %v2369, %v2388
        %2390 = vmatmul.f32.gmra.mxu0 %v2333
        %v2391 = vpop.f32.mrf.mxu0
        %v2392 = vadd.f32 %v2369, %v2391
        %2393 = vmatmul.f32.gmra.mxu0 %v2334
        %v2394 = vpop.f32.mrf.mxu0
        %v2395 = vadd.f32 %v2369, %v2394
        %2396 = vmatmul.f32.gmra.mxu0 %v2335
        %v2397 = vpop.f32.mrf.mxu0
        %v2398 = vadd.f32 %v2369, %v2397
        %2399 = vmatmul.f32.gmra.mxu0 %v2336
        %v2400 = vpop.f32.mrf.mxu0
        %v2401 = vadd.f32 %v2369, %v2400
        %2402 = vmatmul.f32.gmra.mxu0 %v2337
        %v2403 = vpop.f32.mrf.mxu0
        %v2404 = vadd.f32 %v2369, %v2403
        %2405 = vmatmul.f32.gmra.mxu0 %v2338
        %v2406 = vpop.f32.mrf.mxu0
        %v2407 = vadd.f32 %v2369, %v2406
        %2408 = vmatmul.f32.gmra.mxu0 %v2339
        %v2409 = vpop.f32.mrf.mxu0
        %v2410 = vadd.f32 %v2369, %v2409
        %2411 = vmatmul.f32.gmra.mxu0 %v2340
        %v2412 = vpop.f32.mrf.mxu0
        %v2413 = vadd.f32 %v2369, %v2412
        %2414 = vmatmul.f32.gmra.mxu0 %v2341
        %v2415 = vpop.f32.mrf.mxu0
        %v2416 = vadd.f32 %v2369, %v2415
        %2417 = vmatmul.f32.gmra.mxu0 %v2342
        %v2418 = vpop.f32.mrf.mxu0
        %v2419 = vadd.f32 %v2369, %v2418
        %2420 = vmatmul.f32.gmra.mxu0 %v2343
        %v2421 = vpop.f32.mrf.mxu0
        %v2422 = vadd.f32 %v2369, %v2421
        %2423 = vmatmul.f32.gmra.mxu0 %v2344
        %v2424 = vpop.f32.mrf.mxu0
        %v2425 = vadd.f32 %v2369, %v2424
        %2426 = vmatmul.f32.gmra.mxu0 %v2345
        %v2427 = vpop.f32.mrf.mxu0
        %v2428 = vadd.f32 %v2369, %v2427
        %2429 = vmatmul.f32.gmra.mxu0 %v2346
        %v2430 = vpop.f32.mrf.mxu0
        %v2431 = vadd.f32 %v2369, %v2430
        %2432 = vmatmul.f32.gmra.mxu0 %v2347
        %v2433 = vpop.f32.mrf.mxu0
        %v2434 = vadd.f32 %v2369, %v2433
        %2435 = vmatmul.f32.gmra.mxu0 %v2348
        %v2436 = vpop.f32.mrf.mxu0
        %v2437 = vadd.f32 %v2369, %v2436
        %2438 = vmatmul.f32.gmra.mxu0 %v2349
        %v2439 = vpop.f32.mrf.mxu0
        %v2440 = vadd.f32 %v2369, %v2439
        %2441 = vmatmul.f32.gmra.mxu0 %v2350
        %v2442 = vpop.f32.mrf.mxu0
        %v2443 = vadd.f32 %v2369, %v2442
        %2444 = vdwg.mxu0
        %2445 = vst [vmem:[%s488] sm:$0xff] %v2389
        %2446 = vst [vmem:[%s488 + $0x8] sm:$0xff] %v2392
        %2447 = vst [vmem:[%s488 + $0x10] sm:$0xff] %v2395
        %2448 = vst [vmem:[%s488 + $0x18] sm:$0xff] %v2398
        %2449 = vst [vmem:[%s488 + $0x20] sm:$0xff] %v2401
        %2450 = vst [vmem:[%s488 + $0x28] sm:$0xff] %v2404
        %2451 = vst [vmem:[%s488 + $0x30] sm:$0xff] %v2407
        %2452 = vst [vmem:[%s488 + $0x38] sm:$0xff] %v2410
        %2453 = vst [vmem:[%s488 + $0x40] sm:$0xff] %v2413
        %2454 = vst [vmem:[%s488 + $0x48] sm:$0xff] %v2416
        %2455 = vst [vmem:[%s488 + $0x50] sm:$0xff] %v2419
        %2456 = vst [vmem:[%s488 + $0x58] sm:$0xff] %v2422
        %2457 = vst [vmem:[%s488 + $0x60] sm:$0xff] %v2425
        %2458 = vst [vmem:[%s488 + $0x68] sm:$0xff] %v2428
        %2459 = vst [vmem:[%s488 + $0x70] sm:$0xff] %v2431
        %2460 = vst [vmem:[%s488 + $0x78] sm:$0xff] %v2434
        %2461 = vst [vmem:[%s488 + $0x80] sm:$0xff] %v2437
        %2462 = vst [vmem:[%s488 + $0x88] sm:$0xff] %v2440
        %2463 = vst [vmem:[%s488 + $0x90] sm:$0xff] %v2443
        %s2464 = sand.u32 %s357, 1
        %s2465 = scalar_lea.sflag [#allocation3], %s2464
        %s2466 = sand.u32 %s357, 1
        %s2467 = smul.addr %s2466, 152
        %s2468 = scalar_lea.vmem [#allocation2], %s2467
        // Predicated region
        $region81: #{tpu_custom_call.1} parent=79 // pred_check
          %p2469 = pneg %p367
        $region82: #{tpu_custom_call.1} parent=79 // pred_check_branch
          %2471 = sbr.rel (%p2469) target = $region84
        $region83: #{tpu_custom_call.1} parent=79 // pred_region
          %s2472 = smul.u32 19, %s29
          %2474 = vsyncadd %s2465, 0
          %s2475 = smul.addr %s2472, 8
          %s2476 = scalar_lea.hbm %s15, %s2475
          %s2477 = sshll.u32 %s2468, 4
          %s2478 = int_to_ptr.vmem [resolvable:$true] %s2477
          %s2479 = sshll.u32 %s2476, 4
          %s2480 = int_to_ptr.hbm [resolvable:$true] %s2479
          %2485 = dma.vmem_to_hbm [thread:$0]  %s2478, 2432, %s2480, %s2465, 128, 128, 8
        $region84: #{tpu_custom_call.1} parent=79 // pred_fallthru
          _
      $region80: #{tpu_custom_call.1} parent=5 // pred_fallthru
        _
      %p2486 = scmp.le.s32.totalorder 2, %s24
      // Predicated region
      $region85: #{tpu_custom_call.1} parent=5 // pred_check
        %p2487 = pneg %p2486
      $region86: #{tpu_custom_call.1} parent=5 // pred_check_branch
        %2489 = sbr.rel (%p2487) target = $region88
      $region87: #{tpu_custom_call.1} parent=5 // pred_region
        %s2490 = ssub.s32 %s24, 2
        // Predicated region
        $region89: #{tpu_custom_call.1} parent=87 // pred_check
          %p2491 = pneg %p373
        $region90: #{tpu_custom_call.1} parent=87 // pred_check_branch
          %2493 = sbr.rel (%p2491) target = $region92
        $region91: #{tpu_custom_call.1} parent=87 // pred_region
          %s2494 = sand.u32 %s358, 1
          %s2495 = scalar_lea.sflag [#allocation3], %s2494
          %s2496 = sand.u32 %s358, 1
          %s2497 = smul.addr %s2496, 152
          %s2498 = scalar_lea.vmem [#allocation2], %s2497
          %2500 = dma.done %s2495, 2432
        $region92: #{tpu_custom_call.1} parent=87 // pred_fallthru
          _
      $region88: #{tpu_custom_call.1} parent=5 // pred_fallthru
        _
    $region6: #{tpu_custom_call.1} parent=1 // loop_footer
      %s28 = sadd.s32 1, %s24
    $region7: #{tpu_custom_call.1} parent=1 // loop_footer_branch
      %23 = sbr.rel target = $region3
    $region8: #{tpu_custom_call.1} parent=1 // loop_exit
      _
    %2501 = vsyncpa [#allocation3], 1
    %s2502 = scalar_lea.sflag [#allocation3], 1
    %2503 = vsyncpa %s2502, 1

// kernel: tpu_custom_call.1
$region0: #{tpu_custom_call.1}
  #allocation0 [shape = 'u32[]', space=smem, size = 0x4, offset = 0x4, fixed_abs, tag = 'smem constant byte address 0x4 - core index']
  #allocation1 [shape = 'u32[72,128]{1,0:T(1,128)}', space=vmem, size = 0x9000, scoped, tag = 'internal scratch']
  %s0 = inlined_call_operand.vmem [shape: f32[300,48], index: 0, kind: input, shape index: {}]
  %s1 = inlined_call_operand.vmem [shape: f32[48,128], index: 1, kind: input, shape index: {}]
  %s2 = inlined_call_operand.vmem [shape: f32[1,128], index: 2, kind: input, shape index: {}]
  %s3 = inlined_call_operand.vmem [shape: f32[1,128], index: 3, kind: input, shape index: {}]
  %s4 = inlined_call_operand.vmem [shape: f32[1,128], index: 4, kind: input, shape index: {}]
  %s5 = inlined_call_operand.vmem [shape: f32[128,128], index: 5, kind: input, shape index: {}]
  %s6 = inlined_call_operand.vmem [shape: f32[1,128], index: 6, kind: input, shape index: {}]
  %s7 = inlined_call_operand.vmem [shape: f32[1,128], index: 7, kind: input, shape index: {}]
  %s8 = inlined_call_operand.vmem [shape: f32[1,128], index: 8, kind: input, shape index: {}]
  %s9 = inlined_call_operand.vmem [shape: f32[128,128], index: 9, kind: input, shape index: {}]
  %s10 = inlined_call_operand.vmem [shape: f32[1,128], index: 10, kind: input, shape index: {}]
  %s11 = inlined_call_operand.vmem [shape: f32[1,128], index: 11, kind: input, shape index: {}]
  %s12 = inlined_call_operand.vmem [shape: f32[1,128], index: 12, kind: input, shape index: {}]
  %s13 = inlined_call_operand.vmem [shape: f32[128,128], index: 13, kind: input, shape index: {}]
  %s14 = inlined_call_operand.vmem [shape: f32[1,128], index: 14, kind: input, shape index: {}]
  %s15 = inlined_call_operand.hbm [shape: f32[300,128], index: 15, kind: output, shape index: {}]
  %s16 = sld [smem:[#allocation0]]
  $region93: #{tpu_custom_call.1} parent=0
    _
  %s18 = ssub.s32 1, %s16
  %s19 = scalar_select 0, %s18, %s16
  $region1: #{tpu_custom_call.1} parent=0
    #allocation2 [shape = 'u8[155648]{0}', space=vmem, size = 0x26000, scoped, tag = 'output window, operand 0']
    #allocation3 [shape = 's32[2]{0}', space=sflag, size = 0x8, scoped, tag = 'scoped memory for tpu_custom_call.1']
    %20 = vsyncpa [#allocation3], 0
    %s21 = scalar_lea.sflag [#allocation3], 1
    %22 = vsyncpa %s21, 0
    loop: start=0, step=1, limit=4
    $region2: #{tpu_custom_call.1} parent=1 // loop_pre_header
      _
    $region3: #{tpu_custom_call.1} parent=1 // loop_header
      %s24 = sphi 0, %s28
      %p25 = scmp.ge.s32.totalorder %s24, 4
      %s34 = sphi 0, %s36
      %s37 = sphi 0, %s34
      %s38 = sphi 0, %s37
      %s54 = sphi 0, %s38
      %s58 = sphi 0, %s58
      %s60 = sphi 0, %s58
      %s61 = sphi 0, %s60
      %s75 = sphi 0, %s61
      %s79 = sphi 0, %s79
      %s81 = sphi 0, %s79
      %s82 = sphi 0, %s81
      %s96 = sphi 0, %s82
      %s100 = sphi 0, %s100
      %s102 = sphi 0, %s100
      %s103 = sphi 0, %s102
      %s117 = sphi 0, %s103
      %s121 = sphi 0, %s121
      %s123 = sphi 0, %s121
      %s124 = sphi 0, %s123
      %s138 = sphi 0, %s124
      %s142 = sphi 0, %s142
      %s144 = sphi 0, %s142
      %s145 = sphi 0, %s144
      %s159 = sphi 0, %s145
      %s163 = sphi 0, %s163
      %s165 = sphi 0, %s163
      %s166 = sphi 0, %s165
      %s180 = sphi 0, %s166
      %s184 = sphi 0, %s184
      %s186 = sphi 0, %s184
      %s187 = sphi 0, %s186
      %s201 = sphi 0, %s187
      %s205 = sphi 0, %s205
      %s207 = sphi 0, %s205
      %s208 = sphi 0, %s207
      %s222 = sphi 0, %s208
      %s226 = sphi 0, %s226
      %s228 = sphi 0, %s226
      %s229 = sphi 0, %s228
      %s243 = sphi 0, %s229
      %s247 = sphi 0, %s247
      %s249 = sphi 0, %s247
      %s250 = sphi 0, %s249
      %s264 = sphi 0, %s250
      %s268 = sphi 0, %s268
      %s270 = sphi 0, %s268
      %s271 = sphi 0, %s270
      %s285 = sphi 0, %s271
      %s289 = sphi 0, %s289
      %s291 = sphi 0, %s289
      %s292 = sphi 0, %s291
      %s306 = sphi 0, %s292
      %s310 = sphi 0, %s310
      %s312 = sphi 0, %s310
      %s313 = sphi 0, %s312
      %s327 = sphi 0, %s313
      %s331 = sphi 0, %s331
      %s333 = sphi 0, %s331
      %s334 = sphi 0, %s333
      %s348 = sphi 0, %s334
      %s354 = sphi 0, %s356
      %s357 = sphi 0, %s354
      %s358 = sphi 0, %s357
      %s374 = sphi 0, %s358
    $region4: #{tpu_custom_call.1} parent=1 // loop_header_branch
      %27 = sbr.rel (%p25) target = $region8
    $region5: #{tpu_custom_call.1} parent=1 // loop_body
      %s29 = ssub.s32 %s24, 1
      %s30 = ssub.s32 %s24, 2
      %s31 = sadd.s32 %s24, 1
      %s32 = ssub.s32 %s24, %s31
      %p33 = scmp.eq.s32.totalorder %s32, 0
      %s35 = sadd.s32 %s34, 1
      %s36 = scalar_select %p33, %s34, %s35
      %p39 = pneg %p33
      %p40 = scmp.eq.s32.totalorder %s24, 1
      %p41 = por %p39, %p40
      %p42 = scmp.ne.s32.totalorder %s34, %s37
      %p43 = scmp.eq.s32.totalorder %s24, 0
      %p44 = por %p42, %p43
      %p45 = scmp.ne.s32.totalorder %s34, %s37
      %p46 = scmp.eq.s32.totalorder %s29, 1
      %p47 = por %p45, %p46
      %p48 = scmp.ne.s32.totalorder %s37, %s38
      %p49 = scmp.eq.s32.totalorder %s29, 0
      %p50 = por %p48, %p49
      %p51 = scmp.ne.s32.totalorder %s37, %s38
      %p52 = scmp.eq.s32.totalorder %s30, 1
      %p53 = por %p51, %p52
      %p55 = scmp.ne.s32.totalorder %s38, %s54
      %p56 = scmp.eq.s32.totalorder %s30, 0
      %p57 = por %p55, %p56
      %s59 = sadd.s32 %s58, 1
      %p62 = scmp.eq.s32.totalorder %s24, 1
      %p63 = scmp.ne.s32.totalorder %s58, %s60
      %p64 = scmp.eq.s32.totalorder %s24, 0
      %p65 = por %p63, %p64
      %p66 = scmp.ne.s32.totalorder %s58, %s60
      %p67 = scmp.eq.s32.totalorder %s29, 1
      %p68 = por %p66, %p67
      %p69 = scmp.ne.s32.totalorder %s60, %s61
      %p70 = scmp.eq.s32.totalorder %s29, 0
      %p71 = por %p69, %p70
      %p72 = scmp.ne.s32.totalorder %s60, %s61
      %p73 = scmp.eq.s32.totalorder %s30, 1
      %p74 = por %p72, %p73
      %p76 = scmp.ne.s32.totalorder %s61, %s75
      %p77 = scmp.eq.s32.totalorder %s30, 0
      %p78 = por %p76, %p77
      %s80 = sadd.s32 %s79, 1
      %p83 = scmp.eq.s32.totalorder %s24, 1
      %p84 = scmp.ne.s32.totalorder %s79, %s81
      %p85 = scmp.eq.s32.totalorder %s24, 0
      %p86 = por %p84, %p85
      %p87 = scmp.ne.s32.totalorder %s79, %s81
      %p88 = scmp.eq.s32.totalorder %s29, 1
      %p89 = por %p87, %p88
      %p90 = scmp.ne.s32.totalorder %s81, %s82
      %p91 = scmp.eq.s32.totalorder %s29, 0
      %p92 = por %p90, %p91
      %p93 = scmp.ne.s32.totalorder %s81, %s82
      %p94 = scmp.eq.s32.totalorder %s30, 1
      %p95 = por %p93, %p94
      %p97 = scmp.ne.s32.totalorder %s82, %s96
      %p98 = scmp.eq.s32.totalorder %s30, 0
      %p99 = por %p97, %p98
      %s101 = sadd.s32 %s100, 1
      %p104 = scmp.eq.s32.totalorder %s24, 1
      %p105 = scmp.ne.s32.totalorder %s100, %s102
      %p106 = scmp.eq.s32.totalorder %s24, 0
      %p107 = por %p105, %p106
      %p108 = scmp.ne.s32.totalorder %s100, %s102
      %p109 = scmp.eq.s32.totalorder %s29, 1
      %p110 = por %p108, %p109
      %p111 = scmp.ne.s32.totalorder %s102, %s103
      %p112 = scmp.eq.s32.totalorder %s29, 0
      %p113 = por %p111, %p112
      %p114 = scmp.ne.s32.totalorder %s102, %s103
      %p115 = scmp.eq.s32.totalorder %s30, 1
      %p116 = por %p114, %p115
      %p118 = scmp.ne.s32.totalorder %s103, %s117
      %p119 = scmp.eq.s32.totalorder %s30, 0
      %p120 = por %p118, %p119
      %s122 = sadd.s32 %s121, 1
      %p125 = scmp.eq.s32.totalorder %s24, 1
      %p126 = scmp.ne.s32.totalorder %s121, %s123
      %p127 = scmp.eq.s32.totalorder %s24, 0
      %p128 = por %p126, %p127
      %p129 = scmp.ne.s32.totalorder %s121, %s123
      %p130 = scmp.eq.s32.totalorder %s29, 1
      %p131 = por %p129, %p130
      %p132 = scmp.ne.s32.totalorder %s123, %s124
      %p133 = scmp.eq.s32.totalorder %s29, 0
      %p134 = por %p132, %p133
      %p135 = scmp.ne.s32.totalorder %s123, %s124
      %p136 = scmp.eq.s32.totalorder %s30, 1
      %p137 = por %p135, %p136
      %p139 = scmp.ne.s32.totalorder %s124, %s138
      %p140 = scmp.eq.s32.totalorder %s30, 0
      %p141 = por %p139, %p140
      %s143 = sadd.s32 %s142, 1
      %p146 = scmp.eq.s32.totalorder %s24, 1
      %p147 = scmp.ne.s32.totalorder %s142, %s144
      %p148 = scmp.eq.s32.totalorder %s24, 0
      %p149 = por %p147, %p148
      %p150 = scmp.ne.s32.totalorder %s142, %s144
      %p151 = scmp.eq.s32.totalorder %s29, 1
      %p152 = por %p150, %p151
      %p153 = scmp.ne.s32.totalorder %s144, %s145
      %p154 = scmp.eq.s32.totalorder %s29, 0
      %p155 = por %p153, %p154
      %p156 = scmp.ne.s32.totalorder %s144, %s145
      %p157 = scmp.eq.s32.totalorder %s30, 1
      %p158 = por %p156, %p157
      %p160 = scmp.ne.s32.totalorder %s145, %s159
      %p161 = scmp.eq.s32.totalorder %s30, 0
      %p162 = por %p160, %p161
      %s164 = sadd.s32 %s163, 1
      %p167 = scmp.eq.s32.totalorder %s24, 1
      %p168 = scmp.ne.s32.totalorder %s163, %s165
      %p169 = scmp.eq.s32.totalorder %s24, 0
      %p170 = por %p168, %p169
      %p171 = scmp.ne.s32.totalorder %s163, %s165
      %p172 = scmp.eq.s32.totalorder %s29, 1
      %p173 = por %p171, %p172
      %p174 = scmp.ne.s32.totalorder %s165, %s166
      %p175 = scmp.eq.s32.totalorder %s29, 0
      %p176 = por %p174, %p175
      %p177 = scmp.ne.s32.totalorder %s165, %s166
      %p178 = scmp.eq.s32.totalorder %s30, 1
      %p179 = por %p177, %p178
      %p181 = scmp.ne.s32.totalorder %s166, %s180
      %p182 = scmp.eq.s32.totalorder %s30, 0
      %p183 = por %p181, %p182
      %s185 = sadd.s32 %s184, 1
      %p188 = scmp.eq.s32.totalorder %s24, 1
      %p189 = scmp.ne.s32.totalorder %s184, %s186
      %p190 = scmp.eq.s32.totalorder %s24, 0
      %p191 = por %p189, %p190
      %p192 = scmp.ne.s32.totalorder %s184, %s186
      %p193 = scmp.eq.s32.totalorder %s29, 1
      %p194 = por %p192, %p193
      %p195 = scmp.ne.s32.totalorder %s186, %s187
      %p196 = scmp.eq.s32.totalorder %s29, 0
      %p197 = por %p195, %p196
      %p198 = scmp.ne.s32.totalorder %s186, %s187
      %p199 = scmp.eq.s32.totalorder %s30, 1
      %p200 = por %p198, %p199
      %p202 = scmp.ne.s32.totalorder %s187, %s201
      %p203 = scmp.eq.s32.totalorder %s30, 0
      %p204 = por %p202, %p203
      %s206 = sadd.s32 %s205, 1
      %p209 = scmp.eq.s32.totalorder %s24, 1
      %p210 = scmp.ne.s32.totalorder %s205, %s207
      %p211 = scmp.eq.s32.totalorder %s24, 0
      %p212 = por %p210, %p211
      %p213 = scmp.ne.s32.totalorder %s205, %s207
      %p214 = scmp.eq.s32.totalorder %s29, 1
      %p215 = por %p213, %p214
      %p216 = scmp.ne.s32.totalorder %s207, %s208
      %p217 = scmp.eq.s32.totalorder %s29, 0
      %p218 = por %p216, %p217
      %p219 = scmp.ne.s32.totalorder %s207, %s208
      %p220 = scmp.eq.s32.totalorder %s30, 1
      %p221 = por %p219, %p220
      %p223 = scmp.ne.s32.totalorder %s208, %s222
      %p224 = scmp.eq.s32.totalorder %s30, 0
      %p225 = por %p223, %p224
      %s227 = sadd.s32 %s226, 1
      %p230 = scmp.eq.s32.totalorder %s24, 1
      %p231 = scmp.ne.s32.totalorder %s226, %s228
      %p232 = scmp.eq.s32.totalorder %s24, 0
      %p233 = por %p231, %p232
      %p234 = scmp.ne.s32.totalorder %s226, %s228
      %p235 = scmp.eq.s32.totalorder %s29, 1
      %p236 = por %p234, %p235
      %p237 = scmp.ne.s32.totalorder %s228, %s229
      %p238 = scmp.eq.s32.totalorder %s29, 0
      %p239 = por %p237, %p238
      %p240 = scmp.ne.s32.totalorder %s228, %s229
      %p241 = scmp.eq.s32.totalorder %s30, 1
      %p242 = por %p240, %p241
      %p244 = scmp.ne.s32.totalorder %s229, %s243
      %p245 = scmp.eq.s32.totalorder %s30, 0
      %p246 = por %p244, %p245
      %s248 = sadd.s32 %s247, 1
      %p251 = scmp.eq.s32.totalorder %s24, 1
      %p252 = scmp.ne.s32.totalorder %s247, %s249
      %p253 = scmp.eq.s32.totalorder %s24, 0
      %p254 = por %p252, %p253
      %p255 = scmp.ne.s32.totalorder %s247, %s249
      %p256 = scmp.eq.s32.totalorder %s29, 1
      %p257 = por %p255, %p256
      %p258 = scmp.ne.s32.totalorder %s249, %s250
      %p259 = scmp.eq.s32.totalorder %s29, 0
      %p260 = por %p258, %p259
      %p261 = scmp.ne.s32.totalorder %s249, %s250
      %p262 = scmp.eq.s32.totalorder %s30, 1
      %p263 = por %p261, %p262
      %p265 = scmp.ne.s32.totalorder %s250, %s264
      %p266 = scmp.eq.s32.totalorder %s30, 0
      %p267 = por %p265, %p266
      %s269 = sadd.s32 %s268, 1
      %p272 = scmp.eq.s32.totalorder %s24, 1
      %p273 = scmp.ne.s32.totalorder %s268, %s270
      %p274 = scmp.eq.s32.totalorder %s24, 0
      %p275 = por %p273, %p274
      %p276 = scmp.ne.s32.totalorder %s268, %s270
      %p277 = scmp.eq.s32.totalorder %s29, 1
      %p278 = por %p276, %p277
      %p279 = scmp.ne.s32.totalorder %s270, %s271
      %p280 = scmp.eq.s32.totalorder %s29, 0
      %p281 = por %p279, %p280
      %p282 = scmp.ne.s32.totalorder %s270, %s271
      %p283 = scmp.eq.s32.totalorder %s30, 1
      %p284 = por %p282, %p283
      %p286 = scmp.ne.s32.totalorder %s271, %s285
      %p287 = scmp.eq.s32.totalorder %s30, 0
      %p288 = por %p286, %p287
      %s290 = sadd.s32 %s289, 1
      %p293 = scmp.eq.s32.totalorder %s24, 1
      %p294 = scmp.ne.s32.totalorder %s289, %s291
      %p295 = scmp.eq.s32.totalorder %s24, 0
      %p296 = por %p294, %p295
      %p297 = scmp.ne.s32.totalorder %s289, %s291
      %p298 = scmp.eq.s32.totalorder %s29, 1
      %p299 = por %p297, %p298
      %p300 = scmp.ne.s32.totalorder %s291, %s292
      %p301 = scmp.eq.s32.totalorder %s29, 0
      %p302 = por %p300, %p301
      %p303 = scmp.ne.s32.totalorder %s291, %s292
      %p304 = scmp.eq.s32.totalorder %s30, 1
      %p305 = por %p303, %p304
      %p307 = scmp.ne.s32.totalorder %s292, %s306
      %p308 = scmp.eq.s32.totalorder %s30, 0
      %p309 = por %p307, %p308
      %s311 = sadd.s32 %s310, 1
      %p314 = scmp.eq.s32.totalorder %s24, 1
      %p315 = scmp.ne.s32.totalorder %s310, %s312
      %p316 = scmp.eq.s32.totalorder %s24, 0
      %p317 = por %p315, %p316
      %p318 = scmp.ne.s32.totalorder %s310, %s312
      %p319 = scmp.eq.s32.totalorder %s29, 1
      %p320 = por %p318, %p319
      %p321 = scmp.ne.s32.totalorder %s312, %s313
      %p322 = scmp.eq.s32.totalorder %s29, 0
      %p323 = por %p321, %p322
      %p324 = scmp.ne.s32.totalorder %s312, %s313
      %p325 = scmp.eq.s32.totalorder %s30, 1
      %p326 = por %p324, %p325
      %p328 = scmp.ne.s32.totalorder %s313, %s327
      %p329 = scmp.eq.s32.totalorder %s30, 0
      %p330 = por %p328, %p329
      %s332 = sadd.s32 %s331, 1
      %p335 = scmp.eq.s32.totalorder %s24, 1
      %p336 = scmp.ne.s32.totalorder %s331, %s333
      %p337 = scmp.eq.s32.totalorder %s24, 0
      %p338 = por %p336, %p337
      %p339 = scmp.ne.s32.totalorder %s331, %s333
      %p340 = scmp.eq.s32.totalorder %s29, 1
      %p341 = por %p339, %p340
      %p342 = scmp.ne.s32.totalorder %s333, %s334
      %p343 = scmp.eq.s32.totalorder %s29, 0
      %p344 = por %p342, %p343
      %p345 = scmp.ne.s32.totalorder %s333, %s334
      %p346 = scmp.eq.s32.totalorder %s30, 1
      %p347 = por %p345, %p346
      %p349 = scmp.ne.s32.totalorder %s334, %s348
      %p350 = scmp.eq.s32.totalorder %s30, 0
      %p351 = por %p349, %p350
      %s352 = ssub.s32 %s24, %s31
      %p353 = scmp.eq.s32.totalorder %s352, 0
      %s355 = sadd.s32 %s354, 1
      %s356 = scalar_select %p353, %s354, %s355
      %p359 = pneg %p353
      %p360 = scmp.eq.s32.totalorder %s24, 1
      %p361 = por %p359, %p360
      %p362 = scmp.ne.s32.totalorder %s354, %s357
      %p363 = scmp.eq.s32.totalorder %s24, 0
      %p364 = por %p362, %p363
      %p365 = scmp.ne.s32.totalorder %s354, %s357
      %p366 = scmp.eq.s32.totalorder %s29, 1
      %p367 = por %p365, %p366
      %p368 = scmp.ne.s32.totalorder %s357, %s358
      %p369 = scmp.eq.s32.totalorder %s29, 0
      %p370 = por %p368, %p369
      %p371 = scmp.ne.s32.totalorder %s357, %s358
      %p372 = scmp.eq.s32.totalorder %s30, 1
      %p373 = por %p371, %p372
      %p375 = scmp.ne.s32.totalorder %s358, %s374
      %p376 = scmp.eq.s32.totalorder %s30, 0
      %p377 = por %p375, %p376
      %p378 = scmp.le.s32.totalorder 1, %s24
      %p379 = scmp.lt.s32.totalorder %s24, 3
      %p380 = pnand %p378, %p379
      %p381 = pneg %p380
      // Predicated region
      $region9: #{tpu_custom_call.1} parent=5 // pred_check
        _
      $region10: #{tpu_custom_call.1} parent=5 // pred_check_branch
        %383 = sbr.rel (%p380) target = $region12
      $region11: #{tpu_custom_call.1} parent=5 // pred_region
        %s384 = ssub.s32 %s24, 1
        // Predicated region
        $region13: #{tpu_custom_call.1} parent=11 // pred_check
          %p385 = pneg %p71
        $region14: #{tpu_custom_call.1} parent=11 // pred_check_branch
          %387 = sbr.rel (%p385) target = $region16
        $region15: #{tpu_custom_call.1} parent=11 // pred_region
          _
        $region16: #{tpu_custom_call.1} parent=11 // pred_fallthru
          _
        // Predicated region
        $region17: #{tpu_custom_call.1} parent=11 // pred_check
          %p388 = pneg %p92
        $region18: #{tpu_custom_call.1} parent=11 // pred_check_branch
          %390 = sbr.rel (%p388) target = $region20
        $region19: #{tpu_custom_call.1} parent=11 // pred_region
          _
        $region20: #{tpu_custom_call.1} parent=11 // pred_fallthru
          _
        // Predicated region
        $region21: #{tpu_custom_call.1} parent=11 // pred_check
          %p391 = pneg %p113
        $region22: #{tpu_custom_call.1} parent=11 // pred_check_branch
          %393 = sbr.rel (%p391) target = $region24
        $region23: #{tpu_custom_call.1} parent=11 // pred_region
          _
        $region24: #{tpu_custom_call.1} parent=11 // pred_fallthru
          _
        // Predicated region
        $region25: #{tpu_custom_call.1} parent=11 // pred_check
          %p394 = pneg %p134
        $region26: #{tpu_custom_call.1} parent=11 // pred_check_branch
          %396 = sbr.rel (%p394) target = $region28
        $region27: #{tpu_custom_call.1} parent=11 // pred_region
          _
        $region28: #{tpu_custom_call.1} parent=11 // pred_fallthru
          _
        // Predicated region
        $region29: #{tpu_custom_call.1} parent=11 // pred_check
          %p397 = pneg %p155
        $region30: #{tpu_custom_call.1} parent=11 // pred_check_branch
          %399 = sbr.rel (%p397) target = $region32
        $region31: #{tpu_custom_call.1} parent=11 // pred_region
          _
        $region32: #{tpu_custom_call.1} parent=11 // pred_fallthru
          _
        // Predicated region
        $region33: #{tpu_custom_call.1} parent=11 // pred_check
          %p400 = pneg %p176
        $region34: #{tpu_custom_call.1} parent=11 // pred_check_branch
          %402 = sbr.rel (%p400) target = $region36
        $region35: #{tpu_custom_call.1} parent=11 // pred_region
          _
        $region36: #{tpu_custom_call.1} parent=11 // pred_fallthru
          _
        // Predicated region
        $region37: #{tpu_custom_call.1} parent=11 // pred_check
          %p403 = pneg %p197
        $region38: #{tpu_custom_call.1} parent=11 // pred_check_branch
          %405 = sbr.rel (%p403) target = $region40
        $region39: #{tpu_custom_call.1} parent=11 // pred_region
          _
        $region40: #{tpu_custom_call.1} parent=11 // pred_fallthru
          _
        // Predicated region
        $region41: #{tpu_custom_call.1} parent=11 // pred_check
          %p406 = pneg %p218
        $region42: #{tpu_custom_call.1} parent=11 // pred_check_branch
          %408 = sbr.rel (%p406) target = $region44
        $region43: #{tpu_custom_call.1} parent=11 // pred_region
          _
        $region44: #{tpu_custom_call.1} parent=11 // pred_fallthru
          _
        // Predicated region
        $region45: #{tpu_custom_call.1} parent=11 // pred_check
          %p409 = pneg %p239
        $region46: #{tpu_custom_call.1} parent=11 // pred_check_branch
          %411 = sbr.rel (%p409) target = $region48
        $region47: #{tpu_custom_call.1} parent=11 // pred_region
          _
        $region48: #{tpu_custom_call.1} parent=11 // pred_fallthru
          _
        // Predicated region
        $region49: #{tpu_custom_call.1} parent=11 // pred_check
          %p412 = pneg %p260
        $region50: #{tpu_custom_call.1} parent=11 // pred_check_branch
          %414 = sbr.rel (%p412) target = $region52
        $region51: #{tpu_custom_call.1} parent=11 // pred_region
          _
        $region52: #{tpu_custom_call.1} parent=11 // pred_fallthru
          _
        // Predicated region
        $region53: #{tpu_custom_call.1} parent=11 // pred_check
          %p415 = pneg %p281
        $region54: #{tpu_custom_call.1} parent=11 // pred_check_branch
          %417 = sbr.rel (%p415) target = $region56
        $region55: #{tpu_custom_call.1} parent=11 // pred_region
          _
        $region56: #{tpu_custom_call.1} parent=11 // pred_fallthru
          _
        // Predicated region
        $region57: #{tpu_custom_call.1} parent=11 // pred_check
          %p418 = pneg %p302
        $region58: #{tpu_custom_call.1} parent=11 // pred_check_branch
          %420 = sbr.rel (%p418) target = $region60
        $region59: #{tpu_custom_call.1} parent=11 // pred_region
          _
        $region60: #{tpu_custom_call.1} parent=11 // pred_fallthru
          _
        // Predicated region
        $region61: #{tpu_custom_call.1} parent=11 // pred_check
          %p421 = pneg %p323
        $region62: #{tpu_custom_call.1} parent=11 // pred_check_branch
          %423 = sbr.rel (%p421) target = $region64
        $region63: #{tpu_custom_call.1} parent=11 // pred_region
          _
        $region64: #{tpu_custom_call.1} parent=11 // pred_fallthru
          _
        // Predicated region
        $region65: #{tpu_custom_call.1} parent=11 // pred_check
          %p424 = pneg %p344
        $region66: #{tpu_custom_call.1} parent=11 // pred_check_branch
          %426 = sbr.rel (%p424) target = $region68
        $region67: #{tpu_custom_call.1} parent=11 // pred_region
          _
        $region68: #{tpu_custom_call.1} parent=11 // pred_fallthru
          _
      $region12: #{tpu_custom_call.1} parent=5 // pred_fallthru
        _
      %p427 = scmp.lt.s32.totalorder %s24, 2
      // Predicated region
      $region69: #{tpu_custom_call.1} parent=5 // pred_check
        %p428 = pneg %p427
      $region70: #{tpu_custom_call.1} parent=5 // pred_check_branch
        %430 = sbr.rel (%p428) target = $region72
      $region71: #{tpu_custom_call.1} parent=5 // pred_region
        // Predicated region
        $region73: #{tpu_custom_call.1} parent=71 // pred_check
          %p431 = pneg %p44
        $region74: #{tpu_custom_call.1} parent=71 // pred_check_branch
          %433 = sbr.rel (%p431) target = $region76
        $region75: #{tpu_custom_call.1} parent=71 // pred_region
          %s434 = smul.u32 19, %s24
          %p435 = scmp.lt.s32.totalorder %s434, 37
          %s436 = scalar_select %p435, %s434, 37
          %s437 = smul.addr %s436, 8
          %s438 = scalar_lea.vmem %s0, %s437
          %s439 = smul.u32 19, %s24
        $region76: #{tpu_custom_call.1} parent=71 // pred_fallthru
          _
      $region72: #{tpu_custom_call.1} parent=5 // pred_fallthru
        _
      %p440 = scmp.le.s32.totalorder 1, %s24
      %p441 = scmp.lt.s32.totalorder %s24, 3
      %p442 = pnand %p440, %p441
      %p443 = pneg %p442
      // Predicated region
      $region77: #{tpu_custom_call.1} parent=5 // pred_check
        _
      $region78: #{tpu_custom_call.1} parent=5 // pred_check_branch
        %445 = sbr.rel (%p442) target = $region80
      $region79: #{tpu_custom_call.1} parent=5 // pred_region
        %s446 = ssub.s32 %s24, 1
        %s447 = smul.u32 19, %s29
        %p448 = scmp.lt.s32.totalorder %s447, 37
        %s449 = scalar_select %p448, %s447, 37
        %s450 = smul.addr %s449, 8
        %s451 = scalar_lea.vmem %s0, %s450
        %p452 = pneg %p50
        %p453 = pneg %p47
        %p454 = pneg %p71
        %p455 = pneg %p68
        %p456 = pneg %p92
        %p457 = pneg %p89
        %p458 = pneg %p113
        %p459 = pneg %p110
        %p460 = pneg %p134
        %p461 = pneg %p131
        %p462 = pneg %p155
        %p463 = pneg %p152
        %p464 = pneg %p176
        %p465 = pneg %p173
        %p466 = pneg %p197
        %p467 = pneg %p194
        %p468 = pneg %p218
        %p469 = pneg %p215
        %p470 = pneg %p239
        %p471 = pneg %p236
        %p472 = pneg %p260
        %p473 = pneg %p257
        %p474 = pneg %p281
        %p475 = pneg %p278
        %p476 = pneg %p302
        %p477 = pneg %p299
        %p478 = pneg %p323
        %p479 = pneg %p320
        %p480 = pneg %p344
        %p481 = pneg %p341
        %p482 = pneg %p370
        %p483 = pneg %p367
        %s484 = sand.u32 %s357, 1
        %s485 = scalar_lea.sflag [#allocation3], %s484
        %s486 = sand.u32 %s357, 1
        %s487 = smul.addr %s486, 152
        %s488 = scalar_lea.vmem [#allocation2], %s487
        %s489 = smul.u32 19, %s29
        %p490 = scmp.lt.s32.totalorder %s489, 37
        %s491 = scalar_select %p490, %s489, 37
        %s492 = smul.addr %s491, 8
        %s493 = scalar_lea.vmem %s0, %s492
        %s494 = smul.u32 19, %s29
        %s495 = smul.u32 19, %s29
        %v496 = vld [vmem:[%s493] sm:$0xff]
        %v497 = vld [vmem:[%s493 + $0x8] sm:$0xff]
        %v498 = vld [vmem:[%s493 + $0x10] sm:$0xff]
        %v499 = vld [vmem:[%s493 + $0x18] sm:$0xff]
        %v500 = vld [vmem:[%s493 + $0x20] sm:$0xff]
        %v501 = vld [vmem:[%s493 + $0x28] sm:$0xff]
        %v502 = vld [vmem:[%s493 + $0x30] sm:$0xff]
        %v503 = vld [vmem:[%s493 + $0x38] sm:$0xff]
        %v504 = vld [vmem:[%s493 + $0x40] sm:$0xff]
        %v505 = vld [vmem:[%s493 + $0x48] sm:$0xff]
        %v506 = vld [vmem:[%s493 + $0x50] sm:$0xff]
        %v507 = vld [vmem:[%s493 + $0x58] sm:$0xff]
        %v508 = vld [vmem:[%s493 + $0x60] sm:$0xff]
        %v509 = vld [vmem:[%s493 + $0x68] sm:$0xff]
        %v510 = vld [vmem:[%s493 + $0x70] sm:$0xff]
        %v511 = vld [vmem:[%s493 + $0x78] sm:$0xff]
        %v512 = vld [vmem:[%s493 + $0x80] sm:$0xff]
        %v513 = vld [vmem:[%s493 + $0x88] sm:$0xff]
        %v514 = vld [vmem:[%s493 + $0x90] sm:$0xff]
        %v515 = vld [vmem:[%s1] sm:$0xff]
        %v516 = vld [vmem:[%s1 + $0x8] sm:$0xff]
        %v517 = vld [vmem:[%s1 + $0x10] sm:$0xff]
        %v518 = vld [vmem:[%s1 + $0x18] sm:$0xff]
        %v519 = vld [vmem:[%s1 + $0x20] sm:$0xff]
        %v520 = vld [vmem:[%s1 + $0x28] sm:$0xff]
        %v521 = vld [vmem:[%s2] sm:$0x1]
        %v523 = vperm.slane %v521, 0
        %vm525 = vcmask 392192
        %v527 = vsel %vm525, %v496, 0
        %v530 = vsel %vm525, %v497, 0
        %v533 = vsel %vm525, %v498, 0
        %v536 = vsel %vm525, %v499, 0
        %v539 = vsel %vm525, %v500, 0
        %v542 = vsel %vm525, %v501, 0
        %v545 = vsel %vm525, %v502, 0
        %v548 = vsel %vm525, %v503, 0
        %v551 = vsel %vm525, %v504, 0
        %v554 = vsel %vm525, %v505, 0
        %v557 = vsel %vm525, %v506, 0
        %v560 = vsel %vm525, %v507, 0
        %v563 = vsel %vm525, %v508, 0
        %v566 = vsel %vm525, %v509, 0
        %v569 = vsel %vm525, %v510, 0
        %v572 = vsel %vm525, %v511, 0
        %v575 = vsel %vm525, %v512, 0
        %v578 = vsel %vm525, %v513, 0
        %v581 = vsel %vm525, %v514, 0
        %583 = vmatpush.msra.mxu0 0.0
        %584 = vmatpush.msra.mxu0 0.0
        %585 = vmatpush.msra.mxu0 0.0
        %586 = vmatpush.msra.mxu0 0.0
        %587 = vmatpush.msra.mxu0 0.0
        %588 = vmatpush.msra.mxu0 0.0
        %589 = vmatpush.msra.mxu0 0.0
        %590 = vmatpush.msra.mxu0 0.0
        %591 = vmatpush.msra.mxu0 0.0
        %592 = vmatpush.msra.mxu0 0.0
        %593 = vmatpush.msra.mxu0 %v520
        %594 = vmatpush.msra.mxu0 %v519
        %595 = vmatpush.msra.mxu0 %v518
        %596 = vmatpush.msra.mxu0 %v517
        %597 = vmatpush.msra.mxu0 %v516
        %598 = vmatpush.msra.mxu0 %v515
        %599 = vmatmul.f32.gmra.mxu0 %v527
        %v600 = vpop.f32.mrf.mxu0
        %v601 = vadd.f32 %v523, %v600
        %602 = vmatmul.f32.gmra.mxu0 %v530
        %v603 = vpop.f32.mrf.mxu0
        %v604 = vadd.f32 %v523, %v603
        %605 = vmatmul.f32.gmra.mxu0 %v533
        %v606 = vpop.f32.mrf.mxu0
        %v607 = vadd.f32 %v523, %v606
        %608 = vmatmul.f32.gmra.mxu0 %v536
        %v609 = vpop.f32.mrf.mxu0
        %v610 = vadd.f32 %v523, %v609
        %611 = vmatmul.f32.gmra.mxu0 %v539
        %v612 = vpop.f32.mrf.mxu0
        %v613 = vadd.f32 %v523, %v612
        %614 = vmatmul.f32.gmra.mxu0 %v542
        %v615 = vpop.f32.mrf.mxu0
        %v616 = vadd.f32 %v523, %v615
        %617 = vmatmul.f32.gmra.mxu0 %v545
        %v618 = vpop.f32.mrf.mxu0
        %v619 = vadd.f32 %v523, %v618
        %620 = vmatmul.f32.gmra.mxu0 %v548
        %v621 = vpop.f32.mrf.mxu0
        %v622 = vadd.f32 %v523, %v621
        %623 = vmatmul.f32.gmra.mxu0 %v551
        %v624 = vpop.f32.mrf.mxu0
        %v625 = vadd.f32 %v523, %v624
        %626 = vmatmul.f32.gmra.mxu0 %v554
        %v627 = vpop.f32.mrf.mxu0
        %v628 = vadd.f32 %v523, %v627
        %629 = vmatmul.f32.gmra.mxu0 %v557
        %v630 = vpop.f32.mrf.mxu0
        %v631 = vadd.f32 %v523, %v630
        %632 = vmatmul.f32.gmra.mxu0 %v560
        %v633 = vpop.f32.mrf.mxu0
        %v634 = vadd.f32 %v523, %v633
        %635 = vmatmul.f32.gmra.mxu0 %v563
        %v636 = vpop.f32.mrf.mxu0
        %v637 = vadd.f32 %v523, %v636
        %638 = vmatmul.f32.gmra.mxu0 %v566
        %v639 = vpop.f32.mrf.mxu0
        %v640 = vadd.f32 %v523, %v639
        %641 = vmatmul.f32.gmra.mxu0 %v569
        %v642 = vpop.f32.mrf.mxu0
        %v643 = vadd.f32 %v523, %v642
        %644 = vmatmul.f32.gmra.mxu0 %v572
        %v645 = vpop.f32.mrf.mxu0
        %v646 = vadd.f32 %v523, %v645
        %647 = vmatmul.f32.gmra.mxu0 %v575
        %v648 = vpop.f32.mrf.mxu0
        %v649 = vadd.f32 %v523, %v648
        %650 = vmatmul.f32.gmra.mxu0 %v578
        %v651 = vpop.f32.mrf.mxu0
        %v652 = vadd.f32 %v523, %v651
        %653 = vmatmul.f32.gmra.mxu0 %v581
        %v654 = vpop.f32.mrf.mxu0
        %v655 = vadd.f32 %v523, %v654
        %656 = vdwg.mxu0
        %657 = vadd.xlane.f32.xlu0 %v601
        %v658 = vpop.xlane.xlu0 %657
        %659 = vadd.xlane.f32.xlu0 %v604
        %v660 = vpop.xlane.xlu0 %659
        %661 = vadd.xlane.f32.xlu0 %v607
        %v662 = vpop.xlane.xlu0 %661
        %663 = vadd.xlane.f32.xlu0 %v610
        %v664 = vpop.xlane.xlu0 %663
        %665 = vadd.xlane.f32.xlu0 %v613
        %v666 = vpop.xlane.xlu0 %665
        %667 = vadd.xlane.f32.xlu0 %v616
        %v668 = vpop.xlane.xlu0 %667
        %669 = vadd.xlane.f32.xlu0 %v619
        %v670 = vpop.xlane.xlu0 %669
        %671 = vadd.xlane.f32.xlu0 %v622
        %v672 = vpop.xlane.xlu0 %671
        %673 = vadd.xlane.f32.xlu0 %v625
        %v674 = vpop.xlane.xlu0 %673
        %675 = vadd.xlane.f32.xlu0 %v628
        %v676 = vpop.xlane.xlu0 %675
        %677 = vadd.xlane.f32.xlu0 %v631
        %v678 = vpop.xlane.xlu0 %677
        %679 = vadd.xlane.f32.xlu0 %v634
        %v680 = vpop.xlane.xlu0 %679
        %681 = vadd.xlane.f32.xlu0 %v637
        %v682 = vpop.xlane.xlu0 %681
        %683 = vadd.xlane.f32.xlu0 %v640
        %v684 = vpop.xlane.xlu0 %683
        %685 = vadd.xlane.f32.xlu0 %v643
        %v686 = vpop.xlane.xlu0 %685
        %687 = vadd.xlane.f32.xlu0 %v646
        %v688 = vpop.xlane.xlu0 %687
        %689 = vadd.xlane.f32.xlu0 %v649
        %v690 = vpop.xlane.xlu0 %689
        %691 = vadd.xlane.f32.xlu0 %v652
        %v692 = vpop.xlane.xlu0 %691
        %693 = vadd.xlane.f32.xlu0 %v655
        %v694 = vpop.xlane.xlu0 %693
        %v695 = vmul.f32 %v601, %v601
        %v696 = vmul.f32 %v604, %v604
        %v697 = vmul.f32 %v607, %v607
        %v698 = vmul.f32 %v610, %v610
        %v699 = vmul.f32 %v613, %v613
        %v700 = vmul.f32 %v616, %v616
        %v701 = vmul.f32 %v619, %v619
        %v702 = vmul.f32 %v622, %v622
        %v703 = vmul.f32 %v625, %v625
        %v704 = vmul.f32 %v628, %v628
        %v705 = vmul.f32 %v631, %v631
        %v706 = vmul.f32 %v634, %v634
        %v707 = vmul.f32 %v637, %v637
        %v708 = vmul.f32 %v640, %v640
        %v709 = vmul.f32 %v643, %v643
        %v710 = vmul.f32 %v646, %v646
        %v711 = vmul.f32 %v649, %v649
        %v712 = vmul.f32 %v652, %v652
        %v713 = vmul.f32 %v655, %v655
        %714 = vadd.xlane.f32.xlu0 %v695
        %v715 = vpop.xlane.xlu0 %714
        %716 = vadd.xlane.f32.xlu0 %v696
        %v717 = vpop.xlane.xlu0 %716
        %718 = vadd.xlane.f32.xlu0 %v697
        %v719 = vpop.xlane.xlu0 %718
        %720 = vadd.xlane.f32.xlu0 %v698
        %v721 = vpop.xlane.xlu0 %720
        %722 = vadd.xlane.f32.xlu0 %v699
        %v723 = vpop.xlane.xlu0 %722
        %724 = vadd.xlane.f32.xlu0 %v700
        %v725 = vpop.xlane.xlu0 %724
        %726 = vadd.xlane.f32.xlu0 %v701
        %v727 = vpop.xlane.xlu0 %726
        %728 = vadd.xlane.f32.xlu0 %v702
        %v729 = vpop.xlane.xlu0 %728
        %730 = vadd.xlane.f32.xlu0 %v703
        %v731 = vpop.xlane.xlu0 %730
        %732 = vadd.xlane.f32.xlu0 %v704
        %v733 = vpop.xlane.xlu0 %732
        %734 = vadd.xlane.f32.xlu0 %v705
        %v735 = vpop.xlane.xlu0 %734
        %736 = vadd.xlane.f32.xlu0 %v706
        %v737 = vpop.xlane.xlu0 %736
        %738 = vadd.xlane.f32.xlu0 %v707
        %v739 = vpop.xlane.xlu0 %738
        %740 = vadd.xlane.f32.xlu0 %v708
        %v741 = vpop.xlane.xlu0 %740
        %742 = vadd.xlane.f32.xlu0 %v709
        %v743 = vpop.xlane.xlu0 %742
        %744 = vadd.xlane.f32.xlu0 %v710
        %v745 = vpop.xlane.xlu0 %744
        %746 = vadd.xlane.f32.xlu0 %v711
        %v747 = vpop.xlane.xlu0 %746
        %748 = vadd.xlane.f32.xlu0 %v712
        %v749 = vpop.xlane.xlu0 %748
        %750 = vadd.xlane.f32.xlu0 %v713
        %v751 = vpop.xlane.xlu0 %750
        %v752 = vmul.f32 %v658, 0.010416667
        %v753 = vmul.f32 %v660, 0.010416667
        %v754 = vmul.f32 %v662, 0.010416667
        %v755 = vmul.f32 %v664, 0.010416667
        %v756 = vmul.f32 %v666, 0.010416667
        %v757 = vmul.f32 %v668, 0.010416667
        %v758 = vmul.f32 %v670, 0.010416667
        %v759 = vmul.f32 %v672, 0.010416667
        %v760 = vmul.f32 %v674, 0.010416667
        %v761 = vmul.f32 %v676, 0.010416667
        %v762 = vmul.f32 %v678, 0.010416667
        %v763 = vmul.f32 %v680, 0.010416667
        %v764 = vmul.f32 %v682, 0.010416667
        %v765 = vmul.f32 %v684, 0.010416667
        %v766 = vmul.f32 %v686, 0.010416667
        %v767 = vmul.f32 %v688, 0.010416667
        %v768 = vmul.f32 %v690, 0.010416667
        %v769 = vmul.f32 %v692, 0.010416667
        %v770 = vmul.f32 %v694, 0.010416667
        %v771 = vmul.f32 %v715, 0.010416667
        %v772 = vmul.f32 %v717, 0.010416667
        %v773 = vmul.f32 %v719, 0.010416667
        %v774 = vmul.f32 %v721, 0.010416667
        %v775 = vmul.f32 %v723, 0.010416667
        %v776 = vmul.f32 %v725, 0.010416667
        %v777 = vmul.f32 %v727, 0.010416667
        %v778 = vmul.f32 %v729, 0.010416667
        %v779 = vmul.f32 %v731, 0.010416667
        %v780 = vmul.f32 %v733, 0.010416667
        %v781 = vmul.f32 %v735, 0.010416667
        %v782 = vmul.f32 %v737, 0.010416667
        %v783 = vmul.f32 %v739, 0.010416667
        %v784 = vmul.f32 %v741, 0.010416667
        %v785 = vmul.f32 %v743, 0.010416667
        %v786 = vmul.f32 %v745, 0.010416667
        %v787 = vmul.f32 %v747, 0.010416667
        %v788 = vmul.f32 %v749, 0.010416667
        %v789 = vmul.f32 %v751, 0.010416667
        %v790 = vmul.f32 %v752, %v752
        %v791 = vmul.f32 %v753, %v753
        %v792 = vmul.f32 %v754, %v754
        %v793 = vmul.f32 %v755, %v755
        %v794 = vmul.f32 %v756, %v756
        %v795 = vmul.f32 %v757, %v757
        %v796 = vmul.f32 %v758, %v758
        %v797 = vmul.f32 %v759, %v759
        %v798 = vmul.f32 %v760, %v760
        %v799 = vmul.f32 %v761, %v761
        %v800 = vmul.f32 %v762, %v762
        %v801 = vmul.f32 %v763, %v763
        %v802 = vmul.f32 %v764, %v764
        %v803 = vmul.f32 %v765, %v765
        %v804 = vmul.f32 %v766, %v766
        %v805 = vmul.f32 %v767, %v767
        %v806 = vmul.f32 %v768, %v768
        %v807 = vmul.f32 %v769, %v769
        %v808 = vmul.f32 %v770, %v770
        %v809 = vsub.f32 %v771, %v790
        %v810 = vsub.f32 %v772, %v791
        %v811 = vsub.f32 %v773, %v792
        %v812 = vsub.f32 %v774, %v793
        %v813 = vsub.f32 %v775, %v794
        %v814 = vsub.f32 %v776, %v795
        %v815 = vsub.f32 %v777, %v796
        %v816 = vsub.f32 %v778, %v797
        %v817 = vsub.f32 %v779, %v798
        %v818 = vsub.f32 %v780, %v799
        %v819 = vsub.f32 %v781, %v800
        %v820 = vsub.f32 %v782, %v801
        %v821 = vsub.f32 %v783, %v802
        %v822 = vsub.f32 %v784, %v803
        %v823 = vsub.f32 %v785, %v804
        %v824 = vsub.f32 %v786, %v805
        %v825 = vsub.f32 %v787, %v806
        %v826 = vsub.f32 %v788, %v807
        %v827 = vsub.f32 %v789, %v808
        %v828 = vmax.f32 %v809, 0.0
        %v829 = vmax.f32 %v810, 0.0
        %v830 = vmax.f32 %v811, 0.0
        %v831 = vmax.f32 %v812, 0.0
        %v832 = vmax.f32 %v813, 0.0
        %v833 = vmax.f32 %v814, 0.0
        %v834 = vmax.f32 %v815, 0.0
        %v835 = vmax.f32 %v816, 0.0
        %v836 = vmax.f32 %v817, 0.0
        %v837 = vmax.f32 %v818, 0.0
        %v838 = vmax.f32 %v819, 0.0
        %v839 = vmax.f32 %v820, 0.0
        %v840 = vmax.f32 %v821, 0.0
        %v841 = vmax.f32 %v822, 0.0
        %v842 = vmax.f32 %v823, 0.0
        %v843 = vmax.f32 %v824, 0.0
        %v844 = vmax.f32 %v825, 0.0
        %v845 = vmax.f32 %v826, 0.0
        %v846 = vmax.f32 %v827, 0.0
        %v847 = vadd.f32 %v828, 1e-05
        %v848 = vadd.f32 %v829, 1e-05
        %v849 = vadd.f32 %v830, 1e-05
        %v850 = vadd.f32 %v831, 1e-05
        %v851 = vadd.f32 %v832, 1e-05
        %v852 = vadd.f32 %v833, 1e-05
        %v853 = vadd.f32 %v834, 1e-05
        %v854 = vadd.f32 %v835, 1e-05
        %v855 = vadd.f32 %v836, 1e-05
        %v856 = vadd.f32 %v837, 1e-05
        %v857 = vadd.f32 %v838, 1e-05
        %v858 = vadd.f32 %v839, 1e-05
        %v859 = vadd.f32 %v840, 1e-05
        %v860 = vadd.f32 %v841, 1e-05
        %v861 = vadd.f32 %v842, 1e-05
        %v862 = vadd.f32 %v843, 1e-05
        %v863 = vadd.f32 %v844, 1e-05
        %v864 = vadd.f32 %v845, 1e-05
        %v865 = vadd.f32 %v846, 1e-05
        %v866 = vrsqrt.pop %v847
        %v867 = vmul.f32 %v866, %v847
        %v868 = vmul.f32 %v867, %v866
        %v869 = vmul.f32 0.5, %v868
        %v870 = vsub.f32 1.5, %v869
        %v871 = vmul.f32 %v866, %v870
        %vm872 = vweird.f32 %v847
        %vm873 = vweird.f32 %v866
        %vm874 = vmor %vm872, %vm873
        %v875 = vsel %vm874, %v866, %v871
        %v876 = vrsqrt.pop %v848
        %v877 = vmul.f32 %v876, %v848
        %v878 = vmul.f32 %v877, %v876
        %v879 = vmul.f32 0.5, %v878
        %v880 = vsub.f32 1.5, %v879
        %v881 = vmul.f32 %v876, %v880
        %vm882 = vweird.f32 %v848
        %vm883 = vweird.f32 %v876
        %vm884 = vmor %vm882, %vm883
        %v885 = vsel %vm884, %v876, %v881
        %v886 = vrsqrt.pop %v849
        %v887 = vmul.f32 %v886, %v849
        %v888 = vmul.f32 %v887, %v886
        %v889 = vmul.f32 0.5, %v888
        %v890 = vsub.f32 1.5, %v889
        %v891 = vmul.f32 %v886, %v890
        %vm892 = vweird.f32 %v849
        %vm893 = vweird.f32 %v886
        %vm894 = vmor %vm892, %vm893
        %v895 = vsel %vm894, %v886, %v891
        %v896 = vrsqrt.pop %v850
        %v897 = vmul.f32 %v896, %v850
        %v898 = vmul.f32 %v897, %v896
        %v899 = vmul.f32 0.5, %v898
        %v900 = vsub.f32 1.5, %v899
        %v901 = vmul.f32 %v896, %v900
        %vm902 = vweird.f32 %v850
        %vm903 = vweird.f32 %v896
        %vm904 = vmor %vm902, %vm903
        %v905 = vsel %vm904, %v896, %v901
        %v906 = vrsqrt.pop %v851
        %v907 = vmul.f32 %v906, %v851
        %v908 = vmul.f32 %v907, %v906
        %v909 = vmul.f32 0.5, %v908
        %v910 = vsub.f32 1.5, %v909
        %v911 = vmul.f32 %v906, %v910
        %vm912 = vweird.f32 %v851
        %vm913 = vweird.f32 %v906
        %vm914 = vmor %vm912, %vm913
        %v915 = vsel %vm914, %v906, %v911
        %v916 = vrsqrt.pop %v852
        %v917 = vmul.f32 %v916, %v852
        %v918 = vmul.f32 %v917, %v916
        %v919 = vmul.f32 0.5, %v918
        %v920 = vsub.f32 1.5, %v919
        %v921 = vmul.f32 %v916, %v920
        %vm922 = vweird.f32 %v852
        %vm923 = vweird.f32 %v916
        %vm924 = vmor %vm922, %vm923
        %v925 = vsel %vm924, %v916, %v921
        %v926 = vrsqrt.pop %v853
        %v927 = vmul.f32 %v926, %v853
        %v928 = vmul.f32 %v927, %v926
        %v929 = vmul.f32 0.5, %v928
        %v930 = vsub.f32 1.5, %v929
        %v931 = vmul.f32 %v926, %v930
        %vm932 = vweird.f32 %v853
        %vm933 = vweird.f32 %v926
        %vm934 = vmor %vm932, %vm933
        %v935 = vsel %vm934, %v926, %v931
        %v936 = vrsqrt.pop %v854
        %v937 = vmul.f32 %v936, %v854
        %v938 = vmul.f32 %v937, %v936
        %v939 = vmul.f32 0.5, %v938
        %v940 = vsub.f32 1.5, %v939
        %v941 = vmul.f32 %v936, %v940
        %vm942 = vweird.f32 %v854
        %vm943 = vweird.f32 %v936
        %vm944 = vmor %vm942, %vm943
        %v945 = vsel %vm944, %v936, %v941
        %v946 = vrsqrt.pop %v855
        %v947 = vmul.f32 %v946, %v855
        %v948 = vmul.f32 %v947, %v946
        %v949 = vmul.f32 0.5, %v948
        %v950 = vsub.f32 1.5, %v949
        %v951 = vmul.f32 %v946, %v950
        %vm952 = vweird.f32 %v855
        %vm953 = vweird.f32 %v946
        %vm954 = vmor %vm952, %vm953
        %v955 = vsel %vm954, %v946, %v951
        %v956 = vrsqrt.pop %v856
        %v957 = vmul.f32 %v956, %v856
        %v958 = vmul.f32 %v957, %v956
        %v959 = vmul.f32 0.5, %v958
        %v960 = vsub.f32 1.5, %v959
        %v961 = vmul.f32 %v956, %v960
        %vm962 = vweird.f32 %v856
        %vm963 = vweird.f32 %v956
        %vm964 = vmor %vm962, %vm963
        %v965 = vsel %vm964, %v956, %v961
        %v966 = vrsqrt.pop %v857
        %v967 = vmul.f32 %v966, %v857
        %v968 = vmul.f32 %v967, %v966
        %v969 = vmul.f32 0.5, %v968
        %v970 = vsub.f32 1.5, %v969
        %v971 = vmul.f32 %v966, %v970
        %vm972 = vweird.f32 %v857
        %vm973 = vweird.f32 %v966
        %vm974 = vmor %vm972, %vm973
        %v975 = vsel %vm974, %v966, %v971
        %v976 = vrsqrt.pop %v858
        %v977 = vmul.f32 %v976, %v858
        %v978 = vmul.f32 %v977, %v976
        %v979 = vmul.f32 0.5, %v978
        %v980 = vsub.f32 1.5, %v979
        %v981 = vmul.f32 %v976, %v980
        %vm982 = vweird.f32 %v858
        %vm983 = vweird.f32 %v976
        %vm984 = vmor %vm982, %vm983
        %v985 = vsel %vm984, %v976, %v981
        %v986 = vrsqrt.pop %v859
        %v987 = vmul.f32 %v986, %v859
        %v988 = vmul.f32 %v987, %v986
        %v989 = vmul.f32 0.5, %v988
        %v990 = vsub.f32 1.5, %v989
        %v991 = vmul.f32 %v986, %v990
        %vm992 = vweird.f32 %v859
        %vm993 = vweird.f32 %v986
        %vm994 = vmor %vm992, %vm993
        %v995 = vsel %vm994, %v986, %v991
        %v996 = vrsqrt.pop %v860
        %v997 = vmul.f32 %v996, %v860
        %v998 = vmul.f32 %v997, %v996
        %v999 = vmul.f32 0.5, %v998
        %v1000 = vsub.f32 1.5, %v999
        %v1001 = vmul.f32 %v996, %v1000
        %vm1002 = vweird.f32 %v860
        %vm1003 = vweird.f32 %v996
        %vm1004 = vmor %vm1002, %vm1003
        %v1005 = vsel %vm1004, %v996, %v1001
        %v1006 = vrsqrt.pop %v861
        %v1007 = vmul.f32 %v1006, %v861
        %v1008 = vmul.f32 %v1007, %v1006
        %v1009 = vmul.f32 0.5, %v1008
        %v1010 = vsub.f32 1.5, %v1009
        %v1011 = vmul.f32 %v1006, %v1010
        %vm1012 = vweird.f32 %v861
        %vm1013 = vweird.f32 %v1006
        %vm1014 = vmor %vm1012, %vm1013
        %v1015 = vsel %vm1014, %v1006, %v1011
        %v1016 = vrsqrt.pop %v862
        %v1017 = vmul.f32 %v1016, %v862
        %v1018 = vmul.f32 %v1017, %v1016
        %v1019 = vmul.f32 0.5, %v1018
        %v1020 = vsub.f32 1.5, %v1019
        %v1021 = vmul.f32 %v1016, %v1020
        %vm1022 = vweird.f32 %v862
        %vm1023 = vweird.f32 %v1016
        %vm1024 = vmor %vm1022, %vm1023
        %v1025 = vsel %vm1024, %v1016, %v1021
        %v1026 = vrsqrt.pop %v863
        %v1027 = vmul.f32 %v1026, %v863
        %v1028 = vmul.f32 %v1027, %v1026
        %v1029 = vmul.f32 0.5, %v1028
        %v1030 = vsub.f32 1.5, %v1029
        %v1031 = vmul.f32 %v1026, %v1030
        %vm1032 = vweird.f32 %v863
        %vm1033 = vweird.f32 %v1026
        %vm1034 = vmor %vm1032, %vm1033
        %v1035 = vsel %vm1034, %v1026, %v1031
        %v1036 = vrsqrt.pop %v864
        %v1037 = vmul.f32 %v1036, %v864
        %v1038 = vmul.f32 %v1037, %v1036
        %v1039 = vmul.f32 0.5, %v1038
        %v1040 = vsub.f32 1.5, %v1039
        %v1041 = vmul.f32 %v1036, %v1040
        %vm1042 = vweird.f32 %v864
        %vm1043 = vweird.f32 %v1036
        %vm1044 = vmor %vm1042, %vm1043
        %v1045 = vsel %vm1044, %v1036, %v1041
        %v1046 = vrsqrt.pop %v865
        %v1047 = vmul.f32 %v1046, %v865
        %v1048 = vmul.f32 %v1047, %v1046
        %v1049 = vmul.f32 0.5, %v1048
        %v1050 = vsub.f32 1.5, %v1049
        %v1051 = vmul.f32 %v1046, %v1050
        %vm1052 = vweird.f32 %v865
        %vm1053 = vweird.f32 %v1046
        %vm1054 = vmor %vm1052, %vm1053
        %v1055 = vsel %vm1054, %v1046, %v1051
        %v1056 = vsub.f32 %v601, %v752
        %v1057 = vsub.f32 %v604, %v753
        %v1058 = vsub.f32 %v607, %v754
        %v1059 = vsub.f32 %v610, %v755
        %v1060 = vsub.f32 %v613, %v756
        %v1061 = vsub.f32 %v616, %v757
        %v1062 = vsub.f32 %v619, %v758
        %v1063 = vsub.f32 %v622, %v759
        %v1064 = vsub.f32 %v625, %v760
        %v1065 = vsub.f32 %v628, %v761
        %v1066 = vsub.f32 %v631, %v762
        %v1067 = vsub.f32 %v634, %v763
        %v1068 = vsub.f32 %v637, %v764
        %v1069 = vsub.f32 %v640, %v765
        %v1070 = vsub.f32 %v643, %v766
        %v1071 = vsub.f32 %v646, %v767
        %v1072 = vsub.f32 %v649, %v768
        %v1073 = vsub.f32 %v652, %v769
        %v1074 = vsub.f32 %v655, %v770
        %v1075 = vmul.f32 %v1056, %v875
        %v1076 = vmul.f32 %v1057, %v885
        %v1077 = vmul.f32 %v1058, %v895
        %v1078 = vmul.f32 %v1059, %v905
        %v1079 = vmul.f32 %v1060, %v915
        %v1080 = vmul.f32 %v1061, %v925
        %v1081 = vmul.f32 %v1062, %v935
        %v1082 = vmul.f32 %v1063, %v945
        %v1083 = vmul.f32 %v1064, %v955
        %v1084 = vmul.f32 %v1065, %v965
        %v1085 = vmul.f32 %v1066, %v975
        %v1086 = vmul.f32 %v1067, %v985
        %v1087 = vmul.f32 %v1068, %v995
        %v1088 = vmul.f32 %v1069, %v1005
        %v1089 = vmul.f32 %v1070, %v1015
        %v1090 = vmul.f32 %v1071, %v1025
        %v1091 = vmul.f32 %v1072, %v1035
        %v1092 = vmul.f32 %v1073, %v1045
        %v1093 = vmul.f32 %v1074, %v1055
        %v1094 = vld [vmem:[%s3] sm:$0x1]
        %v1096 = vperm.slane %v1094, 0
        %v1098 = vmul.f32 %v1075, %v1096
        %v1099 = vmul.f32 %v1076, %v1096
        %v1100 = vmul.f32 %v1077, %v1096
        %v1101 = vmul.f32 %v1078, %v1096
        %v1102 = vmul.f32 %v1079, %v1096
        %v1103 = vmul.f32 %v1080, %v1096
        %v1104 = vmul.f32 %v1081, %v1096
        %v1105 = vmul.f32 %v1082, %v1096
        %v1106 = vmul.f32 %v1083, %v1096
        %v1107 = vmul.f32 %v1084, %v1096
        %v1108 = vmul.f32 %v1085, %v1096
        %v1109 = vmul.f32 %v1086, %v1096
        %v1110 = vmul.f32 %v1087, %v1096
        %v1111 = vmul.f32 %v1088, %v1096
        %v1112 = vmul.f32 %v1089, %v1096
        %v1113 = vmul.f32 %v1090, %v1096
        %v1114 = vmul.f32 %v1091, %v1096
        %v1115 = vmul.f32 %v1092, %v1096
        %v1116 = vmul.f32 %v1093, %v1096
        %v1117 = vld [vmem:[%s4] sm:$0x1]
        %v1119 = vperm.slane %v1117, 0
        %v1121 = vadd.f32 %v1098, %v1119
        %v1122 = vadd.f32 %v1099, %v1119
        %v1123 = vadd.f32 %v1100, %v1119
        %v1124 = vadd.f32 %v1101, %v1119
        %v1125 = vadd.f32 %v1102, %v1119
        %v1126 = vadd.f32 %v1103, %v1119
        %v1127 = vadd.f32 %v1104, %v1119
        %v1128 = vadd.f32 %v1105, %v1119
        %v1129 = vadd.f32 %v1106, %v1119
        %v1130 = vadd.f32 %v1107, %v1119
        %v1131 = vadd.f32 %v1108, %v1119
        %v1132 = vadd.f32 %v1109, %v1119
        %v1133 = vadd.f32 %v1110, %v1119
        %v1134 = vadd.f32 %v1111, %v1119
        %v1135 = vadd.f32 %v1112, %v1119
        %v1136 = vadd.f32 %v1113, %v1119
        %v1137 = vadd.f32 %v1114, %v1119
        %v1138 = vadd.f32 %v1115, %v1119
        %v1139 = vadd.f32 %v1116, %v1119
        %v1140 = vmax.f32 %v1121, 0.0
        %v1141 = vmax.f32 %v1122, 0.0
        %v1142 = vmax.f32 %v1123, 0.0
        %v1143 = vmax.f32 %v1124, 0.0
        %v1144 = vmax.f32 %v1125, 0.0
        %v1145 = vmax.f32 %v1126, 0.0
        %v1146 = vmax.f32 %v1127, 0.0
        %v1147 = vmax.f32 %v1128, 0.0
        %v1148 = vmax.f32 %v1129, 0.0
        %v1149 = vmax.f32 %v1130, 0.0
        %v1150 = vmax.f32 %v1131, 0.0
        %v1151 = vmax.f32 %v1132, 0.0
        %v1152 = vmax.f32 %v1133, 0.0
        %v1153 = vmax.f32 %v1134, 0.0
        %v1154 = vmax.f32 %v1135, 0.0
        %v1155 = vmax.f32 %v1136, 0.0
        %v1156 = vmax.f32 %v1137, 0.0
        %v1157 = vmax.f32 %v1138, 0.0
        %v1158 = vmax.f32 %v1139, 0.0
        %v1159 = vld [vmem:[%s5] sm:$0xff]
        %v1160 = vld [vmem:[%s5 + $0x8] sm:$0xff]
        %v1161 = vld [vmem:[%s5 + $0x10] sm:$0xff]
        %v1162 = vld [vmem:[%s5 + $0x18] sm:$0xff]
        %v1163 = vld [vmem:[%s5 + $0x20] sm:$0xff]
        %v1164 = vld [vmem:[%s5 + $0x28] sm:$0xff]
        %v1165 = vld [vmem:[%s5 + $0x30] sm:$0xff]
        %v1166 = vld [vmem:[%s5 + $0x38] sm:$0xff]
        %v1167 = vld [vmem:[%s5 + $0x40] sm:$0xff]
        %v1168 = vld [vmem:[%s5 + $0x48] sm:$0xff]
        %v1169 = vld [vmem:[%s5 + $0x50] sm:$0xff]
        %v1170 = vld [vmem:[%s5 + $0x58] sm:$0xff]
        %v1171 = vld [vmem:[%s5 + $0x60] sm:$0xff]
        %v1172 = vld [vmem:[%s5 + $0x68] sm:$0xff]
        %v1173 = vld [vmem:[%s5 + $0x70] sm:$0xff]
        %v1174 = vld [vmem:[%s5 + $0x78] sm:$0xff]
        %v1175 = vld [vmem:[%s6] sm:$0x1]
        %v1177 = vperm.slane %v1175, 0
        %1179 = vmatpush.msra.mxu0 %v1174
        %1180 = vmatpush.msra.mxu0 %v1173
        %1181 = vmatpush.msra.mxu0 %v1172
        %1182 = vmatpush.msra.mxu0 %v1171
        %1183 = vmatpush.msra.mxu0 %v1170
        %1184 = vmatpush.msra.mxu0 %v1169
        %1185 = vmatpush.msra.mxu0 %v1168
        %1186 = vmatpush.msra.mxu0 %v1167
        %1187 = vmatpush.msra.mxu0 %v1166
        %1188 = vmatpush.msra.mxu0 %v1165
        %1189 = vmatpush.msra.mxu0 %v1164
        %1190 = vmatpush.msra.mxu0 %v1163
        %1191 = vmatpush.msra.mxu0 %v1162
        %1192 = vmatpush.msra.mxu0 %v1161
        %1193 = vmatpush.msra.mxu0 %v1160
        %1194 = vmatpush.msra.mxu0 %v1159
        %1195 = vmatmul.f32.gmra.mxu0 %v1140
        %v1196 = vpop.f32.mrf.mxu0
        %v1197 = vadd.f32 %v1177, %v1196
        %1198 = vmatmul.f32.gmra.mxu0 %v1141
        %v1199 = vpop.f32.mrf.mxu0
        %v1200 = vadd.f32 %v1177, %v1199
        %1201 = vmatmul.f32.gmra.mxu0 %v1142
        %v1202 = vpop.f32.mrf.mxu0
        %v1203 = vadd.f32 %v1177, %v1202
        %1204 = vmatmul.f32.gmra.mxu0 %v1143
        %v1205 = vpop.f32.mrf.mxu0
        %v1206 = vadd.f32 %v1177, %v1205
        %1207 = vmatmul.f32.gmra.mxu0 %v1144
        %v1208 = vpop.f32.mrf.mxu0
        %v1209 = vadd.f32 %v1177, %v1208
        %1210 = vmatmul.f32.gmra.mxu0 %v1145
        %v1211 = vpop.f32.mrf.mxu0
        %v1212 = vadd.f32 %v1177, %v1211
        %1213 = vmatmul.f32.gmra.mxu0 %v1146
        %v1214 = vpop.f32.mrf.mxu0
        %v1215 = vadd.f32 %v1177, %v1214
        %1216 = vmatmul.f32.gmra.mxu0 %v1147
        %v1217 = vpop.f32.mrf.mxu0
        %v1218 = vadd.f32 %v1177, %v1217
        %1219 = vmatmul.f32.gmra.mxu0 %v1148
        %v1220 = vpop.f32.mrf.mxu0
        %v1221 = vadd.f32 %v1177, %v1220
        %1222 = vmatmul.f32.gmra.mxu0 %v1149
        %v1223 = vpop.f32.mrf.mxu0
        %v1224 = vadd.f32 %v1177, %v1223
        %1225 = vmatmul.f32.gmra.mxu0 %v1150
        %v1226 = vpop.f32.mrf.mxu0
        %v1227 = vadd.f32 %v1177, %v1226
        %1228 = vmatmul.f32.gmra.mxu0 %v1151
        %v1229 = vpop.f32.mrf.mxu0
        %v1230 = vadd.f32 %v1177, %v1229
        %1231 = vmatmul.f32.gmra.mxu0 %v1152
        %v1232 = vpop.f32.mrf.mxu0
        %v1233 = vadd.f32 %v1177, %v1232
        %1234 = vmatmul.f32.gmra.mxu0 %v1153
        %v1235 = vpop.f32.mrf.mxu0
        %v1236 = vadd.f32 %v1177, %v1235
        %1237 = vmatmul.f32.gmra.mxu0 %v1154
        %v1238 = vpop.f32.mrf.mxu0
        %v1239 = vadd.f32 %v1177, %v1238
        %1240 = vmatmul.f32.gmra.mxu0 %v1155
        %v1241 = vpop.f32.mrf.mxu0
        %v1242 = vadd.f32 %v1177, %v1241
        %1243 = vmatmul.f32.gmra.mxu0 %v1156
        %v1244 = vpop.f32.mrf.mxu0
        %v1245 = vadd.f32 %v1177, %v1244
        %1246 = vmatmul.f32.gmra.mxu0 %v1157
        %v1247 = vpop.f32.mrf.mxu0
        %v1248 = vadd.f32 %v1177, %v1247
        %1249 = vmatmul.f32.gmra.mxu0 %v1158
        %v1250 = vpop.f32.mrf.mxu0
        %v1251 = vadd.f32 %v1177, %v1250
        %1252 = vdwg.mxu0
        %1253 = vadd.xlane.f32.xlu0 %v1197
        %v1254 = vpop.xlane.xlu0 %1253
        %1255 = vadd.xlane.f32.xlu0 %v1200
        %v1256 = vpop.xlane.xlu0 %1255
        %1257 = vadd.xlane.f32.xlu0 %v1203
        %v1258 = vpop.xlane.xlu0 %1257
        %1259 = vadd.xlane.f32.xlu0 %v1206
        %v1260 = vpop.xlane.xlu0 %1259
        %1261 = vadd.xlane.f32.xlu0 %v1209
        %v1262 = vpop.xlane.xlu0 %1261
        %1263 = vadd.xlane.f32.xlu0 %v1212
        %v1264 = vpop.xlane.xlu0 %1263
        %1265 = vadd.xlane.f32.xlu0 %v1215
        %v1266 = vpop.xlane.xlu0 %1265
        %1267 = vadd.xlane.f32.xlu0 %v1218
        %v1268 = vpop.xlane.xlu0 %1267
        %1269 = vadd.xlane.f32.xlu0 %v1221
        %v1270 = vpop.xlane.xlu0 %1269
        %1271 = vadd.xlane.f32.xlu0 %v1224
        %v1272 = vpop.xlane.xlu0 %1271
        %1273 = vadd.xlane.f32.xlu0 %v1227
        %v1274 = vpop.xlane.xlu0 %1273
        %1275 = vadd.xlane.f32.xlu0 %v1230
        %v1276 = vpop.xlane.xlu0 %1275
        %1277 = vadd.xlane.f32.xlu0 %v1233
        %v1278 = vpop.xlane.xlu0 %1277
        %1279 = vadd.xlane.f32.xlu0 %v1236
        %v1280 = vpop.xlane.xlu0 %1279
        %1281 = vadd.xlane.f32.xlu0 %v1239
        %v1282 = vpop.xlane.xlu0 %1281
        %1283 = vadd.xlane.f32.xlu0 %v1242
        %v1284 = vpop.xlane.xlu0 %1283
        %1285 = vadd.xlane.f32.xlu0 %v1245
        %v1286 = vpop.xlane.xlu0 %1285
        %1287 = vadd.xlane.f32.xlu0 %v1248
        %v1288 = vpop.xlane.xlu0 %1287
        %1289 = vadd.xlane.f32.xlu0 %v1251
        %v1290 = vpop.xlane.xlu0 %1289
        %v1291 = vmul.f32 %v1197, %v1197
        %v1292 = vmul.f32 %v1200, %v1200
        %v1293 = vmul.f32 %v1203, %v1203
        %v1294 = vmul.f32 %v1206, %v1206
        %v1295 = vmul.f32 %v1209, %v1209
        %v1296 = vmul.f32 %v1212, %v1212
        %v1297 = vmul.f32 %v1215, %v1215
        %v1298 = vmul.f32 %v1218, %v1218
        %v1299 = vmul.f32 %v1221, %v1221
        %v1300 = vmul.f32 %v1224, %v1224
        %v1301 = vmul.f32 %v1227, %v1227
        %v1302 = vmul.f32 %v1230, %v1230
        %v1303 = vmul.f32 %v1233, %v1233
        %v1304 = vmul.f32 %v1236, %v1236
        %v1305 = vmul.f32 %v1239, %v1239
        %v1306 = vmul.f32 %v1242, %v1242
        %v1307 = vmul.f32 %v1245, %v1245
        %v1308 = vmul.f32 %v1248, %v1248
        %v1309 = vmul.f32 %v1251, %v1251
        %1310 = vadd.xlane.f32.xlu0 %v1291
        %v1311 = vpop.xlane.xlu0 %1310
        %1312 = vadd.xlane.f32.xlu0 %v1292
        %v1313 = vpop.xlane.xlu0 %1312
        %1314 = vadd.xlane.f32.xlu0 %v1293
        %v1315 = vpop.xlane.xlu0 %1314
        %1316 = vadd.xlane.f32.xlu0 %v1294
        %v1317 = vpop.xlane.xlu0 %1316
        %1318 = vadd.xlane.f32.xlu0 %v1295
        %v1319 = vpop.xlane.xlu0 %1318
        %1320 = vadd.xlane.f32.xlu0 %v1296
        %v1321 = vpop.xlane.xlu0 %1320
        %1322 = vadd.xlane.f32.xlu0 %v1297
        %v1323 = vpop.xlane.xlu0 %1322
        %1324 = vadd.xlane.f32.xlu0 %v1298
        %v1325 = vpop.xlane.xlu0 %1324
        %1326 = vadd.xlane.f32.xlu0 %v1299
        %v1327 = vpop.xlane.xlu0 %1326
        %1328 = vadd.xlane.f32.xlu0 %v1300
        %v1329 = vpop.xlane.xlu0 %1328
        %1330 = vadd.xlane.f32.xlu0 %v1301
        %v1331 = vpop.xlane.xlu0 %1330
        %1332 = vadd.xlane.f32.xlu0 %v1302
        %v1333 = vpop.xlane.xlu0 %1332
        %1334 = vadd.xlane.f32.xlu0 %v1303
        %v1335 = vpop.xlane.xlu0 %1334
        %1336 = vadd.xlane.f32.xlu0 %v1304
        %v1337 = vpop.xlane.xlu0 %1336
        %1338 = vadd.xlane.f32.xlu0 %v1305
        %v1339 = vpop.xlane.xlu0 %1338
        %1340 = vadd.xlane.f32.xlu0 %v1306
        %v1341 = vpop.xlane.xlu0 %1340
        %1342 = vadd.xlane.f32.xlu0 %v1307
        %v1343 = vpop.xlane.xlu0 %1342
        %1344 = vadd.xlane.f32.xlu0 %v1308
        %v1345 = vpop.xlane.xlu0 %1344
        %1346 = vadd.xlane.f32.xlu0 %v1309
        %v1347 = vpop.xlane.xlu0 %1346
        %v1348 = vmul.f32 %v1254, 0.010416667
        %v1349 = vmul.f32 %v1256, 0.010416667
        %v1350 = vmul.f32 %v1258, 0.010416667
        %v1351 = vmul.f32 %v1260, 0.010416667
        %v1352 = vmul.f32 %v1262, 0.010416667
        %v1353 = vmul.f32 %v1264, 0.010416667
        %v1354 = vmul.f32 %v1266, 0.010416667
        %v1355 = vmul.f32 %v1268, 0.010416667
        %v1356 = vmul.f32 %v1270, 0.010416667
        %v1357 = vmul.f32 %v1272, 0.010416667
        %v1358 = vmul.f32 %v1274, 0.010416667
        %v1359 = vmul.f32 %v1276, 0.010416667
        %v1360 = vmul.f32 %v1278, 0.010416667
        %v1361 = vmul.f32 %v1280, 0.010416667
        %v1362 = vmul.f32 %v1282, 0.010416667
        %v1363 = vmul.f32 %v1284, 0.010416667
        %v1364 = vmul.f32 %v1286, 0.010416667
        %v1365 = vmul.f32 %v1288, 0.010416667
        %v1366 = vmul.f32 %v1290, 0.010416667
        %v1367 = vmul.f32 %v1311, 0.010416667
        %v1368 = vmul.f32 %v1313, 0.010416667
        %v1369 = vmul.f32 %v1315, 0.010416667
        %v1370 = vmul.f32 %v1317, 0.010416667
        %v1371 = vmul.f32 %v1319, 0.010416667
        %v1372 = vmul.f32 %v1321, 0.010416667
        %v1373 = vmul.f32 %v1323, 0.010416667
        %v1374 = vmul.f32 %v1325, 0.010416667
        %v1375 = vmul.f32 %v1327, 0.010416667
        %v1376 = vmul.f32 %v1329, 0.010416667
        %v1377 = vmul.f32 %v1331, 0.010416667
        %v1378 = vmul.f32 %v1333, 0.010416667
        %v1379 = vmul.f32 %v1335, 0.010416667
        %v1380 = vmul.f32 %v1337, 0.010416667
        %v1381 = vmul.f32 %v1339, 0.010416667
        %v1382 = vmul.f32 %v1341, 0.010416667
        %v1383 = vmul.f32 %v1343, 0.010416667
        %v1384 = vmul.f32 %v1345, 0.010416667
        %v1385 = vmul.f32 %v1347, 0.010416667
        %v1386 = vmul.f32 %v1348, %v1348
        %v1387 = vmul.f32 %v1349, %v1349
        %v1388 = vmul.f32 %v1350, %v1350
        %v1389 = vmul.f32 %v1351, %v1351
        %v1390 = vmul.f32 %v1352, %v1352
        %v1391 = vmul.f32 %v1353, %v1353
        %v1392 = vmul.f32 %v1354, %v1354
        %v1393 = vmul.f32 %v1355, %v1355
        %v1394 = vmul.f32 %v1356, %v1356
        %v1395 = vmul.f32 %v1357, %v1357
        %v1396 = vmul.f32 %v1358, %v1358
        %v1397 = vmul.f32 %v1359, %v1359
        %v1398 = vmul.f32 %v1360, %v1360
        %v1399 = vmul.f32 %v1361, %v1361
        %v1400 = vmul.f32 %v1362, %v1362
        %v1401 = vmul.f32 %v1363, %v1363
        %v1402 = vmul.f32 %v1364, %v1364
        %v1403 = vmul.f32 %v1365, %v1365
        %v1404 = vmul.f32 %v1366, %v1366
        %v1405 = vsub.f32 %v1367, %v1386
        %v1406 = vsub.f32 %v1368, %v1387
        %v1407 = vsub.f32 %v1369, %v1388
        %v1408 = vsub.f32 %v1370, %v1389
        %v1409 = vsub.f32 %v1371, %v1390
        %v1410 = vsub.f32 %v1372, %v1391
        %v1411 = vsub.f32 %v1373, %v1392
        %v1412 = vsub.f32 %v1374, %v1393
        %v1413 = vsub.f32 %v1375, %v1394
        %v1414 = vsub.f32 %v1376, %v1395
        %v1415 = vsub.f32 %v1377, %v1396
        %v1416 = vsub.f32 %v1378, %v1397
        %v1417 = vsub.f32 %v1379, %v1398
        %v1418 = vsub.f32 %v1380, %v1399
        %v1419 = vsub.f32 %v1381, %v1400
        %v1420 = vsub.f32 %v1382, %v1401
        %v1421 = vsub.f32 %v1383, %v1402
        %v1422 = vsub.f32 %v1384, %v1403
        %v1423 = vsub.f32 %v1385, %v1404
        %v1424 = vmax.f32 %v1405, 0.0
        %v1425 = vmax.f32 %v1406, 0.0
        %v1426 = vmax.f32 %v1407, 0.0
        %v1427 = vmax.f32 %v1408, 0.0
        %v1428 = vmax.f32 %v1409, 0.0
        %v1429 = vmax.f32 %v1410, 0.0
        %v1430 = vmax.f32 %v1411, 0.0
        %v1431 = vmax.f32 %v1412, 0.0
        %v1432 = vmax.f32 %v1413, 0.0
        %v1433 = vmax.f32 %v1414, 0.0
        %v1434 = vmax.f32 %v1415, 0.0
        %v1435 = vmax.f32 %v1416, 0.0
        %v1436 = vmax.f32 %v1417, 0.0
        %v1437 = vmax.f32 %v1418, 0.0
        %v1438 = vmax.f32 %v1419, 0.0
        %v1439 = vmax.f32 %v1420, 0.0
        %v1440 = vmax.f32 %v1421, 0.0
        %v1441 = vmax.f32 %v1422, 0.0
        %v1442 = vmax.f32 %v1423, 0.0
        %v1443 = vadd.f32 %v1424, 1e-05
        %v1444 = vadd.f32 %v1425, 1e-05
        %v1445 = vadd.f32 %v1426, 1e-05
        %v1446 = vadd.f32 %v1427, 1e-05
        %v1447 = vadd.f32 %v1428, 1e-05
        %v1448 = vadd.f32 %v1429, 1e-05
        %v1449 = vadd.f32 %v1430, 1e-05
        %v1450 = vadd.f32 %v1431, 1e-05
        %v1451 = vadd.f32 %v1432, 1e-05
        %v1452 = vadd.f32 %v1433, 1e-05
        %v1453 = vadd.f32 %v1434, 1e-05
        %v1454 = vadd.f32 %v1435, 1e-05
        %v1455 = vadd.f32 %v1436, 1e-05
        %v1456 = vadd.f32 %v1437, 1e-05
        %v1457 = vadd.f32 %v1438, 1e-05
        %v1458 = vadd.f32 %v1439, 1e-05
        %v1459 = vadd.f32 %v1440, 1e-05
        %v1460 = vadd.f32 %v1441, 1e-05
        %v1461 = vadd.f32 %v1442, 1e-05
        %v1462 = vrsqrt.pop %v1443
        %v1463 = vmul.f32 %v1462, %v1443
        %v1464 = vmul.f32 %v1463, %v1462
        %v1465 = vmul.f32 0.5, %v1464
        %v1466 = vsub.f32 1.5, %v1465
        %v1467 = vmul.f32 %v1462, %v1466
        %vm1468 = vweird.f32 %v1443
        %vm1469 = vweird.f32 %v1462
        %vm1470 = vmor %vm1468, %vm1469
        %v1471 = vsel %vm1470, %v1462, %v1467
        %v1472 = vrsqrt.pop %v1444
        %v1473 = vmul.f32 %v1472, %v1444
        %v1474 = vmul.f32 %v1473, %v1472
        %v1475 = vmul.f32 0.5, %v1474
        %v1476 = vsub.f32 1.5, %v1475
        %v1477 = vmul.f32 %v1472, %v1476
        %vm1478 = vweird.f32 %v1444
        %vm1479 = vweird.f32 %v1472
        %vm1480 = vmor %vm1478, %vm1479
        %v1481 = vsel %vm1480, %v1472, %v1477
        %v1482 = vrsqrt.pop %v1445
        %v1483 = vmul.f32 %v1482, %v1445
        %v1484 = vmul.f32 %v1483, %v1482
        %v1485 = vmul.f32 0.5, %v1484
        %v1486 = vsub.f32 1.5, %v1485
        %v1487 = vmul.f32 %v1482, %v1486
        %vm1488 = vweird.f32 %v1445
        %vm1489 = vweird.f32 %v1482
        %vm1490 = vmor %vm1488, %vm1489
        %v1491 = vsel %vm1490, %v1482, %v1487
        %v1492 = vrsqrt.pop %v1446
        %v1493 = vmul.f32 %v1492, %v1446
        %v1494 = vmul.f32 %v1493, %v1492
        %v1495 = vmul.f32 0.5, %v1494
        %v1496 = vsub.f32 1.5, %v1495
        %v1497 = vmul.f32 %v1492, %v1496
        %vm1498 = vweird.f32 %v1446
        %vm1499 = vweird.f32 %v1492
        %vm1500 = vmor %vm1498, %vm1499
        %v1501 = vsel %vm1500, %v1492, %v1497
        %v1502 = vrsqrt.pop %v1447
        %v1503 = vmul.f32 %v1502, %v1447
        %v1504 = vmul.f32 %v1503, %v1502
        %v1505 = vmul.f32 0.5, %v1504
        %v1506 = vsub.f32 1.5, %v1505
        %v1507 = vmul.f32 %v1502, %v1506
        %vm1508 = vweird.f32 %v1447
        %vm1509 = vweird.f32 %v1502
        %vm1510 = vmor %vm1508, %vm1509
        %v1511 = vsel %vm1510, %v1502, %v1507
        %v1512 = vrsqrt.pop %v1448
        %v1513 = vmul.f32 %v1512, %v1448
        %v1514 = vmul.f32 %v1513, %v1512
        %v1515 = vmul.f32 0.5, %v1514
        %v1516 = vsub.f32 1.5, %v1515
        %v1517 = vmul.f32 %v1512, %v1516
        %vm1518 = vweird.f32 %v1448
        %vm1519 = vweird.f32 %v1512
        %vm1520 = vmor %vm1518, %vm1519
        %v1521 = vsel %vm1520, %v1512, %v1517
        %v1522 = vrsqrt.pop %v1449
        %v1523 = vmul.f32 %v1522, %v1449
        %v1524 = vmul.f32 %v1523, %v1522
        %v1525 = vmul.f32 0.5, %v1524
        %v1526 = vsub.f32 1.5, %v1525
        %v1527 = vmul.f32 %v1522, %v1526
        %vm1528 = vweird.f32 %v1449
        %vm1529 = vweird.f32 %v1522
        %vm1530 = vmor %vm1528, %vm1529
        %v1531 = vsel %vm1530, %v1522, %v1527
        %v1532 = vrsqrt.pop %v1450
        %v1533 = vmul.f32 %v1532, %v1450
        %v1534 = vmul.f32 %v1533, %v1532
        %v1535 = vmul.f32 0.5, %v1534
        %v1536 = vsub.f32 1.5, %v1535
        %v1537 = vmul.f32 %v1532, %v1536
        %vm1538 = vweird.f32 %v1450
        %vm1539 = vweird.f32 %v1532
        %vm1540 = vmor %vm1538, %vm1539
        %v1541 = vsel %vm1540, %v1532, %v1537
        %v1542 = vrsqrt.pop %v1451
        %v1543 = vmul.f32 %v1542, %v1451
        %v1544 = vmul.f32 %v1543, %v1542
        %v1545 = vmul.f32 0.5, %v1544
        %v1546 = vsub.f32 1.5, %v1545
        %v1547 = vmul.f32 %v1542, %v1546
        %vm1548 = vweird.f32 %v1451
        %vm1549 = vweird.f32 %v1542
        %vm1550 = vmor %vm1548, %vm1549
        %v1551 = vsel %vm1550, %v1542, %v1547
        %v1552 = vrsqrt.pop %v1452
        %v1553 = vmul.f32 %v1552, %v1452
        %v1554 = vmul.f32 %v1553, %v1552
        %v1555 = vmul.f32 0.5, %v1554
        %v1556 = vsub.f32 1.5, %v1555
        %v1557 = vmul.f32 %v1552, %v1556
        %vm1558 = vweird.f32 %v1452
        %vm1559 = vweird.f32 %v1552
        %vm1560 = vmor %vm1558, %vm1559
        %v1561 = vsel %vm1560, %v1552, %v1557
        %v1562 = vrsqrt.pop %v1453
        %v1563 = vmul.f32 %v1562, %v1453
        %v1564 = vmul.f32 %v1563, %v1562
        %v1565 = vmul.f32 0.5, %v1564
        %v1566 = vsub.f32 1.5, %v1565
        %v1567 = vmul.f32 %v1562, %v1566
        %vm1568 = vweird.f32 %v1453
        %vm1569 = vweird.f32 %v1562
        %vm1570 = vmor %vm1568, %vm1569
        %v1571 = vsel %vm1570, %v1562, %v1567
        %v1572 = vrsqrt.pop %v1454
        %v1573 = vmul.f32 %v1572, %v1454
        %v1574 = vmul.f32 %v1573, %v1572
        %v1575 = vmul.f32 0.5, %v1574
        %v1576 = vsub.f32 1.5, %v1575
        %v1577 = vmul.f32 %v1572, %v1576
        %vm1578 = vweird.f32 %v1454
        %vm1579 = vweird.f32 %v1572
        %vm1580 = vmor %vm1578, %vm1579
        %v1581 = vsel %vm1580, %v1572, %v1577
        %v1582 = vrsqrt.pop %v1455
        %v1583 = vmul.f32 %v1582, %v1455
        %v1584 = vmul.f32 %v1583, %v1582
        %v1585 = vmul.f32 0.5, %v1584
        %v1586 = vsub.f32 1.5, %v1585
        %v1587 = vmul.f32 %v1582, %v1586
        %vm1588 = vweird.f32 %v1455
        %vm1589 = vweird.f32 %v1582
        %vm1590 = vmor %vm1588, %vm1589
        %v1591 = vsel %vm1590, %v1582, %v1587
        %v1592 = vrsqrt.pop %v1456
        %v1593 = vmul.f32 %v1592, %v1456
        %v1594 = vmul.f32 %v1593, %v1592
        %v1595 = vmul.f32 0.5, %v1594
        %v1596 = vsub.f32 1.5, %v1595
        %v1597 = vmul.f32 %v1592, %v1596
        %vm1598 = vweird.f32 %v1456
        %vm1599 = vweird.f32 %v1592
        %vm1600 = vmor %vm1598, %vm1599
        %v1601 = vsel %vm1600, %v1592, %v1597
        %v1602 = vrsqrt.pop %v1457
        %v1603 = vmul.f32 %v1602, %v1457
        %v1604 = vmul.f32 %v1603, %v1602
        %v1605 = vmul.f32 0.5, %v1604
        %v1606 = vsub.f32 1.5, %v1605
        %v1607 = vmul.f32 %v1602, %v1606
        %vm1608 = vweird.f32 %v1457
        %vm1609 = vweird.f32 %v1602
        %vm1610 = vmor %vm1608, %vm1609
        %v1611 = vsel %vm1610, %v1602, %v1607
        %v1612 = vrsqrt.pop %v1458
        %v1613 = vmul.f32 %v1612, %v1458
        %v1614 = vmul.f32 %v1613, %v1612
        %v1615 = vmul.f32 0.5, %v1614
        %v1616 = vsub.f32 1.5, %v1615
        %v1617 = vmul.f32 %v1612, %v1616
        %vm1618 = vweird.f32 %v1458
        %vm1619 = vweird.f32 %v1612
        %vm1620 = vmor %vm1618, %vm1619
        %v1621 = vsel %vm1620, %v1612, %v1617
        %v1622 = vrsqrt.pop %v1459
        %v1623 = vmul.f32 %v1622, %v1459
        %v1624 = vmul.f32 %v1623, %v1622
        %v1625 = vmul.f32 0.5, %v1624
        %v1626 = vsub.f32 1.5, %v1625
        %v1627 = vmul.f32 %v1622, %v1626
        %vm1628 = vweird.f32 %v1459
        %vm1629 = vweird.f32 %v1622
        %vm1630 = vmor %vm1628, %vm1629
        %v1631 = vsel %vm1630, %v1622, %v1627
        %v1632 = vrsqrt.pop %v1460
        %v1633 = vmul.f32 %v1632, %v1460
        %v1634 = vmul.f32 %v1633, %v1632
        %v1635 = vmul.f32 0.5, %v1634
        %v1636 = vsub.f32 1.5, %v1635
        %v1637 = vmul.f32 %v1632, %v1636
        %vm1638 = vweird.f32 %v1460
        %vm1639 = vweird.f32 %v1632
        %vm1640 = vmor %vm1638, %vm1639
        %v1641 = vsel %vm1640, %v1632, %v1637
        %v1642 = vrsqrt.pop %v1461
        %v1643 = vmul.f32 %v1642, %v1461
        %v1644 = vmul.f32 %v1643, %v1642
        %v1645 = vmul.f32 0.5, %v1644
        %v1646 = vsub.f32 1.5, %v1645
        %v1647 = vmul.f32 %v1642, %v1646
        %vm1648 = vweird.f32 %v1461
        %vm1649 = vweird.f32 %v1642
        %vm1650 = vmor %vm1648, %vm1649
        %v1651 = vsel %vm1650, %v1642, %v1647
        %v1652 = vsub.f32 %v1197, %v1348
        %v1653 = vsub.f32 %v1200, %v1349
        %v1654 = vsub.f32 %v1203, %v1350
        %v1655 = vsub.f32 %v1206, %v1351
        %v1656 = vsub.f32 %v1209, %v1352
        %v1657 = vsub.f32 %v1212, %v1353
        %v1658 = vsub.f32 %v1215, %v1354
        %v1659 = vsub.f32 %v1218, %v1355
        %v1660 = vsub.f32 %v1221, %v1356
        %v1661 = vsub.f32 %v1224, %v1357
        %v1662 = vsub.f32 %v1227, %v1358
        %v1663 = vsub.f32 %v1230, %v1359
        %v1664 = vsub.f32 %v1233, %v1360
        %v1665 = vsub.f32 %v1236, %v1361
        %v1666 = vsub.f32 %v1239, %v1362
        %v1667 = vsub.f32 %v1242, %v1363
        %v1668 = vsub.f32 %v1245, %v1364
        %v1669 = vsub.f32 %v1248, %v1365
        %v1670 = vsub.f32 %v1251, %v1366
        %v1671 = vmul.f32 %v1652, %v1471
        %v1672 = vmul.f32 %v1653, %v1481
        %v1673 = vmul.f32 %v1654, %v1491
        %v1674 = vmul.f32 %v1655, %v1501
        %v1675 = vmul.f32 %v1656, %v1511
        %v1676 = vmul.f32 %v1657, %v1521
        %v1677 = vmul.f32 %v1658, %v1531
        %v1678 = vmul.f32 %v1659, %v1541
        %v1679 = vmul.f32 %v1660, %v1551
        %v1680 = vmul.f32 %v1661, %v1561
        %v1681 = vmul.f32 %v1662, %v1571
        %v1682 = vmul.f32 %v1663, %v1581
        %v1683 = vmul.f32 %v1664, %v1591
        %v1684 = vmul.f32 %v1665, %v1601
        %v1685 = vmul.f32 %v1666, %v1611
        %v1686 = vmul.f32 %v1667, %v1621
        %v1687 = vmul.f32 %v1668, %v1631
        %v1688 = vmul.f32 %v1669, %v1641
        %v1689 = vmul.f32 %v1670, %v1651
        %v1690 = vld [vmem:[%s7] sm:$0x1]
        %v1692 = vperm.slane %v1690, 0
        %v1694 = vmul.f32 %v1671, %v1692
        %v1695 = vmul.f32 %v1672, %v1692
        %v1696 = vmul.f32 %v1673, %v1692
        %v1697 = vmul.f32 %v1674, %v1692
        %v1698 = vmul.f32 %v1675, %v1692
        %v1699 = vmul.f32 %v1676, %v1692
        %v1700 = vmul.f32 %v1677, %v1692
        %v1701 = vmul.f32 %v1678, %v1692
        %v1702 = vmul.f32 %v1679, %v1692
        %v1703 = vmul.f32 %v1680, %v1692
        %v1704 = vmul.f32 %v1681, %v1692
        %v1705 = vmul.f32 %v1682, %v1692
        %v1706 = vmul.f32 %v1683, %v1692
        %v1707 = vmul.f32 %v1684, %v1692
        %v1708 = vmul.f32 %v1685, %v1692
        %v1709 = vmul.f32 %v1686, %v1692
        %v1710 = vmul.f32 %v1687, %v1692
        %v1711 = vmul.f32 %v1688, %v1692
        %v1712 = vmul.f32 %v1689, %v1692
        %v1713 = vld [vmem:[%s8] sm:$0x1]
        %v1715 = vperm.slane %v1713, 0
        %v1717 = vadd.f32 %v1694, %v1715
        %v1718 = vadd.f32 %v1695, %v1715
        %v1719 = vadd.f32 %v1696, %v1715
        %v1720 = vadd.f32 %v1697, %v1715
        %v1721 = vadd.f32 %v1698, %v1715
        %v1722 = vadd.f32 %v1699, %v1715
        %v1723 = vadd.f32 %v1700, %v1715
        %v1724 = vadd.f32 %v1701, %v1715
        %v1725 = vadd.f32 %v1702, %v1715
        %v1726 = vadd.f32 %v1703, %v1715
        %v1727 = vadd.f32 %v1704, %v1715
        %v1728 = vadd.f32 %v1705, %v1715
        %v1729 = vadd.f32 %v1706, %v1715
        %v1730 = vadd.f32 %v1707, %v1715
        %v1731 = vadd.f32 %v1708, %v1715
        %v1732 = vadd.f32 %v1709, %v1715
        %v1733 = vadd.f32 %v1710, %v1715
        %v1734 = vadd.f32 %v1711, %v1715
        %v1735 = vadd.f32 %v1712, %v1715
        %v1736 = vmax.f32 %v1717, 0.0
        %v1737 = vmax.f32 %v1718, 0.0
        %v1738 = vmax.f32 %v1719, 0.0
        %v1739 = vmax.f32 %v1720, 0.0
        %v1740 = vmax.f32 %v1721, 0.0
        %v1741 = vmax.f32 %v1722, 0.0
        %v1742 = vmax.f32 %v1723, 0.0
        %v1743 = vmax.f32 %v1724, 0.0
        %v1744 = vmax.f32 %v1725, 0.0
        %v1745 = vmax.f32 %v1726, 0.0
        %v1746 = vmax.f32 %v1727, 0.0
        %v1747 = vmax.f32 %v1728, 0.0
        %v1748 = vmax.f32 %v1729, 0.0
        %v1749 = vmax.f32 %v1730, 0.0
        %v1750 = vmax.f32 %v1731, 0.0
        %v1751 = vmax.f32 %v1732, 0.0
        %v1752 = vmax.f32 %v1733, 0.0
        %v1753 = vmax.f32 %v1734, 0.0
        %v1754 = vmax.f32 %v1735, 0.0
        %v1755 = vld [vmem:[%s9] sm:$0xff]
        %v1756 = vld [vmem:[%s9 + $0x8] sm:$0xff]
        %v1757 = vld [vmem:[%s9 + $0x10] sm:$0xff]
        %v1758 = vld [vmem:[%s9 + $0x18] sm:$0xff]
        %v1759 = vld [vmem:[%s9 + $0x20] sm:$0xff]
        %v1760 = vld [vmem:[%s9 + $0x28] sm:$0xff]
        %v1761 = vld [vmem:[%s9 + $0x30] sm:$0xff]
        %v1762 = vld [vmem:[%s9 + $0x38] sm:$0xff]
        %v1763 = vld [vmem:[%s9 + $0x40] sm:$0xff]
        %v1764 = vld [vmem:[%s9 + $0x48] sm:$0xff]
        %v1765 = vld [vmem:[%s9 + $0x50] sm:$0xff]
        %v1766 = vld [vmem:[%s9 + $0x58] sm:$0xff]
        %v1767 = vld [vmem:[%s9 + $0x60] sm:$0xff]
        %v1768 = vld [vmem:[%s9 + $0x68] sm:$0xff]
        %v1769 = vld [vmem:[%s9 + $0x70] sm:$0xff]
        %v1770 = vld [vmem:[%s9 + $0x78] sm:$0xff]
        %v1771 = vld [vmem:[%s10] sm:$0x1]
        %v1773 = vperm.slane %v1771, 0
        %1775 = vmatpush.msra.mxu0 %v1770
        %1776 = vmatpush.msra.mxu0 %v1769
        %1777 = vmatpush.msra.mxu0 %v1768
        %1778 = vmatpush.msra.mxu0 %v1767
        %1779 = vmatpush.msra.mxu0 %v1766
        %1780 = vmatpush.msra.mxu0 %v1765
        %1781 = vmatpush.msra.mxu0 %v1764
        %1782 = vmatpush.msra.mxu0 %v1763
        %1783 = vmatpush.msra.mxu0 %v1762
        %1784 = vmatpush.msra.mxu0 %v1761
        %1785 = vmatpush.msra.mxu0 %v1760
        %1786 = vmatpush.msra.mxu0 %v1759
        %1787 = vmatpush.msra.mxu0 %v1758
        %1788 = vmatpush.msra.mxu0 %v1757
        %1789 = vmatpush.msra.mxu0 %v1756
        %1790 = vmatpush.msra.mxu0 %v1755
        %1791 = vmatmul.f32.gmra.mxu0 %v1736
        %v1792 = vpop.f32.mrf.mxu0
        %v1793 = vadd.f32 %v1773, %v1792
        %1794 = vmatmul.f32.gmra.mxu0 %v1737
        %v1795 = vpop.f32.mrf.mxu0
        %v1796 = vadd.f32 %v1773, %v1795
        %1797 = vmatmul.f32.gmra.mxu0 %v1738
        %v1798 = vpop.f32.mrf.mxu0
        %v1799 = vadd.f32 %v1773, %v1798
        %1800 = vmatmul.f32.gmra.mxu0 %v1739
        %v1801 = vpop.f32.mrf.mxu0
        %v1802 = vadd.f32 %v1773, %v1801
        %1803 = vmatmul.f32.gmra.mxu0 %v1740
        %v1804 = vpop.f32.mrf.mxu0
        %v1805 = vadd.f32 %v1773, %v1804
        %1806 = vmatmul.f32.gmra.mxu0 %v1741
        %v1807 = vpop.f32.mrf.mxu0
        %v1808 = vadd.f32 %v1773, %v1807
        %1809 = vmatmul.f32.gmra.mxu0 %v1742
        %v1810 = vpop.f32.mrf.mxu0
        %v1811 = vadd.f32 %v1773, %v1810
        %1812 = vmatmul.f32.gmra.mxu0 %v1743
        %v1813 = vpop.f32.mrf.mxu0
        %v1814 = vadd.f32 %v1773, %v1813
        %1815 = vmatmul.f32.gmra.mxu0 %v1744
        %v1816 = vpop.f32.mrf.mxu0
        %v1817 = vadd.f32 %v1773, %v1816
        %1818 = vmatmul.f32.gmra.mxu0 %v1745
        %v1819 = vpop.f32.mrf.mxu0
        %v1820 = vadd.f32 %v1773, %v1819
        %1821 = vmatmul.f32.gmra.mxu0 %v1746
        %v1822 = vpop.f32.mrf.mxu0
        %v1823 = vadd.f32 %v1773, %v1822
        %1824 = vmatmul.f32.gmra.mxu0 %v1747
        %v1825 = vpop.f32.mrf.mxu0
        %v1826 = vadd.f32 %v1773, %v1825
        %1827 = vmatmul.f32.gmra.mxu0 %v1748
        %v1828 = vpop.f32.mrf.mxu0
        %v1829 = vadd.f32 %v1773, %v1828
        %1830 = vmatmul.f32.gmra.mxu0 %v1749
        %v1831 = vpop.f32.mrf.mxu0
        %v1832 = vadd.f32 %v1773, %v1831
        %1833 = vmatmul.f32.gmra.mxu0 %v1750
        %v1834 = vpop.f32.mrf.mxu0
        %v1835 = vadd.f32 %v1773, %v1834
        %1836 = vmatmul.f32.gmra.mxu0 %v1751
        %v1837 = vpop.f32.mrf.mxu0
        %v1838 = vadd.f32 %v1773, %v1837
        %1839 = vmatmul.f32.gmra.mxu0 %v1752
        %v1840 = vpop.f32.mrf.mxu0
        %v1841 = vadd.f32 %v1773, %v1840
        %1842 = vmatmul.f32.gmra.mxu0 %v1753
        %v1843 = vpop.f32.mrf.mxu0
        %v1844 = vadd.f32 %v1773, %v1843
        %1845 = vmatmul.f32.gmra.mxu0 %v1754
        %v1846 = vpop.f32.mrf.mxu0
        %v1847 = vadd.f32 %v1773, %v1846
        %1848 = vdwg.mxu0
        %1849 = vadd.xlane.f32.xlu0 %v1793
        %v1850 = vpop.xlane.xlu0 %1849
        %1851 = vadd.xlane.f32.xlu0 %v1796
        %v1852 = vpop.xlane.xlu0 %1851
        %1853 = vadd.xlane.f32.xlu0 %v1799
        %v1854 = vpop.xlane.xlu0 %1853
        %1855 = vadd.xlane.f32.xlu0 %v1802
        %v1856 = vpop.xlane.xlu0 %1855
        %1857 = vadd.xlane.f32.xlu0 %v1805
        %v1858 = vpop.xlane.xlu0 %1857
        %1859 = vadd.xlane.f32.xlu0 %v1808
        %v1860 = vpop.xlane.xlu0 %1859
        %1861 = vadd.xlane.f32.xlu0 %v1811
        %v1862 = vpop.xlane.xlu0 %1861
        %1863 = vadd.xlane.f32.xlu0 %v1814
        %v1864 = vpop.xlane.xlu0 %1863
        %1865 = vadd.xlane.f32.xlu0 %v1817
        %v1866 = vpop.xlane.xlu0 %1865
        %1867 = vadd.xlane.f32.xlu0 %v1820
        %v1868 = vpop.xlane.xlu0 %1867
        %1869 = vadd.xlane.f32.xlu0 %v1823
        %v1870 = vpop.xlane.xlu0 %1869
        %1871 = vadd.xlane.f32.xlu0 %v1826
        %v1872 = vpop.xlane.xlu0 %1871
        %1873 = vadd.xlane.f32.xlu0 %v1829
        %v1874 = vpop.xlane.xlu0 %1873
        %1875 = vadd.xlane.f32.xlu0 %v1832
        %v1876 = vpop.xlane.xlu0 %1875
        %1877 = vadd.xlane.f32.xlu0 %v1835
        %v1878 = vpop.xlane.xlu0 %1877
        %1879 = vadd.xlane.f32.xlu0 %v1838
        %v1880 = vpop.xlane.xlu0 %1879
        %1881 = vadd.xlane.f32.xlu0 %v1841
        %v1882 = vpop.xlane.xlu0 %1881
        %1883 = vadd.xlane.f32.xlu0 %v1844
        %v1884 = vpop.xlane.xlu0 %1883
        %1885 = vadd.xlane.f32.xlu0 %v1847
        %v1886 = vpop.xlane.xlu0 %1885
        %v1887 = vmul.f32 %v1793, %v1793
        %v1888 = vmul.f32 %v1796, %v1796
        %v1889 = vmul.f32 %v1799, %v1799
        %v1890 = vmul.f32 %v1802, %v1802
        %v1891 = vmul.f32 %v1805, %v1805
        %v1892 = vmul.f32 %v1808, %v1808
        %v1893 = vmul.f32 %v1811, %v1811
        %v1894 = vmul.f32 %v1814, %v1814
        %v1895 = vmul.f32 %v1817, %v1817
        %v1896 = vmul.f32 %v1820, %v1820
        %v1897 = vmul.f32 %v1823, %v1823
        %v1898 = vmul.f32 %v1826, %v1826
        %v1899 = vmul.f32 %v1829, %v1829
        %v1900 = vmul.f32 %v1832, %v1832
        %v1901 = vmul.f32 %v1835, %v1835
        %v1902 = vmul.f32 %v1838, %v1838
        %v1903 = vmul.f32 %v1841, %v1841
        %v1904 = vmul.f32 %v1844, %v1844
        %v1905 = vmul.f32 %v1847, %v1847
        %1906 = vadd.xlane.f32.xlu0 %v1887
        %v1907 = vpop.xlane.xlu0 %1906
        %1908 = vadd.xlane.f32.xlu0 %v1888
        %v1909 = vpop.xlane.xlu0 %1908
        %1910 = vadd.xlane.f32.xlu0 %v1889
        %v1911 = vpop.xlane.xlu0 %1910
        %1912 = vadd.xlane.f32.xlu0 %v1890
        %v1913 = vpop.xlane.xlu0 %1912
        %1914 = vadd.xlane.f32.xlu0 %v1891
        %v1915 = vpop.xlane.xlu0 %1914
        %1916 = vadd.xlane.f32.xlu0 %v1892
        %v1917 = vpop.xlane.xlu0 %1916
        %1918 = vadd.xlane.f32.xlu0 %v1893
        %v1919 = vpop.xlane.xlu0 %1918
        %1920 = vadd.xlane.f32.xlu0 %v1894
        %v1921 = vpop.xlane.xlu0 %1920
        %1922 = vadd.xlane.f32.xlu0 %v1895
        %v1923 = vpop.xlane.xlu0 %1922
        %1924 = vadd.xlane.f32.xlu0 %v1896
        %v1925 = vpop.xlane.xlu0 %1924
        %1926 = vadd.xlane.f32.xlu0 %v1897
        %v1927 = vpop.xlane.xlu0 %1926
        %1928 = vadd.xlane.f32.xlu0 %v1898
        %v1929 = vpop.xlane.xlu0 %1928
        %1930 = vadd.xlane.f32.xlu0 %v1899
        %v1931 = vpop.xlane.xlu0 %1930
        %1932 = vadd.xlane.f32.xlu0 %v1900
        %v1933 = vpop.xlane.xlu0 %1932
        %1934 = vadd.xlane.f32.xlu0 %v1901
        %v1935 = vpop.xlane.xlu0 %1934
        %1936 = vadd.xlane.f32.xlu0 %v1902
        %v1937 = vpop.xlane.xlu0 %1936
        %1938 = vadd.xlane.f32.xlu0 %v1903
        %v1939 = vpop.xlane.xlu0 %1938
        %1940 = vadd.xlane.f32.xlu0 %v1904
        %v1941 = vpop.xlane.xlu0 %1940
        %1942 = vadd.xlane.f32.xlu0 %v1905
        %v1943 = vpop.xlane.xlu0 %1942
        %v1944 = vmul.f32 %v1850, 0.010416667
        %v1945 = vmul.f32 %v1852, 0.010416667
        %v1946 = vmul.f32 %v1854, 0.010416667
        %v1947 = vmul.f32 %v1856, 0.010416667
        %v1948 = vmul.f32 %v1858, 0.010416667
        %v1949 = vmul.f32 %v1860, 0.010416667
        %v1950 = vmul.f32 %v1862, 0.010416667
        %v1951 = vmul.f32 %v1864, 0.010416667
        %v1952 = vmul.f32 %v1866, 0.010416667
        %v1953 = vmul.f32 %v1868, 0.010416667
        %v1954 = vmul.f32 %v1870, 0.010416667
        %v1955 = vmul.f32 %v1872, 0.010416667
        %v1956 = vmul.f32 %v1874, 0.010416667
        %v1957 = vmul.f32 %v1876, 0.010416667
        %v1958 = vmul.f32 %v1878, 0.010416667
        %v1959 = vmul.f32 %v1880, 0.010416667
        %v1960 = vmul.f32 %v1882, 0.010416667
        %v1961 = vmul.f32 %v1884, 0.010416667
        %v1962 = vmul.f32 %v1886, 0.010416667
        %v1963 = vmul.f32 %v1907, 0.010416667
        %v1964 = vmul.f32 %v1909, 0.010416667
        %v1965 = vmul.f32 %v1911, 0.010416667
        %v1966 = vmul.f32 %v1913, 0.010416667
        %v1967 = vmul.f32 %v1915, 0.010416667
        %v1968 = vmul.f32 %v1917, 0.010416667
        %v1969 = vmul.f32 %v1919, 0.010416667
        %v1970 = vmul.f32 %v1921, 0.010416667
        %v1971 = vmul.f32 %v1923, 0.010416667
        %v1972 = vmul.f32 %v1925, 0.010416667
        %v1973 = vmul.f32 %v1927, 0.010416667
        %v1974 = vmul.f32 %v1929, 0.010416667
        %v1975 = vmul.f32 %v1931, 0.010416667
        %v1976 = vmul.f32 %v1933, 0.010416667
        %v1977 = vmul.f32 %v1935, 0.010416667
        %v1978 = vmul.f32 %v1937, 0.010416667
        %v1979 = vmul.f32 %v1939, 0.010416667
        %v1980 = vmul.f32 %v1941, 0.010416667
        %v1981 = vmul.f32 %v1943, 0.010416667
        %v1982 = vmul.f32 %v1944, %v1944
        %v1983 = vmul.f32 %v1945, %v1945
        %v1984 = vmul.f32 %v1946, %v1946
        %v1985 = vmul.f32 %v1947, %v1947
        %v1986 = vmul.f32 %v1948, %v1948
        %v1987 = vmul.f32 %v1949, %v1949
        %v1988 = vmul.f32 %v1950, %v1950
        %v1989 = vmul.f32 %v1951, %v1951
        %v1990 = vmul.f32 %v1952, %v1952
        %v1991 = vmul.f32 %v1953, %v1953
        %v1992 = vmul.f32 %v1954, %v1954
        %v1993 = vmul.f32 %v1955, %v1955
        %v1994 = vmul.f32 %v1956, %v1956
        %v1995 = vmul.f32 %v1957, %v1957
        %v1996 = vmul.f32 %v1958, %v1958
        %v1997 = vmul.f32 %v1959, %v1959
        %v1998 = vmul.f32 %v1960, %v1960
        %v1999 = vmul.f32 %v1961, %v1961
        %v2000 = vmul.f32 %v1962, %v1962
        %v2001 = vsub.f32 %v1963, %v1982
        %v2002 = vsub.f32 %v1964, %v1983
        %v2003 = vsub.f32 %v1965, %v1984
        %v2004 = vsub.f32 %v1966, %v1985
        %v2005 = vsub.f32 %v1967, %v1986
        %v2006 = vsub.f32 %v1968, %v1987
        %v2007 = vsub.f32 %v1969, %v1988
        %v2008 = vsub.f32 %v1970, %v1989
        %v2009 = vsub.f32 %v1971, %v1990
        %v2010 = vsub.f32 %v1972, %v1991
        %v2011 = vsub.f32 %v1973, %v1992
        %v2012 = vsub.f32 %v1974, %v1993
        %v2013 = vsub.f32 %v1975, %v1994
        %v2014 = vsub.f32 %v1976, %v1995
        %v2015 = vsub.f32 %v1977, %v1996
        %v2016 = vsub.f32 %v1978, %v1997
        %v2017 = vsub.f32 %v1979, %v1998
        %v2018 = vsub.f32 %v1980, %v1999
        %v2019 = vsub.f32 %v1981, %v2000
        %v2020 = vmax.f32 %v2001, 0.0
        %v2021 = vmax.f32 %v2002, 0.0
        %v2022 = vmax.f32 %v2003, 0.0
        %v2023 = vmax.f32 %v2004, 0.0
        %v2024 = vmax.f32 %v2005, 0.0
        %v2025 = vmax.f32 %v2006, 0.0
        %v2026 = vmax.f32 %v2007, 0.0
        %v2027 = vmax.f32 %v2008, 0.0
        %v2028 = vmax.f32 %v2009, 0.0
        %v2029 = vmax.f32 %v2010, 0.0
        %v2030 = vmax.f32 %v2011, 0.0
        %v2031 = vmax.f32 %v2012, 0.0
        %v2032 = vmax.f32 %v2013, 0.0
        %v2033 = vmax.f32 %v2014, 0.0
        %v2034 = vmax.f32 %v2015, 0.0
        %v2035 = vmax.f32 %v2016, 0.0
        %v2036 = vmax.f32 %v2017, 0.0
        %v2037 = vmax.f32 %v2018, 0.0
        %v2038 = vmax.f32 %v2019, 0.0
        %v2039 = vadd.f32 %v2020, 1e-05
        %v2040 = vadd.f32 %v2021, 1e-05
        %v2041 = vadd.f32 %v2022, 1e-05
        %v2042 = vadd.f32 %v2023, 1e-05
        %v2043 = vadd.f32 %v2024, 1e-05
        %v2044 = vadd.f32 %v2025, 1e-05
        %v2045 = vadd.f32 %v2026, 1e-05
        %v2046 = vadd.f32 %v2027, 1e-05
        %v2047 = vadd.f32 %v2028, 1e-05
        %v2048 = vadd.f32 %v2029, 1e-05
        %v2049 = vadd.f32 %v2030, 1e-05
        %v2050 = vadd.f32 %v2031, 1e-05
        %v2051 = vadd.f32 %v2032, 1e-05
        %v2052 = vadd.f32 %v2033, 1e-05
        %v2053 = vadd.f32 %v2034, 1e-05
        %v2054 = vadd.f32 %v2035, 1e-05
        %v2055 = vadd.f32 %v2036, 1e-05
        %v2056 = vadd.f32 %v2037, 1e-05
        %v2057 = vadd.f32 %v2038, 1e-05
        %v2058 = vrsqrt.pop %v2039
        %v2059 = vmul.f32 %v2058, %v2039
        %v2060 = vmul.f32 %v2059, %v2058
        %v2061 = vmul.f32 0.5, %v2060
        %v2062 = vsub.f32 1.5, %v2061
        %v2063 = vmul.f32 %v2058, %v2062
        %vm2064 = vweird.f32 %v2039
        %vm2065 = vweird.f32 %v2058
        %vm2066 = vmor %vm2064, %vm2065
        %v2067 = vsel %vm2066, %v2058, %v2063
        %v2068 = vrsqrt.pop %v2040
        %v2069 = vmul.f32 %v2068, %v2040
        %v2070 = vmul.f32 %v2069, %v2068
        %v2071 = vmul.f32 0.5, %v2070
        %v2072 = vsub.f32 1.5, %v2071
        %v2073 = vmul.f32 %v2068, %v2072
        %vm2074 = vweird.f32 %v2040
        %vm2075 = vweird.f32 %v2068
        %vm2076 = vmor %vm2074, %vm2075
        %v2077 = vsel %vm2076, %v2068, %v2073
        %v2078 = vrsqrt.pop %v2041
        %v2079 = vmul.f32 %v2078, %v2041
        %v2080 = vmul.f32 %v2079, %v2078
        %v2081 = vmul.f32 0.5, %v2080
        %v2082 = vsub.f32 1.5, %v2081
        %v2083 = vmul.f32 %v2078, %v2082
        %vm2084 = vweird.f32 %v2041
        %vm2085 = vweird.f32 %v2078
        %vm2086 = vmor %vm2084, %vm2085
        %v2087 = vsel %vm2086, %v2078, %v2083
        %v2088 = vrsqrt.pop %v2042
        %v2089 = vmul.f32 %v2088, %v2042
        %v2090 = vmul.f32 %v2089, %v2088
        %v2091 = vmul.f32 0.5, %v2090
        %v2092 = vsub.f32 1.5, %v2091
        %v2093 = vmul.f32 %v2088, %v2092
        %vm2094 = vweird.f32 %v2042
        %vm2095 = vweird.f32 %v2088
        %vm2096 = vmor %vm2094, %vm2095
        %v2097 = vsel %vm2096, %v2088, %v2093
        %v2098 = vrsqrt.pop %v2043
        %v2099 = vmul.f32 %v2098, %v2043
        %v2100 = vmul.f32 %v2099, %v2098
        %v2101 = vmul.f32 0.5, %v2100
        %v2102 = vsub.f32 1.5, %v2101
        %v2103 = vmul.f32 %v2098, %v2102
        %vm2104 = vweird.f32 %v2043
        %vm2105 = vweird.f32 %v2098
        %vm2106 = vmor %vm2104, %vm2105
        %v2107 = vsel %vm2106, %v2098, %v2103
        %v2108 = vrsqrt.pop %v2044
        %v2109 = vmul.f32 %v2108, %v2044
        %v2110 = vmul.f32 %v2109, %v2108
        %v2111 = vmul.f32 0.5, %v2110
        %v2112 = vsub.f32 1.5, %v2111
        %v2113 = vmul.f32 %v2108, %v2112
        %vm2114 = vweird.f32 %v2044
        %vm2115 = vweird.f32 %v2108
        %vm2116 = vmor %vm2114, %vm2115
        %v2117 = vsel %vm2116, %v2108, %v2113
        %v2118 = vrsqrt.pop %v2045
        %v2119 = vmul.f32 %v2118, %v2045
        %v2120 = vmul.f32 %v2119, %v2118
        %v2121 = vmul.f32 0.5, %v2120
        %v2122 = vsub.f32 1.5, %v2121
        %v2123 = vmul.f32 %v2118, %v2122
        %vm2124 = vweird.f32 %v2045
        %vm2125 = vweird.f32 %v2118
        %vm2126 = vmor %vm2124, %vm2125
        %v2127 = vsel %vm2126, %v2118, %v2123
        %v2128 = vrsqrt.pop %v2046
        %v2129 = vmul.f32 %v2128, %v2046
        %v2130 = vmul.f32 %v2129, %v2128
        %v2131 = vmul.f32 0.5, %v2130
        %v2132 = vsub.f32 1.5, %v2131
        %v2133 = vmul.f32 %v2128, %v2132
        %vm2134 = vweird.f32 %v2046
        %vm2135 = vweird.f32 %v2128
        %vm2136 = vmor %vm2134, %vm2135
        %v2137 = vsel %vm2136, %v2128, %v2133
        %v2138 = vrsqrt.pop %v2047
        %v2139 = vmul.f32 %v2138, %v2047
        %v2140 = vmul.f32 %v2139, %v2138
        %v2141 = vmul.f32 0.5, %v2140
        %v2142 = vsub.f32 1.5, %v2141
        %v2143 = vmul.f32 %v2138, %v2142
        %vm2144 = vweird.f32 %v2047
        %vm2145 = vweird.f32 %v2138
        %vm2146 = vmor %vm2144, %vm2145
        %v2147 = vsel %vm2146, %v2138, %v2143
        %v2148 = vrsqrt.pop %v2048
        %v2149 = vmul.f32 %v2148, %v2048
        %v2150 = vmul.f32 %v2149, %v2148
        %v2151 = vmul.f32 0.5, %v2150
        %v2152 = vsub.f32 1.5, %v2151
        %v2153 = vmul.f32 %v2148, %v2152
        %vm2154 = vweird.f32 %v2048
        %vm2155 = vweird.f32 %v2148
        %vm2156 = vmor %vm2154, %vm2155
        %v2157 = vsel %vm2156, %v2148, %v2153
        %v2158 = vrsqrt.pop %v2049
        %v2159 = vmul.f32 %v2158, %v2049
        %v2160 = vmul.f32 %v2159, %v2158
        %v2161 = vmul.f32 0.5, %v2160
        %v2162 = vsub.f32 1.5, %v2161
        %v2163 = vmul.f32 %v2158, %v2162
        %vm2164 = vweird.f32 %v2049
        %vm2165 = vweird.f32 %v2158
        %vm2166 = vmor %vm2164, %vm2165
        %v2167 = vsel %vm2166, %v2158, %v2163
        %v2168 = vrsqrt.pop %v2050
        %v2169 = vmul.f32 %v2168, %v2050
        %v2170 = vmul.f32 %v2169, %v2168
        %v2171 = vmul.f32 0.5, %v2170
        %v2172 = vsub.f32 1.5, %v2171
        %v2173 = vmul.f32 %v2168, %v2172
        %vm2174 = vweird.f32 %v2050
        %vm2175 = vweird.f32 %v2168
        %vm2176 = vmor %vm2174, %vm2175
        %v2177 = vsel %vm2176, %v2168, %v2173
        %v2178 = vrsqrt.pop %v2051
        %v2179 = vmul.f32 %v2178, %v2051
        %v2180 = vmul.f32 %v2179, %v2178
        %v2181 = vmul.f32 0.5, %v2180
        %v2182 = vsub.f32 1.5, %v2181
        %v2183 = vmul.f32 %v2178, %v2182
        %vm2184 = vweird.f32 %v2051
        %vm2185 = vweird.f32 %v2178
        %vm2186 = vmor %vm2184, %vm2185
        %v2187 = vsel %vm2186, %v2178, %v2183
        %v2188 = vrsqrt.pop %v2052
        %v2189 = vmul.f32 %v2188, %v2052
        %v2190 = vmul.f32 %v2189, %v2188
        %v2191 = vmul.f32 0.5, %v2190
        %v2192 = vsub.f32 1.5, %v2191
        %v2193 = vmul.f32 %v2188, %v2192
        %vm2194 = vweird.f32 %v2052
        %vm2195 = vweird.f32 %v2188
        %vm2196 = vmor %vm2194, %vm2195
        %v2197 = vsel %vm2196, %v2188, %v2193
        %v2198 = vrsqrt.pop %v2053
        %v2199 = vmul.f32 %v2198, %v2053
        %v2200 = vmul.f32 %v2199, %v2198
        %v2201 = vmul.f32 0.5, %v2200
        %v2202 = vsub.f32 1.5, %v2201
        %v2203 = vmul.f32 %v2198, %v2202
        %vm2204 = vweird.f32 %v2053
        %vm2205 = vweird.f32 %v2198
        %vm2206 = vmor %vm2204, %vm2205
        %v2207 = vsel %vm2206, %v2198, %v2203
        %v2208 = vrsqrt.pop %v2054
        %v2209 = vmul.f32 %v2208, %v2054
        %v2210 = vmul.f32 %v2209, %v2208
        %v2211 = vmul.f32 0.5, %v2210
        %v2212 = vsub.f32 1.5, %v2211
        %v2213 = vmul.f32 %v2208, %v2212
        %vm2214 = vweird.f32 %v2054
        %vm2215 = vweird.f32 %v2208
        %vm2216 = vmor %vm2214, %vm2215
        %v2217 = vsel %vm2216, %v2208, %v2213
        %v2218 = vrsqrt.pop %v2055
        %v2219 = vmul.f32 %v2218, %v2055
        %v2220 = vmul.f32 %v2219, %v2218
        %v2221 = vmul.f32 0.5, %v2220
        %v2222 = vsub.f32 1.5, %v2221
        %v2223 = vmul.f32 %v2218, %v2222
        %vm2224 = vweird.f32 %v2055
        %vm2225 = vweird.f32 %v2218
        %vm2226 = vmor %vm2224, %vm2225
        %v2227 = vsel %vm2226, %v2218, %v2223
        %v2228 = vrsqrt.pop %v2056
        %v2229 = vmul.f32 %v2228, %v2056
        %v2230 = vmul.f32 %v2229, %v2228
        %v2231 = vmul.f32 0.5, %v2230
        %v2232 = vsub.f32 1.5, %v2231
        %v2233 = vmul.f32 %v2228, %v2232
        %vm2234 = vweird.f32 %v2056
        %vm2235 = vweird.f32 %v2228
        %vm2236 = vmor %vm2234, %vm2235
        %v2237 = vsel %vm2236, %v2228, %v2233
        %v2238 = vrsqrt.pop %v2057
        %v2239 = vmul.f32 %v2238, %v2057
        %v2240 = vmul.f32 %v2239, %v2238
        %v2241 = vmul.f32 0.5, %v2240
        %v2242 = vsub.f32 1.5, %v2241
        %v2243 = vmul.f32 %v2238, %v2242
        %vm2244 = vweird.f32 %v2057
        %vm2245 = vweird.f32 %v2238
        %vm2246 = vmor %vm2244, %vm2245
        %v2247 = vsel %vm2246, %v2238, %v2243
        %v2248 = vsub.f32 %v1793, %v1944
        %v2249 = vsub.f32 %v1796, %v1945
        %v2250 = vsub.f32 %v1799, %v1946
        %v2251 = vsub.f32 %v1802, %v1947
        %v2252 = vsub.f32 %v1805, %v1948
        %v2253 = vsub.f32 %v1808, %v1949
        %v2254 = vsub.f32 %v1811, %v1950
        %v2255 = vsub.f32 %v1814, %v1951
        %v2256 = vsub.f32 %v1817, %v1952
        %v2257 = vsub.f32 %v1820, %v1953
        %v2258 = vsub.f32 %v1823, %v1954
        %v2259 = vsub.f32 %v1826, %v1955
        %v2260 = vsub.f32 %v1829, %v1956
        %v2261 = vsub.f32 %v1832, %v1957
        %v2262 = vsub.f32 %v1835, %v1958
        %v2263 = vsub.f32 %v1838, %v1959
        %v2264 = vsub.f32 %v1841, %v1960
        %v2265 = vsub.f32 %v1844, %v1961
        %v2266 = vsub.f32 %v1847, %v1962
        %v2267 = vmul.f32 %v2248, %v2067
        %v2268 = vmul.f32 %v2249, %v2077
        %v2269 = vmul.f32 %v2250, %v2087
        %v2270 = vmul.f32 %v2251, %v2097
        %v2271 = vmul.f32 %v2252, %v2107
        %v2272 = vmul.f32 %v2253, %v2117
        %v2273 = vmul.f32 %v2254, %v2127
        %v2274 = vmul.f32 %v2255, %v2137
        %v2275 = vmul.f32 %v2256, %v2147
        %v2276 = vmul.f32 %v2257, %v2157
        %v2277 = vmul.f32 %v2258, %v2167
        %v2278 = vmul.f32 %v2259, %v2177
        %v2279 = vmul.f32 %v2260, %v2187
        %v2280 = vmul.f32 %v2261, %v2197
        %v2281 = vmul.f32 %v2262, %v2207
        %v2282 = vmul.f32 %v2263, %v2217
        %v2283 = vmul.f32 %v2264, %v2227
        %v2284 = vmul.f32 %v2265, %v2237
        %v2285 = vmul.f32 %v2266, %v2247
        %v2286 = vld [vmem:[%s11] sm:$0x1]
        %v2288 = vperm.slane %v2286, 0
        %v2290 = vmul.f32 %v2267, %v2288
        %v2291 = vmul.f32 %v2268, %v2288
        %v2292 = vmul.f32 %v2269, %v2288
        %v2293 = vmul.f32 %v2270, %v2288
        %v2294 = vmul.f32 %v2271, %v2288
        %v2295 = vmul.f32 %v2272, %v2288
        %v2296 = vmul.f32 %v2273, %v2288
        %v2297 = vmul.f32 %v2274, %v2288
        %v2298 = vmul.f32 %v2275, %v2288
        %v2299 = vmul.f32 %v2276, %v2288
        %v2300 = vmul.f32 %v2277, %v2288
        %v2301 = vmul.f32 %v2278, %v2288
        %v2302 = vmul.f32 %v2279, %v2288
        %v2303 = vmul.f32 %v2280, %v2288
        %v2304 = vmul.f32 %v2281, %v2288
        %v2305 = vmul.f32 %v2282, %v2288
        %v2306 = vmul.f32 %v2283, %v2288
        %v2307 = vmul.f32 %v2284, %v2288
        %v2308 = vmul.f32 %v2285, %v2288
        %v2309 = vld [vmem:[%s12] sm:$0x1]
        %v2311 = vperm.slane %v2309, 0
        %v2313 = vadd.f32 %v2290, %v2311
        %v2314 = vadd.f32 %v2291, %v2311
        %v2315 = vadd.f32 %v2292, %v2311
        %v2316 = vadd.f32 %v2293, %v2311
        %v2317 = vadd.f32 %v2294, %v2311
        %v2318 = vadd.f32 %v2295, %v2311
        %v2319 = vadd.f32 %v2296, %v2311
        %v2320 = vadd.f32 %v2297, %v2311
        %v2321 = vadd.f32 %v2298, %v2311
        %v2322 = vadd.f32 %v2299, %v2311
        %v2323 = vadd.f32 %v2300, %v2311
        %v2324 = vadd.f32 %v2301, %v2311
        %v2325 = vadd.f32 %v2302, %v2311
        %v2326 = vadd.f32 %v2303, %v2311
        %v2327 = vadd.f32 %v2304, %v2311
        %v2328 = vadd.f32 %v2305, %v2311
        %v2329 = vadd.f32 %v2306, %v2311
        %v2330 = vadd.f32 %v2307, %v2311
        %v2331 = vadd.f32 %v2308, %v2311
        %v2332 = vmax.f32 %v2313, 0.0
        %v2333 = vmax.f32 %v2314, 0.0
        %v2334 = vmax.f32 %v2315, 0.0
        %v2335 = vmax.f32 %v2316, 0.0
        %v2336 = vmax.f32 %v2317, 0.0
        %v2337 = vmax.f32 %v2318, 0.0
        %v2338 = vmax.f32 %v2319, 0.0
        %v2339 = vmax.f32 %v2320, 0.0
        %v2340 = vmax.f32 %v2321, 0.0
        %v2341 = vmax.f32 %v2322, 0.0
        %v2342 = vmax.f32 %v2323, 0.0
        %v2343 = vmax.f32 %v2324, 0.0
        %v2344 = vmax.f32 %v2325, 0.0
        %v2345 = vmax.f32 %v2326, 0.0
        %v2346 = vmax.f32 %v2327, 0.0
        %v2347 = vmax.f32 %v2328, 0.0
        %v2348 = vmax.f32 %v2329, 0.0
        %v2349 = vmax.f32 %v2330, 0.0
        %v2350 = vmax.f32 %v2331, 0.0
        %v2351 = vld [vmem:[%s13] sm:$0xff]
        %v2352 = vld [vmem:[%s13 + $0x8] sm:$0xff]
        %v2353 = vld [vmem:[%s13 + $0x10] sm:$0xff]
        %v2354 = vld [vmem:[%s13 + $0x18] sm:$0xff]
        %v2355 = vld [vmem:[%s13 + $0x20] sm:$0xff]
        %v2356 = vld [vmem:[%s13 + $0x28] sm:$0xff]
        %v2357 = vld [vmem:[%s13 + $0x30] sm:$0xff]
        %v2358 = vld [vmem:[%s13 + $0x38] sm:$0xff]
        %v2359 = vld [vmem:[%s13 + $0x40] sm:$0xff]
        %v2360 = vld [vmem:[%s13 + $0x48] sm:$0xff]
        %v2361 = vld [vmem:[%s13 + $0x50] sm:$0xff]
        %v2362 = vld [vmem:[%s13 + $0x58] sm:$0xff]
        %v2363 = vld [vmem:[%s13 + $0x60] sm:$0xff]
        %v2364 = vld [vmem:[%s13 + $0x68] sm:$0xff]
        %v2365 = vld [vmem:[%s13 + $0x70] sm:$0xff]
        %v2366 = vld [vmem:[%s13 + $0x78] sm:$0xff]
        %v2367 = vld [vmem:[%s14] sm:$0x1]
        %v2369 = vperm.slane %v2367, 0
        %2371 = vmatpush.msra.mxu0 %v2366
        %2372 = vmatpush.msra.mxu0 %v2365
        %2373 = vmatpush.msra.mxu0 %v2364
        %2374 = vmatpush.msra.mxu0 %v2363
        %2375 = vmatpush.msra.mxu0 %v2362
        %2376 = vmatpush.msra.mxu0 %v2361
        %2377 = vmatpush.msra.mxu0 %v2360
        %2378 = vmatpush.msra.mxu0 %v2359
        %2379 = vmatpush.msra.mxu0 %v2358
        %2380 = vmatpush.msra.mxu0 %v2357
        %2381 = vmatpush.msra.mxu0 %v2356
        %2382 = vmatpush.msra.mxu0 %v2355
        %2383 = vmatpush.msra.mxu0 %v2354
        %2384 = vmatpush.msra.mxu0 %v2353
        %2385 = vmatpush.msra.mxu0 %v2352
        %2386 = vmatpush.msra.mxu0 %v2351
        %2387 = vmatmul.f32.gmra.mxu0 %v2332
        %v2388 = vpop.f32.mrf.mxu0
        %v2389 = vadd.f32 %v2369, %v2388
        %2390 = vmatmul.f32.gmra.mxu0 %v2333
        %v2391 = vpop.f32.mrf.mxu0
        %v2392 = vadd.f32 %v2369, %v2391
        %2393 = vmatmul.f32.gmra.mxu0 %v2334
        %v2394 = vpop.f32.mrf.mxu0
        %v2395 = vadd.f32 %v2369, %v2394
        %2396 = vmatmul.f32.gmra.mxu0 %v2335
        %v2397 = vpop.f32.mrf.mxu0
        %v2398 = vadd.f32 %v2369, %v2397
        %2399 = vmatmul.f32.gmra.mxu0 %v2336
        %v2400 = vpop.f32.mrf.mxu0
        %v2401 = vadd.f32 %v2369, %v2400
        %2402 = vmatmul.f32.gmra.mxu0 %v2337
        %v2403 = vpop.f32.mrf.mxu0
        %v2404 = vadd.f32 %v2369, %v2403
        %2405 = vmatmul.f32.gmra.mxu0 %v2338
        %v2406 = vpop.f32.mrf.mxu0
        %v2407 = vadd.f32 %v2369, %v2406
        %2408 = vmatmul.f32.gmra.mxu0 %v2339
        %v2409 = vpop.f32.mrf.mxu0
        %v2410 = vadd.f32 %v2369, %v2409
        %2411 = vmatmul.f32.gmra.mxu0 %v2340
        %v2412 = vpop.f32.mrf.mxu0
        %v2413 = vadd.f32 %v2369, %v2412
        %2414 = vmatmul.f32.gmra.mxu0 %v2341
        %v2415 = vpop.f32.mrf.mxu0
        %v2416 = vadd.f32 %v2369, %v2415
        %2417 = vmatmul.f32.gmra.mxu0 %v2342
        %v2418 = vpop.f32.mrf.mxu0
        %v2419 = vadd.f32 %v2369, %v2418
        %2420 = vmatmul.f32.gmra.mxu0 %v2343
        %v2421 = vpop.f32.mrf.mxu0
        %v2422 = vadd.f32 %v2369, %v2421
        %2423 = vmatmul.f32.gmra.mxu0 %v2344
        %v2424 = vpop.f32.mrf.mxu0
        %v2425 = vadd.f32 %v2369, %v2424
        %2426 = vmatmul.f32.gmra.mxu0 %v2345
        %v2427 = vpop.f32.mrf.mxu0
        %v2428 = vadd.f32 %v2369, %v2427
        %2429 = vmatmul.f32.gmra.mxu0 %v2346
        %v2430 = vpop.f32.mrf.mxu0
        %v2431 = vadd.f32 %v2369, %v2430
        %2432 = vmatmul.f32.gmra.mxu0 %v2347
        %v2433 = vpop.f32.mrf.mxu0
        %v2434 = vadd.f32 %v2369, %v2433
        %2435 = vmatmul.f32.gmra.mxu0 %v2348
        %v2436 = vpop.f32.mrf.mxu0
        %v2437 = vadd.f32 %v2369, %v2436
        %2438 = vmatmul.f32.gmra.mxu0 %v2349
        %v2439 = vpop.f32.mrf.mxu0
        %v2440 = vadd.f32 %v2369, %v2439
        %2441 = vmatmul.f32.gmra.mxu0 %v2350
        %v2442 = vpop.f32.mrf.mxu0
        %v2443 = vadd.f32 %v2369, %v2442
        %2444 = vdwg.mxu0
        %2445 = vst [vmem:[%s488] sm:$0xff] %v2389
        %2446 = vst [vmem:[%s488 + $0x8] sm:$0xff] %v2392
        %2447 = vst [vmem:[%s488 + $0x10] sm:$0xff] %v2395
        %2448 = vst [vmem:[%s488 + $0x18] sm:$0xff] %v2398
        %2449 = vst [vmem:[%s488 + $0x20] sm:$0xff] %v2401
        %2450 = vst [vmem:[%s488 + $0x28] sm:$0xff] %v2404
        %2451 = vst [vmem:[%s488 + $0x30] sm:$0xff] %v2407
        %2452 = vst [vmem:[%s488 + $0x38] sm:$0xff] %v2410
        %2453 = vst [vmem:[%s488 + $0x40] sm:$0xff] %v2413
        %2454 = vst [vmem:[%s488 + $0x48] sm:$0xff] %v2416
        %2455 = vst [vmem:[%s488 + $0x50] sm:$0xff] %v2419
        %2456 = vst [vmem:[%s488 + $0x58] sm:$0xff] %v2422
        %2457 = vst [vmem:[%s488 + $0x60] sm:$0xff] %v2425
        %2458 = vst [vmem:[%s488 + $0x68] sm:$0xff] %v2428
        %2459 = vst [vmem:[%s488 + $0x70] sm:$0xff] %v2431
        %2460 = vst [vmem:[%s488 + $0x78] sm:$0xff] %v2434
        %2461 = vst [vmem:[%s488 + $0x80] sm:$0xff] %v2437
        %2462 = vst [vmem:[%s488 + $0x88] sm:$0xff] %v2440
        %2463 = vst [vmem:[%s488 + $0x90] sm:$0xff] %v2443
        %s2464 = sand.u32 %s357, 1
        %s2465 = scalar_lea.sflag [#allocation3], %s2464
        %s2466 = sand.u32 %s357, 1
        %s2467 = smul.addr %s2466, 152
        %s2468 = scalar_lea.vmem [#allocation2], %s2467
        // Predicated region
        $region81: #{tpu_custom_call.1} parent=79 // pred_check
          %p2469 = pneg %p367
        $region82: #{tpu_custom_call.1} parent=79 // pred_check_branch
          %2471 = sbr.rel (%p2469) target = $region84
        $region83: #{tpu_custom_call.1} parent=79 // pred_region
          %s2472 = smul.u32 19, %s29
          %2474 = vsyncadd %s2465, 0
          %s2475 = smul.addr %s2472, 8
          %s2476 = scalar_lea.hbm %s15, %s2475
          %s2477 = sshll.u32 %s2468, 4
          %s2478 = int_to_ptr.vmem [resolvable:$true] %s2477
          %s2479 = sshll.u32 %s2476, 4
          %s2480 = int_to_ptr.hbm [resolvable:$true] %s2479
          %2485 = dma.vmem_to_hbm [thread:$0]  %s2478, 2432, %s2480, %s2465, 128, 128, 8
        $region84: #{tpu_custom_call.1} parent=79 // pred_fallthru
          _
      $region80: #{tpu_custom_call.1} parent=5 // pred_fallthru
        _
      %p2486 = scmp.le.s32.totalorder 2, %s24
      // Predicated region
      $region85: #{tpu_custom_call.1} parent=5 // pred_check
        %p2487 = pneg %p2486
      $region86: #{tpu_custom_call.1} parent=5 // pred_check_branch
        %2489 = sbr.rel (%p2487) target = $region88
      $region87: #{tpu_custom_call.1} parent=5 // pred_region
        %s2490 = ssub.s32 %s24, 2
        // Predicated region
        $region89: #{tpu_custom_call.1} parent=87 // pred_check
          %p2491 = pneg %p373
        $region90: #{tpu_custom_call.1} parent=87 // pred_check_branch
          %2493 = sbr.rel (%p2491) target = $region92
        $region91: #{tpu_custom_call.1} parent=87 // pred_region
          %s2494 = sand.u32 %s358, 1
          %s2495 = scalar_lea.sflag [#allocation3], %s2494
          %s2496 = sand.u32 %s358, 1
          %s2497 = smul.addr %s2496, 152
          %s2498 = scalar_lea.vmem [#allocation2], %s2497
          %2500 = dma.done %s2495, 2432
        $region92: #{tpu_custom_call.1} parent=87 // pred_fallthru
          _
      $region88: #{tpu_custom_call.1} parent=5 // pred_fallthru
        _
    $region6: #{tpu_custom_call.1} parent=1 // loop_footer
      %s28 = sadd.s32 1, %s24
    $region7: #{tpu_custom_call.1} parent=1 // loop_footer_branch
      %23 = sbr.rel target = $region3
    $region8: #{tpu_custom_call.1} parent=1 // loop_exit
      _
    %2501 = vsyncpa [#allocation3], 1
    %s2502 = scalar_lea.sflag [#allocation3], 1
    %2503 = vsyncpa %s2502, 1

</llo_original>
